<compile_context>
chip_gen: v6e
topology: v6e:2x2x1
jax: 0.10.0
libtpu: 0.0.40
codegen_flags: <defaults>
</compile_context>

<pallas_src>
import functools

import numpy as np
import jax
import jax.numpy as jnp
from jax import lax
from jax.experimental import pallas as pl
from jax.experimental.pallas import tpu as pltpu


# ----------------------------------------------------------------------------
# In-kernel math helpers
# ----------------------------------------------------------------------------
def _erf_approx(x):
    # Abramowitz & Stegun 7.1.26 rational approximation, |error| < 1.5e-7.
    # Only +, *, exp, where -> guaranteed Mosaic lowering.
    a1, a2, a3, a4, a5 = 0.254829592, -0.284496736, 1.421413741, -1.453152027, 1.061405429
    p = 0.3275911
    ax = jnp.abs(x)
    t = 1.0 / (1.0 + p * ax)
    poly = ((((a5 * t + a4) * t + a3) * t + a2) * t + a1) * t
    y = 1.0 - poly * jnp.exp(-ax * ax)
    return jnp.where(x >= 0.0, y, -y)


def _gelu_exact(x):
    # PyTorch nn.GELU() default = exact erf-based GELU.
    return 0.5 * x * (1.0 + _erf_approx(x * np.float32(1.0 / np.sqrt(2.0))))


def _group_norm_lane_dense(acc, gid_row, gamma_row, beta_row, n_per_group,
                           num_groups, eps):
    """GroupNorm on a lane-dense (H, W*C) tile.

    Column j corresponds to pixel x = j // C, channel c = j % C.
    gid_row:   (1, W*C) int32   group id per column (precomputed on host)
    gamma_row: (1, W*C) f32     per-channel affine, tiled over W
    beta_row:  (1, W*C) f32
    """
    col_sum = jnp.sum(acc, axis=0, keepdims=True)          # (1, W*C)
    col_sq = jnp.sum(acc * acc, axis=0, keepdims=True)     # (1, W*C)
    mean_row = jnp.zeros_like(col_sum)
    inv_row = jnp.zeros_like(col_sum)
    inv_n = np.float32(1.0 / n_per_group)
    for g in range(num_groups):                            # static unroll, G small
        sel = gid_row == g
        m_g = jnp.sum(jnp.where(sel, col_sum, 0.0), axis=1, keepdims=True) * inv_n
        ex2_g = jnp.sum(jnp.where(sel, col_sq, 0.0), axis=1, keepdims=True) * inv_n
        inv_g = lax.rsqrt(ex2_g - m_g * m_g + eps)          # E[x^2] - mean^2
        mean_row = jnp.where(sel, m_g, mean_row)
        inv_row = jnp.where(sel, inv_g, inv_row)
    scale = inv_row * gamma_row                             # fold affine into FMA
    shift = beta_row - mean_row * scale
    return acc * scale + shift


# ----------------------------------------------------------------------------
# Fused kernel: conv1 -> GN -> GELU -> conv2 -> GN [-> +x -> GELU], one batch
# element per grid step, everything lane-dense on (H, W*C) layouts.
# ----------------------------------------------------------------------------
def _double_conv_kernel(x_ref, w1_ref, g1_ref, b1_ref, gid1_ref,
                        w2_ref, g2_ref, b2_ref, gid2_ref,
                        o_ref, rpad1, rpad2,
                        *, num_groups, residual, n1, n2, eps=1e-5):
    # x_ref:   (1, H, W*Cin)            channels-last, pixel-major columns
    # w1_ref:  (3, W*Cin, W*Cmid)       Toeplitz-banded weights (per row shift dy)
    # w2_ref:  (3, W*Cmid, W*Cout)
    # g*/b*:   (1, W*C)                 per-channel affine tiled over W
    # gid*:    (1, W*C) int32           group id per column
    # o_ref:   (1, H, W*Cout)
    # rpad1:   VMEM (H+2, W*Cin)  f32   row-padded conv1 input
    # rpad2:   VMEM (H+2, W*Cmid) f32   row-padded conv2 input (mid act, VMEM only)
    _, H, WCin = x_ref.shape
    WCmid = w1_ref.shape[2]
    WCout = w2_ref.shape[2]

    # ---- conv1: in-kernel halo (only the two border rows need zeroing;
    #             column padding is folded into the banded weights)
    zrow1 = jnp.zeros((1, WCin), jnp.float32)
    rpad1[0:1, :] = zrow1
    rpad1[H + 1:H + 2, :] = zrow1
    rpad1[1:H + 1, :] = x_ref[0].astype(jnp.float32)

    acc1 = jnp.zeros((H, WCmid), jnp.float32)
    for dy in range(3):                       # 3 row-shifted matmuls, K = W*Cin
        acc1 = acc1 + jnp.dot(rpad1[dy:dy + H, :], w1_ref[dy],
                              preferred_element_type=jnp.float32)

    h1 = _group_norm_lane_dense(acc1, gid1_ref[...], g1_ref[...], b1_ref[...],
                                n1, num_groups, eps)
    h1 = _gelu_exact(h1)

    # ---- conv2 on the mid activation (stays in VMEM, no HBM round trip)
    zrow2 = jnp.zeros((1, WCmid), jnp.float32)
    rpad2[0:1, :] = zrow2
    rpad2[H + 1:H + 2, :] = zrow2
    rpad2[1:H + 1, :] = h1

    acc2 = jnp.zeros((H, WCout), jnp.float32)
    for dy in range(3):                       # 3 row-shifted matmuls, K = W*Cmid
        acc2 = acc2 + jnp.dot(rpad2[dy:dy + H, :], w2_ref[dy],
                              preferred_element_type=jnp.float32)

    y = _group_norm_lane_dense(acc2, gid2_ref[...], g2_ref[...], b2_ref[...],
                               n2, num_groups, eps)

    if residual:                              # fused residual + GELU before store
        y = _gelu_exact(x_ref[0].astype(jnp.float32) + y)

    o_ref[0] = y.astype(o_ref.dtype)          # lane-dense store (W*Cout lanes)


# ----------------------------------------------------------------------------
# Host-side weight preparation
# ----------------------------------------------------------------------------
def _banded_weights(w_oihw, W):
    """OIHW (Cout, Cin, 3, 3) -> (3, W*Cin, W*Cout) Toeplitz-banded matrices.

    With rowpad[r, xin*Cin + ci] = in[r-1, xin, ci] (rows 0 / H+1 zero), the
    'same' 3x3 conv is  out2d[y, :] = sum_dy rowpad[y+dy, :] @ Wb[dy]
    where out2d[y, x*Cout + co] = conv(x)[y, x, co].  The left/right column
    padding is represented by the missing (zero) blocks of Wb.
    """
    w = np.asarray(jax.device_get(w_oihw), np.float32)      # (Cout, Cin, 3, 3)
    Cout, Cin = w.shape[0], w.shape[1]
    wb = np.zeros((3, W * Cin, W * Cout), np.float32)
    for dy in range(3):
        for dx in range(3):
            blk = w[:, :, dy, dx].T                          # (Cin, Cout)
            for x in range(W):
                xin = x + dx - 1
                if 0 <= xin < W:
                    wb[dy, xin * Cin:(xin + 1) * Cin,
                       x * Cout:(x + 1) * Cout] = blk
    return jnp.asarray(wb)


def double_conv_pallas(x_nchw, w1b, g1t, b1t, gid1, w2b, g2t, b2t, gid2,
                       num_groups, residual, out_channels):
    N, Cin, H, W = x_nchw.shape
    Cout = out_channels
    WCin = W * Cin
    WCmid = w1b.shape[2]
    WCout = w2b.shape[2]
    Cmid = WCmid // W
    n1 = float(H * W * (Cmid // num_groups))
    n2 = float(H * W * (Cout // num_groups))

    # NCHW -> lane-dense channels-last 2-D rows (N, H, W*Cin); cheap XLA reshape.
    x2d = jnp.transpose(x_nchw, (0, 2, 3, 1)).reshape(N, H, WCin)

    kernel = functools.partial(_double_conv_kernel, num_groups=num_groups,
                               residual=residual, n1=n1, n2=n2)
    const2 = lambda n: (0, 0)
    const3 = lambda n: (0, 0, 0)

    out2d = pl.pallas_call(
        kernel,
        out_shape=jax.ShapeDtypeStruct((N, H, WCout), x_nchw.dtype),
        grid=(N,),
        in_specs=[
            pl.BlockSpec((1, H, WCin), lambda n: (n, 0, 0)),
            pl.BlockSpec((3, WCin, WCmid), const3),
            pl.BlockSpec((1, WCmid), const2),
            pl.BlockSpec((1, WCmid), const2),
            pl.BlockSpec((1, WCmid), const2),
            pl.BlockSpec((3, WCmid, WCout), const3),
            pl.BlockSpec((1, WCout), const2),
            pl.BlockSpec((1, WCout), const2),
            pl.BlockSpec((1, WCout), const2),
        ],
        out_specs=pl.BlockSpec((1, H, WCout), lambda n: (n, 0, 0)),
        scratch_shapes=[pltpu.VMEM((H + 2, WCin), jnp.float32),
                        pltpu.VMEM((H + 2, WCmid), jnp.float32)],
        compiler_params=pltpu.CompilerParams(
            dimension_semantics=("parallel",)),      # batch shards across cores
    )(x2d, w1b, g1t, b1t, gid1, w2b, g2t, b2t, gid2)

    return jnp.transpose(out2d.reshape(N, H, W, Cout), (0, 3, 1, 2))   # -> NCHW


# ----------------------------------------------------------------------------
# Module wrapper (parameters initialized deterministically in-script)
# ----------------------------------------------------------------------------
class DoubleConvPallas:
    def __init__(self, in_channels, out_channels, mid_channels=None,
                 residual=False, num_groups=8, *, key):
        if mid_channels is None:
            mid_channels = out_channels
        assert mid_channels % num_groups == 0 and out_channels % num_groups == 0
        if residual:
            assert in_channels == out_channels
        self.residual = residual
        self.num_groups = num_groups
        self.in_channels = in_channels
        self.mid_channels = mid_channels
        self.out_channels = out_channels
        k1, k2 = jax.random.split(key)
        self.w1 = (jax.random.normal(k1, (mid_channels, in_channels, 3, 3), jnp.float32)
                   / np.sqrt(in_channels * 9))
        self.w2 = (jax.random.normal(k2, (out_channels, mid_channels, 3, 3), jnp.float32)
                   / np.sqrt(mid_channels * 9))
        # GroupNorm affine parameters (PyTorch default init: weight=1, bias=0)
        self.g1 = jnp.ones((mid_channels,), jnp.float32)
        self.b1 = jnp.zeros((mid_channels,), jnp.float32)
        self.g2 = jnp.ones((out_channels,), jnp.float32)
        self.b2 = jnp.zeros((out_channels,), jnp.float32)
        self._cache = {}   # per image-width W: banded weights / tiled affine / gid rows

    def _prepared(self, W):
        if W in self._cache:
            return self._cache[W]
        cg1 = self.mid_channels // self.num_groups
        cg2 = self.out_channels // self.num_groups
        prep = (
            _banded_weights(self.w1, W),
            jnp.tile(self.g1, W).reshape(1, W * self.mid_channels),
            jnp.tile(self.b1, W).reshape(1, W * self.mid_channels),
            jnp.asarray(np.tile(np.arange(self.mid_channels) // cg1, W)
                        .reshape(1, -1), jnp.int32),
            _banded_weights(self.w2, W),
            jnp.tile(self.g2, W).reshape(1, W * self.out_channels),
            jnp.tile(self.b2, W).reshape(1, W * self.out_channels),
            jnp.asarray(np.tile(np.arange(self.out_channels) // cg2, W)
                        .reshape(1, -1), jnp.int32),
        )
        self._cache[W] = prep
        return prep

    def __call__(self, x_nchw):
        prep = self._prepared(x_nchw.shape[3])
        return double_conv_pallas(x_nchw, *prep, self.num_groups, self.residual,
                                  self.out_channels)


# ----------------------------------------------------------------------------
# Pure-JAX reference (mirrors the PyTorch forward) for a correctness check
# ----------------------------------------------------------------------------
def ref_double_conv(x, w1, g1, b1, w2, g2, b2, num_groups, residual, eps=1e-5):
    def conv(h, w):
        return lax.conv_general_dilated(h, w, (1, 1), "SAME",
                                        dimension_numbers=("NCHW", "OIHW", "NCHW"))

    def gn(h, gamma, beta):
        N, C, H, W = h.shape
        G = num_groups
        hg = h.reshape(N, G, C // G, H, W)
        mean = hg.mean(axis=(2, 3, 4), keepdims=True)
        var = ((hg - mean) ** 2).mean(axis=(2, 3, 4), keepdims=True)
        hn = ((hg - mean) / jnp.sqrt(var + eps)).reshape(N, C, H, W)
        return hn * gamma[None, :, None, None] + beta[None, :, None, None]

    h = jax.nn.gelu(gn(conv(x, w1), g1, b1), approximate=False)
    h = gn(conv(h, w2), g2, b2)
    return jax.nn.gelu(x + h, approximate=False) if residual else h


# ----------------------------------------------------------------------------
if __name__ == "__main__":
    key = jax.random.PRNGKey(0)
    kp1, kp2, kx1, kx2 = jax.random.split(key, 4)

    # Case 1: plain DoubleConv, in=8 -> out=16
    m1 = DoubleConvPallas(8, 16, residual=False, num_groups=8, key=kp1)
    x1 = jax.random.normal(kx1, (2, 8, 16, 16), jnp.float32)
    out1 = jax.block_until_ready(m1(x1))
    ref1 = ref_double_conv(x1, m1.w1, m1.g1, m1.b1, m1.w2, m1.g2, m1.b2,
                           num_groups=8, residual=False)
    np.testing.assert_allclose(np.asarray(out1), np.asarray(ref1), rtol=2e-4, atol=2e-4)

    # Case 2: residual DoubleConv, in=out=16
    m2 = DoubleConvPallas(16, 16, residual=True, num_groups=8, key=kp2)
    x2 = jax.random.normal(kx2, (2, 16, 16, 16), jnp.float32)
    out2 = jax.block_until_ready(m2(x2))
    ref2 = ref_double_conv(x2, m2.w1, m2.g1, m2.b1, m2.w2, m2.g2, m2.b2,
                           num_groups=8, residual=True)
    np.testing.assert_allclose(np.asarray(out2), np.asarray(ref2), rtol=2e-4, atol=2e-4)

    print("KERNEL_OK")
</pallas_src>

<mosaic_0001>
module attributes {stable_mosaic.version = 11 : i64} {
  func.func @_double_conv_kernel(%arg0: i32, %arg1: memref<1x16x128xf32, #tpu.memory_space<vmem>>, %arg2: memref<3x128x256xf32, #tpu.memory_space<vmem>>, %arg3: memref<1x256xf32, #tpu.memory_space<vmem>>, %arg4: memref<1x256xf32, #tpu.memory_space<vmem>>, %arg5: memref<1x256xi32, #tpu.memory_space<vmem>>, %arg6: memref<3x256x256xf32, #tpu.memory_space<vmem>>, %arg7: memref<1x256xf32, #tpu.memory_space<vmem>>, %arg8: memref<1x256xf32, #tpu.memory_space<vmem>>, %arg9: memref<1x256xi32, #tpu.memory_space<vmem>>, %arg10: memref<1x16x256xf32, #tpu.memory_space<vmem>>, %arg11: memref<18x128xf32, #tpu.memory_space<vmem>>, %arg12: memref<18x256xf32, #tpu.memory_space<vmem>>) attributes {dimension_semantics = [#tpu.dimension_semantics<parallel>], iteration_bounds = array<i64: 2>, scalar_prefetch = 0 : i64, scratch_operands = 2 : i64, tpu.core_type = #tpu.core_type<tc>, window_params = [{transform_indices = @transform_0, window_bounds = array<i64: 1, 16, 128>}, {pipeline_mode = #tpu.pipeline_mode<synchronous>, transform_indices = @transform_1, window_bounds = array<i64: 3, 128, 256>}, {pipeline_mode = #tpu.pipeline_mode<synchronous>, transform_indices = @transform_2, window_bounds = array<i64: 1, 256>}, {pipeline_mode = #tpu.pipeline_mode<synchronous>, transform_indices = @transform_3, window_bounds = array<i64: 1, 256>}, {pipeline_mode = #tpu.pipeline_mode<synchronous>, transform_indices = @transform_4, window_bounds = array<i64: 1, 256>}, {pipeline_mode = #tpu.pipeline_mode<synchronous>, transform_indices = @transform_5, window_bounds = array<i64: 3, 256, 256>}, {pipeline_mode = #tpu.pipeline_mode<synchronous>, transform_indices = @transform_6, window_bounds = array<i64: 1, 256>}, {pipeline_mode = #tpu.pipeline_mode<synchronous>, transform_indices = @transform_7, window_bounds = array<i64: 1, 256>}, {pipeline_mode = #tpu.pipeline_mode<synchronous>, transform_indices = @transform_8, window_bounds = array<i64: 1, 256>}, {transform_indices = @transform_9, window_bounds = array<i64: 1, 16, 256>}]} {
    %cst = arith.constant 0.000000e+00 : f32
    %0 = vector.broadcast %cst : f32 to vector<1x128xf32>
    %c0 = arith.constant 0 : index
    %c0_0 = arith.constant 0 : index
    %1 = vector.load %arg11[%c0, %c0_0] : memref<18x128xf32, #tpu.memory_space<vmem>>, vector<1x128xf32>
    tpu.vector_store %arg11[%c0, %c0_0], %0 {strides = array<i32>} : memref<18x128xf32, #tpu.memory_space<vmem>>, vector<1x128xf32>,
    %c17 = arith.constant 17 : index
    %c0_1 = arith.constant 0 : index
    %2 = vector.load %arg11[%c17, %c0_1] : memref<18x128xf32, #tpu.memory_space<vmem>>, vector<1x128xf32>
    tpu.vector_store %arg11[%c17, %c0_1], %0 {strides = array<i32>} : memref<18x128xf32, #tpu.memory_space<vmem>>, vector<1x128xf32>,
    %c0_2 = arith.constant 0 : index
    %c0_3 = arith.constant 0 : index
    %c0_4 = arith.constant 0 : index
    %3 = vector.load %arg1[%c0_2, %c0_3, %c0_4] : memref<1x16x128xf32, #tpu.memory_space<vmem>>, vector<1x16x128xf32>
    %4 = vector.shape_cast %3 : vector<1x16x128xf32> to vector<16x128xf32>
    %c1 = arith.constant 1 : index
    %c0_5 = arith.constant 0 : index
    %5 = vector.load %arg11[%c1, %c0_5] : memref<18x128xf32, #tpu.memory_space<vmem>>, vector<16x128xf32>
    tpu.vector_store %arg11[%c1, %c0_5], %4 {strides = array<i32>} : memref<18x128xf32, #tpu.memory_space<vmem>>, vector<16x128xf32>,
    %cst_6 = arith.constant 0.000000e+00 : f32
    %6 = vector.broadcast %cst_6 : f32 to vector<16x256xf32>
    %c0_7 = arith.constant 0 : index
    %c0_8 = arith.constant 0 : index
    %7 = vector.load %arg11[%c0_7, %c0_8] : memref<18x128xf32, #tpu.memory_space<vmem>>, vector<16x128xf32>
    %c0_9 = arith.constant 0 : index
    %c0_10 = arith.constant 0 : index
    %c0_11 = arith.constant 0 : index
    %8 = vector.load %arg2[%c0_9, %c0_10, %c0_11] : memref<3x128x256xf32, #tpu.memory_space<vmem>>, vector<1x128x256xf32>
    %9 = vector.shape_cast %8 : vector<1x128x256xf32> to vector<128x256xf32>
    %cst_12 = arith.constant dense<0.000000e+00> : vector<16x256xf32>
    %10 = tpu.matmul %7, %9, %cst_12 {dimension_numbers = #tpu.dot_dimension_numbers<[1], [0], [0], [1], [0, 0, 1, 1], [], []>} : vector<16x128xf32>, vector<128x256xf32>, vector<16x256xf32> -> vector<16x256xf32>
    %11 = arith.addf %6, %10 : vector<16x256xf32>
    %c1_13 = arith.constant 1 : index
    %c0_14 = arith.constant 0 : index
    %12 = vector.load %arg11[%c1_13, %c0_14] : memref<18x128xf32, #tpu.memory_space<vmem>>, vector<16x128xf32>
    %c1_15 = arith.constant 1 : index
    %c0_16 = arith.constant 0 : index
    %c0_17 = arith.constant 0 : index
    %13 = vector.load %arg2[%c1_15, %c0_16, %c0_17] : memref<3x128x256xf32, #tpu.memory_space<vmem>>, vector<1x128x256xf32>
    %14 = vector.shape_cast %13 : vector<1x128x256xf32> to vector<128x256xf32>
    %cst_18 = arith.constant dense<0.000000e+00> : vector<16x256xf32>
    %15 = tpu.matmul %12, %14, %cst_18 {dimension_numbers = #tpu.dot_dimension_numbers<[1], [0], [0], [1], [0, 0, 1, 1], [], []>} : vector<16x128xf32>, vector<128x256xf32>, vector<16x256xf32> -> vector<16x256xf32>
    %16 = arith.addf %11, %15 : vector<16x256xf32>
    %c2 = arith.constant 2 : index
    %c0_19 = arith.constant 0 : index
    %17 = vector.load %arg11[%c2, %c0_19] : memref<18x128xf32, #tpu.memory_space<vmem>>, vector<16x128xf32>
    %c2_20 = arith.constant 2 : index
    %c0_21 = arith.constant 0 : index
    %c0_22 = arith.constant 0 : index
    %18 = vector.load %arg2[%c2_20, %c0_21, %c0_22] : memref<3x128x256xf32, #tpu.memory_space<vmem>>, vector<1x128x256xf32>
    %19 = vector.shape_cast %18 : vector<1x128x256xf32> to vector<128x256xf32>
    %cst_23 = arith.constant dense<0.000000e+00> : vector<16x256xf32>
    %20 = tpu.matmul %17, %19, %cst_23 {dimension_numbers = #tpu.dot_dimension_numbers<[1], [0], [0], [1], [0, 0, 1, 1], [], []>} : vector<16x128xf32>, vector<128x256xf32>, vector<16x256xf32> -> vector<16x256xf32>
    %21 = arith.addf %16, %20 : vector<16x256xf32>
    %c0_24 = arith.constant 0 : index
    %c0_25 = arith.constant 0 : index
    %22 = vector.load %arg5[%c0_24, %c0_25] : memref<1x256xi32, #tpu.memory_space<vmem>>, vector<1x256xi32>
    %c0_26 = arith.constant 0 : index
    %c0_27 = arith.constant 0 : index
    %23 = vector.load %arg3[%c0_26, %c0_27] : memref<1x256xf32, #tpu.memory_space<vmem>>, vector<1x256xf32>
    %c0_28 = arith.constant 0 : index
    %c0_29 = arith.constant 0 : index
    %24 = vector.load %arg4[%c0_28, %c0_29] : memref<1x256xf32, #tpu.memory_space<vmem>>, vector<1x256xf32>
    %cst_30 = arith.constant dense<0.000000e+00> : vector<256xf32>
    %25 = vector.multi_reduction <add>, %21, %cst_30 [0] : vector<16x256xf32> to vector<256xf32>
    %26 = vector.shape_cast %25 : vector<256xf32> to vector<1x256xf32>
    %27 = arith.mulf %21, %21 : vector<16x256xf32>
    %cst_31 = arith.constant dense<0.000000e+00> : vector<256xf32>
    %28 = vector.multi_reduction <add>, %27, %cst_31 [0] : vector<16x256xf32> to vector<256xf32>
    %29 = vector.shape_cast %28 : vector<256xf32> to vector<1x256xf32>
    %cst_32 = arith.constant 0.000000e+00 : f32
    %30 = vector.broadcast %cst_32 : f32 to vector<1x256xf32>
    %cst_33 = arith.constant 0.000000e+00 : f32
    %31 = vector.broadcast %cst_33 : f32 to vector<1x256xf32>
    %c0_i32 = arith.constant 0 : i32
    %32 = vector.broadcast %c0_i32 : i32 to vector<1x256xi32>
    %33 = arith.cmpi eq, %22, %32 : vector<1x256xi32>
    %cst_34 = arith.constant 0.000000e+00 : f32
    %34 = vector.broadcast %cst_34 : f32 to vector<1x256xf32>
    %35 = arith.select %33, %26, %34 : vector<1x256xi1>, vector<1x256xf32>
    %cst_35 = arith.constant dense<0.000000e+00> : vector<1xf32>
    %36 = vector.multi_reduction <add>, %35, %cst_35 [1] : vector<1x256xf32> to vector<1xf32>
    %37 = vector.shape_cast %36 : vector<1xf32> to vector<1x1xf32>
    %cst_36 = arith.constant 0.001953125 : f32
    %38 = vector.broadcast %cst_36 : f32 to vector<1x1xf32>
    %39 = arith.mulf %37, %38 : vector<1x1xf32>
    %cst_37 = arith.constant 0.000000e+00 : f32
    %40 = vector.broadcast %cst_37 : f32 to vector<1x256xf32>
    %41 = arith.select %33, %29, %40 : vector<1x256xi1>, vector<1x256xf32>
    %cst_38 = arith.constant dense<0.000000e+00> : vector<1xf32>
    %42 = vector.multi_reduction <add>, %41, %cst_38 [1] : vector<1x256xf32> to vector<1xf32>
    %43 = vector.shape_cast %42 : vector<1xf32> to vector<1x1xf32>
    %cst_39 = arith.constant 0.001953125 : f32
    %44 = vector.broadcast %cst_39 : f32 to vector<1x1xf32>
    %45 = arith.mulf %43, %44 : vector<1x1xf32>
    %46 = arith.mulf %39, %39 : vector<1x1xf32>
    %47 = arith.subf %45, %46 : vector<1x1xf32>
    %cst_40 = arith.constant 9.99999974E-6 : f32
    %48 = vector.broadcast %cst_40 : f32 to vector<1x1xf32>
    %49 = arith.addf %47, %48 : vector<1x1xf32>
    %50 = math.rsqrt %49 : vector<1x1xf32>
    %51 = vector.shape_cast %39 : vector<1x1xf32> to vector<1x1xf32>
    %52 = vector.broadcast %51 : vector<1x1xf32> to vector<1x256xf32>
    %53 = arith.select %33, %52, %30 : vector<1x256xi1>, vector<1x256xf32>
    %54 = vector.shape_cast %50 : vector<1x1xf32> to vector<1x1xf32>
    %55 = vector.broadcast %54 : vector<1x1xf32> to vector<1x256xf32>
    %56 = arith.select %33, %55, %31 : vector<1x256xi1>, vector<1x256xf32>
    %c1_i32 = arith.constant 1 : i32
    %57 = vector.broadcast %c1_i32 : i32 to vector<1x256xi32>
    %58 = arith.cmpi eq, %22, %57 : vector<1x256xi32>
    %cst_41 = arith.constant 0.000000e+00 : f32
    %59 = vector.broadcast %cst_41 : f32 to vector<1x256xf32>
    %60 = arith.select %58, %26, %59 : vector<1x256xi1>, vector<1x256xf32>
    %cst_42 = arith.constant dense<0.000000e+00> : vector<1xf32>
    %61 = vector.multi_reduction <add>, %60, %cst_42 [1] : vector<1x256xf32> to vector<1xf32>
    %62 = vector.shape_cast %61 : vector<1xf32> to vector<1x1xf32>
    %cst_43 = arith.constant 0.001953125 : f32
    %63 = vector.broadcast %cst_43 : f32 to vector<1x1xf32>
    %64 = arith.mulf %62, %63 : vector<1x1xf32>
    %cst_44 = arith.constant 0.000000e+00 : f32
    %65 = vector.broadcast %cst_44 : f32 to vector<1x256xf32>
    %66 = arith.select %58, %29, %65 : vector<1x256xi1>, vector<1x256xf32>
    %cst_45 = arith.constant dense<0.000000e+00> : vector<1xf32>
    %67 = vector.multi_reduction <add>, %66, %cst_45 [1] : vector<1x256xf32> to vector<1xf32>
    %68 = vector.shape_cast %67 : vector<1xf32> to vector<1x1xf32>
    %cst_46 = arith.constant 0.001953125 : f32
    %69 = vector.broadcast %cst_46 : f32 to vector<1x1xf32>
    %70 = arith.mulf %68, %69 : vector<1x1xf32>
    %71 = arith.mulf %64, %64 : vector<1x1xf32>
    %72 = arith.subf %70, %71 : vector<1x1xf32>
    %cst_47 = arith.constant 9.99999974E-6 : f32
    %73 = vector.broadcast %cst_47 : f32 to vector<1x1xf32>
    %74 = arith.addf %72, %73 : vector<1x1xf32>
    %75 = math.rsqrt %74 : vector<1x1xf32>
    %76 = vector.shape_cast %64 : vector<1x1xf32> to vector<1x1xf32>
    %77 = vector.broadcast %76 : vector<1x1xf32> to vector<1x256xf32>
    %78 = arith.select %58, %77, %53 : vector<1x256xi1>, vector<1x256xf32>
    %79 = vector.shape_cast %75 : vector<1x1xf32> to vector<1x1xf32>
    %80 = vector.broadcast %79 : vector<1x1xf32> to vector<1x256xf32>
    %81 = arith.select %58, %80, %56 : vector<1x256xi1>, vector<1x256xf32>
    %c2_i32 = arith.constant 2 : i32
    %82 = vector.broadcast %c2_i32 : i32 to vector<1x256xi32>
    %83 = arith.cmpi eq, %22, %82 : vector<1x256xi32>
    %cst_48 = arith.constant 0.000000e+00 : f32
    %84 = vector.broadcast %cst_48 : f32 to vector<1x256xf32>
    %85 = arith.select %83, %26, %84 : vector<1x256xi1>, vector<1x256xf32>
    %cst_49 = arith.constant dense<0.000000e+00> : vector<1xf32>
    %86 = vector.multi_reduction <add>, %85, %cst_49 [1] : vector<1x256xf32> to vector<1xf32>
    %87 = vector.shape_cast %86 : vector<1xf32> to vector<1x1xf32>
    %cst_50 = arith.constant 0.001953125 : f32
    %88 = vector.broadcast %cst_50 : f32 to vector<1x1xf32>
    %89 = arith.mulf %87, %88 : vector<1x1xf32>
    %cst_51 = arith.constant 0.000000e+00 : f32
    %90 = vector.broadcast %cst_51 : f32 to vector<1x256xf32>
    %91 = arith.select %83, %29, %90 : vector<1x256xi1>, vector<1x256xf32>
    %cst_52 = arith.constant dense<0.000000e+00> : vector<1xf32>
    %92 = vector.multi_reduction <add>, %91, %cst_52 [1] : vector<1x256xf32> to vector<1xf32>
    %93 = vector.shape_cast %92 : vector<1xf32> to vector<1x1xf32>
    %cst_53 = arith.constant 0.001953125 : f32
    %94 = vector.broadcast %cst_53 : f32 to vector<1x1xf32>
    %95 = arith.mulf %93, %94 : vector<1x1xf32>
    %96 = arith.mulf %89, %89 : vector<1x1xf32>
    %97 = arith.subf %95, %96 : vector<1x1xf32>
    %cst_54 = arith.constant 9.99999974E-6 : f32
    %98 = vector.broadcast %cst_54 : f32 to vector<1x1xf32>
    %99 = arith.addf %97, %98 : vector<1x1xf32>
    %100 = math.rsqrt %99 : vector<1x1xf32>
    %101 = vector.shape_cast %89 : vector<1x1xf32> to vector<1x1xf32>
    %102 = vector.broadcast %101 : vector<1x1xf32> to vector<1x256xf32>
    %103 = arith.select %83, %102, %78 : vector<1x256xi1>, vector<1x256xf32>
    %104 = vector.shape_cast %100 : vector<1x1xf32> to vector<1x1xf32>
    %105 = vector.broadcast %104 : vector<1x1xf32> to vector<1x256xf32>
    %106 = arith.select %83, %105, %81 : vector<1x256xi1>, vector<1x256xf32>
    %c3_i32 = arith.constant 3 : i32
    %107 = vector.broadcast %c3_i32 : i32 to vector<1x256xi32>
    %108 = arith.cmpi eq, %22, %107 : vector<1x256xi32>
    %cst_55 = arith.constant 0.000000e+00 : f32
    %109 = vector.broadcast %cst_55 : f32 to vector<1x256xf32>
    %110 = arith.select %108, %26, %109 : vector<1x256xi1>, vector<1x256xf32>
    %cst_56 = arith.constant dense<0.000000e+00> : vector<1xf32>
    %111 = vector.multi_reduction <add>, %110, %cst_56 [1] : vector<1x256xf32> to vector<1xf32>
    %112 = vector.shape_cast %111 : vector<1xf32> to vector<1x1xf32>
    %cst_57 = arith.constant 0.001953125 : f32
    %113 = vector.broadcast %cst_57 : f32 to vector<1x1xf32>
    %114 = arith.mulf %112, %113 : vector<1x1xf32>
    %cst_58 = arith.constant 0.000000e+00 : f32
    %115 = vector.broadcast %cst_58 : f32 to vector<1x256xf32>
    %116 = arith.select %108, %29, %115 : vector<1x256xi1>, vector<1x256xf32>
    %cst_59 = arith.constant dense<0.000000e+00> : vector<1xf32>
    %117 = vector.multi_reduction <add>, %116, %cst_59 [1] : vector<1x256xf32> to vector<1xf32>
    %118 = vector.shape_cast %117 : vector<1xf32> to vector<1x1xf32>
    %cst_60 = arith.constant 0.001953125 : f32
    %119 = vector.broadcast %cst_60 : f32 to vector<1x1xf32>
    %120 = arith.mulf %118, %119 : vector<1x1xf32>
    %121 = arith.mulf %114, %114 : vector<1x1xf32>
    %122 = arith.subf %120, %121 : vector<1x1xf32>
    %cst_61 = arith.constant 9.99999974E-6 : f32
    %123 = vector.broadcast %cst_61 : f32 to vector<1x1xf32>
    %124 = arith.addf %122, %123 : vector<1x1xf32>
    %125 = math.rsqrt %124 : vector<1x1xf32>
    %126 = vector.shape_cast %114 : vector<1x1xf32> to vector<1x1xf32>
    %127 = vector.broadcast %126 : vector<1x1xf32> to vector<1x256xf32>
    %128 = arith.select %108, %127, %103 : vector<1x256xi1>, vector<1x256xf32>
    %129 = vector.shape_cast %125 : vector<1x1xf32> to vector<1x1xf32>
    %130 = vector.broadcast %129 : vector<1x1xf32> to vector<1x256xf32>
    %131 = arith.select %108, %130, %106 : vector<1x256xi1>, vector<1x256xf32>
    %c4_i32 = arith.constant 4 : i32
    %132 = vector.broadcast %c4_i32 : i32 to vector<1x256xi32>
    %133 = arith.cmpi eq, %22, %132 : vector<1x256xi32>
    %cst_62 = arith.constant 0.000000e+00 : f32
    %134 = vector.broadcast %cst_62 : f32 to vector<1x256xf32>
    %135 = arith.select %133, %26, %134 : vector<1x256xi1>, vector<1x256xf32>
    %cst_63 = arith.constant dense<0.000000e+00> : vector<1xf32>
    %136 = vector.multi_reduction <add>, %135, %cst_63 [1] : vector<1x256xf32> to vector<1xf32>
    %137 = vector.shape_cast %136 : vector<1xf32> to vector<1x1xf32>
    %cst_64 = arith.constant 0.001953125 : f32
    %138 = vector.broadcast %cst_64 : f32 to vector<1x1xf32>
    %139 = arith.mulf %137, %138 : vector<1x1xf32>
    %cst_65 = arith.constant 0.000000e+00 : f32
    %140 = vector.broadcast %cst_65 : f32 to vector<1x256xf32>
    %141 = arith.select %133, %29, %140 : vector<1x256xi1>, vector<1x256xf32>
    %cst_66 = arith.constant dense<0.000000e+00> : vector<1xf32>
    %142 = vector.multi_reduction <add>, %141, %cst_66 [1] : vector<1x256xf32> to vector<1xf32>
    %143 = vector.shape_cast %142 : vector<1xf32> to vector<1x1xf32>
    %cst_67 = arith.constant 0.001953125 : f32
    %144 = vector.broadcast %cst_67 : f32 to vector<1x1xf32>
    %145 = arith.mulf %143, %144 : vector<1x1xf32>
    %146 = arith.mulf %139, %139 : vector<1x1xf32>
    %147 = arith.subf %145, %146 : vector<1x1xf32>
    %cst_68 = arith.constant 9.99999974E-6 : f32
    %148 = vector.broadcast %cst_68 : f32 to vector<1x1xf32>
    %149 = arith.addf %147, %148 : vector<1x1xf32>
    %150 = math.rsqrt %149 : vector<1x1xf32>
    %151 = vector.shape_cast %139 : vector<1x1xf32> to vector<1x1xf32>
    %152 = vector.broadcast %151 : vector<1x1xf32> to vector<1x256xf32>
    %153 = arith.select %133, %152, %128 : vector<1x256xi1>, vector<1x256xf32>
    %154 = vector.shape_cast %150 : vector<1x1xf32> to vector<1x1xf32>
    %155 = vector.broadcast %154 : vector<1x1xf32> to vector<1x256xf32>
    %156 = arith.select %133, %155, %131 : vector<1x256xi1>, vector<1x256xf32>
    %c5_i32 = arith.constant 5 : i32
    %157 = vector.broadcast %c5_i32 : i32 to vector<1x256xi32>
    %158 = arith.cmpi eq, %22, %157 : vector<1x256xi32>
    %cst_69 = arith.constant 0.000000e+00 : f32
    %159 = vector.broadcast %cst_69 : f32 to vector<1x256xf32>
    %160 = arith.select %158, %26, %159 : vector<1x256xi1>, vector<1x256xf32>
    %cst_70 = arith.constant dense<0.000000e+00> : vector<1xf32>
    %161 = vector.multi_reduction <add>, %160, %cst_70 [1] : vector<1x256xf32> to vector<1xf32>
    %162 = vector.shape_cast %161 : vector<1xf32> to vector<1x1xf32>
    %cst_71 = arith.constant 0.001953125 : f32
    %163 = vector.broadcast %cst_71 : f32 to vector<1x1xf32>
    %164 = arith.mulf %162, %163 : vector<1x1xf32>
    %cst_72 = arith.constant 0.000000e+00 : f32
    %165 = vector.broadcast %cst_72 : f32 to vector<1x256xf32>
    %166 = arith.select %158, %29, %165 : vector<1x256xi1>, vector<1x256xf32>
    %cst_73 = arith.constant dense<0.000000e+00> : vector<1xf32>
    %167 = vector.multi_reduction <add>, %166, %cst_73 [1] : vector<1x256xf32> to vector<1xf32>
    %168 = vector.shape_cast %167 : vector<1xf32> to vector<1x1xf32>
    %cst_74 = arith.constant 0.001953125 : f32
    %169 = vector.broadcast %cst_74 : f32 to vector<1x1xf32>
    %170 = arith.mulf %168, %169 : vector<1x1xf32>
    %171 = arith.mulf %164, %164 : vector<1x1xf32>
    %172 = arith.subf %170, %171 : vector<1x1xf32>
    %cst_75 = arith.constant 9.99999974E-6 : f32
    %173 = vector.broadcast %cst_75 : f32 to vector<1x1xf32>
    %174 = arith.addf %172, %173 : vector<1x1xf32>
    %175 = math.rsqrt %174 : vector<1x1xf32>
    %176 = vector.shape_cast %164 : vector<1x1xf32> to vector<1x1xf32>
    %177 = vector.broadcast %176 : vector<1x1xf32> to vector<1x256xf32>
    %178 = arith.select %158, %177, %153 : vector<1x256xi1>, vector<1x256xf32>
    %179 = vector.shape_cast %175 : vector<1x1xf32> to vector<1x1xf32>
    %180 = vector.broadcast %179 : vector<1x1xf32> to vector<1x256xf32>
    %181 = arith.select %158, %180, %156 : vector<1x256xi1>, vector<1x256xf32>
    %c6_i32 = arith.constant 6 : i32
    %182 = vector.broadcast %c6_i32 : i32 to vector<1x256xi32>
    %183 = arith.cmpi eq, %22, %182 : vector<1x256xi32>
    %cst_76 = arith.constant 0.000000e+00 : f32
    %184 = vector.broadcast %cst_76 : f32 to vector<1x256xf32>
    %185 = arith.select %183, %26, %184 : vector<1x256xi1>, vector<1x256xf32>
    %cst_77 = arith.constant dense<0.000000e+00> : vector<1xf32>
    %186 = vector.multi_reduction <add>, %185, %cst_77 [1] : vector<1x256xf32> to vector<1xf32>
    %187 = vector.shape_cast %186 : vector<1xf32> to vector<1x1xf32>
    %cst_78 = arith.constant 0.001953125 : f32
    %188 = vector.broadcast %cst_78 : f32 to vector<1x1xf32>
    %189 = arith.mulf %187, %188 : vector<1x1xf32>
    %cst_79 = arith.constant 0.000000e+00 : f32
    %190 = vector.broadcast %cst_79 : f32 to vector<1x256xf32>
    %191 = arith.select %183, %29, %190 : vector<1x256xi1>, vector<1x256xf32>
    %cst_80 = arith.constant dense<0.000000e+00> : vector<1xf32>
    %192 = vector.multi_reduction <add>, %191, %cst_80 [1] : vector<1x256xf32> to vector<1xf32>
    %193 = vector.shape_cast %192 : vector<1xf32> to vector<1x1xf32>
    %cst_81 = arith.constant 0.001953125 : f32
    %194 = vector.broadcast %cst_81 : f32 to vector<1x1xf32>
    %195 = arith.mulf %193, %194 : vector<1x1xf32>
    %196 = arith.mulf %189, %189 : vector<1x1xf32>
    %197 = arith.subf %195, %196 : vector<1x1xf32>
    %cst_82 = arith.constant 9.99999974E-6 : f32
    %198 = vector.broadcast %cst_82 : f32 to vector<1x1xf32>
    %199 = arith.addf %197, %198 : vector<1x1xf32>
    %200 = math.rsqrt %199 : vector<1x1xf32>
    %201 = vector.shape_cast %189 : vector<1x1xf32> to vector<1x1xf32>
    %202 = vector.broadcast %201 : vector<1x1xf32> to vector<1x256xf32>
    %203 = arith.select %183, %202, %178 : vector<1x256xi1>, vector<1x256xf32>
    %204 = vector.shape_cast %200 : vector<1x1xf32> to vector<1x1xf32>
    %205 = vector.broadcast %204 : vector<1x1xf32> to vector<1x256xf32>
    %206 = arith.select %183, %205, %181 : vector<1x256xi1>, vector<1x256xf32>
    %c7_i32 = arith.constant 7 : i32
    %207 = vector.broadcast %c7_i32 : i32 to vector<1x256xi32>
    %208 = arith.cmpi eq, %22, %207 : vector<1x256xi32>
    %cst_83 = arith.constant 0.000000e+00 : f32
    %209 = vector.broadcast %cst_83 : f32 to vector<1x256xf32>
    %210 = arith.select %208, %26, %209 : vector<1x256xi1>, vector<1x256xf32>
    %cst_84 = arith.constant dense<0.000000e+00> : vector<1xf32>
    %211 = vector.multi_reduction <add>, %210, %cst_84 [1] : vector<1x256xf32> to vector<1xf32>
    %212 = vector.shape_cast %211 : vector<1xf32> to vector<1x1xf32>
    %cst_85 = arith.constant 0.001953125 : f32
    %213 = vector.broadcast %cst_85 : f32 to vector<1x1xf32>
    %214 = arith.mulf %212, %213 : vector<1x1xf32>
    %cst_86 = arith.constant 0.000000e+00 : f32
    %215 = vector.broadcast %cst_86 : f32 to vector<1x256xf32>
    %216 = arith.select %208, %29, %215 : vector<1x256xi1>, vector<1x256xf32>
    %cst_87 = arith.constant dense<0.000000e+00> : vector<1xf32>
    %217 = vector.multi_reduction <add>, %216, %cst_87 [1] : vector<1x256xf32> to vector<1xf32>
    %218 = vector.shape_cast %217 : vector<1xf32> to vector<1x1xf32>
    %cst_88 = arith.constant 0.001953125 : f32
    %219 = vector.broadcast %cst_88 : f32 to vector<1x1xf32>
    %220 = arith.mulf %218, %219 : vector<1x1xf32>
    %221 = arith.mulf %214, %214 : vector<1x1xf32>
    %222 = arith.subf %220, %221 : vector<1x1xf32>
    %cst_89 = arith.constant 9.99999974E-6 : f32
    %223 = vector.broadcast %cst_89 : f32 to vector<1x1xf32>
    %224 = arith.addf %222, %223 : vector<1x1xf32>
    %225 = math.rsqrt %224 : vector<1x1xf32>
    %226 = vector.shape_cast %214 : vector<1x1xf32> to vector<1x1xf32>
    %227 = vector.broadcast %226 : vector<1x1xf32> to vector<1x256xf32>
    %228 = arith.select %208, %227, %203 : vector<1x256xi1>, vector<1x256xf32>
    %229 = vector.shape_cast %225 : vector<1x1xf32> to vector<1x1xf32>
    %230 = vector.broadcast %229 : vector<1x1xf32> to vector<1x256xf32>
    %231 = arith.select %208, %230, %206 : vector<1x256xi1>, vector<1x256xf32>
    %232 = arith.mulf %231, %23 : vector<1x256xf32>
    %233 = arith.mulf %228, %232 : vector<1x256xf32>
    %234 = arith.subf %24, %233 : vector<1x256xf32>
    %235 = vector.broadcast %232 : vector<1x256xf32> to vector<16x256xf32>
    %236 = arith.mulf %21, %235 : vector<16x256xf32>
    %237 = vector.broadcast %234 : vector<1x256xf32> to vector<16x256xf32>
    %238 = arith.addf %236, %237 : vector<16x256xf32>
    %cst_90 = arith.constant 5.000000e-01 : f32
    %239 = vector.broadcast %cst_90 : f32 to vector<16x256xf32>
    %240 = arith.mulf %239, %238 : vector<16x256xf32>
    %cst_91 = arith.constant 0.707106769 : f32
    %241 = vector.broadcast %cst_91 : f32 to vector<16x256xf32>
    %242 = arith.mulf %238, %241 : vector<16x256xf32>
    %243 = math.absf %242 : vector<16x256xf32>
    %cst_92 = arith.constant 0.327591091 : f32
    %244 = vector.broadcast %cst_92 : f32 to vector<16x256xf32>
    %245 = arith.mulf %244, %243 : vector<16x256xf32>
    %cst_93 = arith.constant 1.000000e+00 : f32
    %246 = vector.broadcast %cst_93 : f32 to vector<16x256xf32>
    %247 = arith.addf %246, %245 : vector<16x256xf32>
    %cst_94 = arith.constant 1.000000e+00 : f32
    %248 = vector.broadcast %cst_94 : f32 to vector<16x256xf32>
    %249 = arith.divf %248, %247 : vector<16x256xf32>
    %cst_95 = arith.constant 1.06140542 : f32
    %250 = vector.broadcast %cst_95 : f32 to vector<16x256xf32>
    %251 = arith.mulf %250, %249 : vector<16x256xf32>
    %cst_96 = arith.constant -1.45315206 : f32
    %252 = vector.broadcast %cst_96 : f32 to vector<16x256xf32>
    %253 = arith.addf %251, %252 : vector<16x256xf32>
    %254 = arith.mulf %253, %249 : vector<16x256xf32>
    %cst_97 = arith.constant 1.42141378 : f32
    %255 = vector.broadcast %cst_97 : f32 to vector<16x256xf32>
    %256 = arith.addf %254, %255 : vector<16x256xf32>
    %257 = arith.mulf %256, %249 : vector<16x256xf32>
    %cst_98 = arith.constant -0.284496725 : f32
    %258 = vector.broadcast %cst_98 : f32 to vector<16x256xf32>
    %259 = arith.addf %257, %258 : vector<16x256xf32>
    %260 = arith.mulf %259, %249 : vector<16x256xf32>
    %cst_99 = arith.constant 0.254829586 : f32
    %261 = vector.broadcast %cst_99 : f32 to vector<16x256xf32>
    %262 = arith.addf %260, %261 : vector<16x256xf32>
    %263 = arith.mulf %262, %249 : vector<16x256xf32>
    %cst_100 = arith.constant 0.000000e+00 : f32
    %264 = vector.broadcast %cst_100 : f32 to vector<16x256xf32>
    %265 = arith.subf %264, %243 : vector<16x256xf32>
    %266 = arith.mulf %265, %243 : vector<16x256xf32>
    %267 = math.exp %266 : vector<16x256xf32>
    %268 = arith.mulf %263, %267 : vector<16x256xf32>
    %cst_101 = arith.constant 1.000000e+00 : f32
    %269 = vector.broadcast %cst_101 : f32 to vector<16x256xf32>
    %270 = arith.subf %269, %268 : vector<16x256xf32>
    %cst_102 = arith.constant 0.000000e+00 : f32
    %271 = vector.broadcast %cst_102 : f32 to vector<16x256xf32>
    %272 = arith.cmpf oge, %242, %271 : vector<16x256xf32>
    %cst_103 = arith.constant 0.000000e+00 : f32
    %273 = vector.broadcast %cst_103 : f32 to vector<16x256xf32>
    %274 = arith.subf %273, %270 : vector<16x256xf32>
    %275 = arith.select %272, %270, %274 : vector<16x256xi1>, vector<16x256xf32>
    %cst_104 = arith.constant 1.000000e+00 : f32
    %276 = vector.broadcast %cst_104 : f32 to vector<16x256xf32>
    %277 = arith.addf %276, %275 : vector<16x256xf32>
    %278 = arith.mulf %240, %277 : vector<16x256xf32>
    %cst_105 = arith.constant 0.000000e+00 : f32
    %279 = vector.broadcast %cst_105 : f32 to vector<1x256xf32>
    %c0_106 = arith.constant 0 : index
    %c0_107 = arith.constant 0 : index
    %280 = vector.load %arg12[%c0_106, %c0_107] : memref<18x256xf32, #tpu.memory_space<vmem>>, vector<1x256xf32>
    tpu.vector_store %arg12[%c0_106, %c0_107], %279 {strides = array<i32>} : memref<18x256xf32, #tpu.memory_space<vmem>>, vector<1x256xf32>,
    %c17_108 = arith.constant 17 : index
    %c0_109 = arith.constant 0 : index
    %281 = vector.load %arg12[%c17_108, %c0_109] : memref<18x256xf32, #tpu.memory_space<vmem>>, vector<1x256xf32>
    tpu.vector_store %arg12[%c17_108, %c0_109], %279 {strides = array<i32>} : memref<18x256xf32, #tpu.memory_space<vmem>>, vector<1x256xf32>,
    %c1_110 = arith.constant 1 : index
    %c0_111 = arith.constant 0 : index
    %282 = vector.load %arg12[%c1_110, %c0_111] : memref<18x256xf32, #tpu.memory_space<vmem>>, vector<16x256xf32>
    tpu.vector_store %arg12[%c1_110, %c0_111], %278 {strides = array<i32>} : memref<18x256xf32, #tpu.memory_space<vmem>>, vector<16x256xf32>,
    %cst_112 = arith.constant 0.000000e+00 : f32
    %283 = vector.broadcast %cst_112 : f32 to vector<16x256xf32>
    %c0_113 = arith.constant 0 : index
    %c0_114 = arith.constant 0 : index
    %284 = vector.load %arg12[%c0_113, %c0_114] : memref<18x256xf32, #tpu.memory_space<vmem>>, vector<16x256xf32>
    %c0_115 = arith.constant 0 : index
    %c0_116 = arith.constant 0 : index
    %c0_117 = arith.constant 0 : index
    %285 = vector.load %arg6[%c0_115, %c0_116, %c0_117] : memref<3x256x256xf32, #tpu.memory_space<vmem>>, vector<1x256x256xf32>
    %286 = vector.shape_cast %285 : vector<1x256x256xf32> to vector<256x256xf32>
    %cst_118 = arith.constant dense<0.000000e+00> : vector<16x256xf32>
    %287 = tpu.matmul %284, %286, %cst_118 {dimension_numbers = #tpu.dot_dimension_numbers<[1], [0], [0], [1], [0, 0, 1, 1], [], []>} : vector<16x256xf32>, vector<256x256xf32>, vector<16x256xf32> -> vector<16x256xf32>
    %288 = arith.addf %283, %287 : vector<16x256xf32>
    %c1_119 = arith.constant 1 : index
    %c0_120 = arith.constant 0 : index
    %289 = vector.load %arg12[%c1_119, %c0_120] : memref<18x256xf32, #tpu.memory_space<vmem>>, vector<16x256xf32>
    %c1_121 = arith.constant 1 : index
    %c0_122 = arith.constant 0 : index
    %c0_123 = arith.constant 0 : index
    %290 = vector.load %arg6[%c1_121, %c0_122, %c0_123] : memref<3x256x256xf32, #tpu.memory_space<vmem>>, vector<1x256x256xf32>
    %291 = vector.shape_cast %290 : vector<1x256x256xf32> to vector<256x256xf32>
    %cst_124 = arith.constant dense<0.000000e+00> : vector<16x256xf32>
    %292 = tpu.matmul %289, %291, %cst_124 {dimension_numbers = #tpu.dot_dimension_numbers<[1], [0], [0], [1], [0, 0, 1, 1], [], []>} : vector<16x256xf32>, vector<256x256xf32>, vector<16x256xf32> -> vector<16x256xf32>
    %293 = arith.addf %288, %292 : vector<16x256xf32>
    %c2_125 = arith.constant 2 : index
    %c0_126 = arith.constant 0 : index
    %294 = vector.load %arg12[%c2_125, %c0_126] : memref<18x256xf32, #tpu.memory_space<vmem>>, vector<16x256xf32>
    %c2_127 = arith.constant 2 : index
    %c0_128 = arith.constant 0 : index
    %c0_129 = arith.constant 0 : index
    %295 = vector.load %arg6[%c2_127, %c0_128, %c0_129] : memref<3x256x256xf32, #tpu.memory_space<vmem>>, vector<1x256x256xf32>
    %296 = vector.shape_cast %295 : vector<1x256x256xf32> to vector<256x256xf32>
    %cst_130 = arith.constant dense<0.000000e+00> : vector<16x256xf32>
    %297 = tpu.matmul %294, %296, %cst_130 {dimension_numbers = #tpu.dot_dimension_numbers<[1], [0], [0], [1], [0, 0, 1, 1], [], []>} : vector<16x256xf32>, vector<256x256xf32>, vector<16x256xf32> -> vector<16x256xf32>
    %298 = arith.addf %293, %297 : vector<16x256xf32>
    %c0_131 = arith.constant 0 : index
    %c0_132 = arith.constant 0 : index
    %299 = vector.load %arg9[%c0_131, %c0_132] : memref<1x256xi32, #tpu.memory_space<vmem>>, vector<1x256xi32>
    %c0_133 = arith.constant 0 : index
    %c0_134 = arith.constant 0 : index
    %300 = vector.load %arg7[%c0_133, %c0_134] : memref<1x256xf32, #tpu.memory_space<vmem>>, vector<1x256xf32>
    %c0_135 = arith.constant 0 : index
    %c0_136 = arith.constant 0 : index
    %301 = vector.load %arg8[%c0_135, %c0_136] : memref<1x256xf32, #tpu.memory_space<vmem>>, vector<1x256xf32>
    %cst_137 = arith.constant dense<0.000000e+00> : vector<256xf32>
    %302 = vector.multi_reduction <add>, %298, %cst_137 [0] : vector<16x256xf32> to vector<256xf32>
    %303 = vector.shape_cast %302 : vector<256xf32> to vector<1x256xf32>
    %304 = arith.mulf %298, %298 : vector<16x256xf32>
    %cst_138 = arith.constant dense<0.000000e+00> : vector<256xf32>
    %305 = vector.multi_reduction <add>, %304, %cst_138 [0] : vector<16x256xf32> to vector<256xf32>
    %306 = vector.shape_cast %305 : vector<256xf32> to vector<1x256xf32>
    %cst_139 = arith.constant 0.000000e+00 : f32
    %307 = vector.broadcast %cst_139 : f32 to vector<1x256xf32>
    %cst_140 = arith.constant 0.000000e+00 : f32
    %308 = vector.broadcast %cst_140 : f32 to vector<1x256xf32>
    %c0_i32_141 = arith.constant 0 : i32
    %309 = vector.broadcast %c0_i32_141 : i32 to vector<1x256xi32>
    %310 = arith.cmpi eq, %299, %309 : vector<1x256xi32>
    %cst_142 = arith.constant 0.000000e+00 : f32
    %311 = vector.broadcast %cst_142 : f32 to vector<1x256xf32>
    %312 = arith.select %310, %303, %311 : vector<1x256xi1>, vector<1x256xf32>
    %cst_143 = arith.constant dense<0.000000e+00> : vector<1xf32>
    %313 = vector.multi_reduction <add>, %312, %cst_143 [1] : vector<1x256xf32> to vector<1xf32>
    %314 = vector.shape_cast %313 : vector<1xf32> to vector<1x1xf32>
    %cst_144 = arith.constant 0.001953125 : f32
    %315 = vector.broadcast %cst_144 : f32 to vector<1x1xf32>
    %316 = arith.mulf %314, %315 : vector<1x1xf32>
    %cst_145 = arith.constant 0.000000e+00 : f32
    %317 = vector.broadcast %cst_145 : f32 to vector<1x256xf32>
    %318 = arith.select %310, %306, %317 : vector<1x256xi1>, vector<1x256xf32>
    %cst_146 = arith.constant dense<0.000000e+00> : vector<1xf32>
    %319 = vector.multi_reduction <add>, %318, %cst_146 [1] : vector<1x256xf32> to vector<1xf32>
    %320 = vector.shape_cast %319 : vector<1xf32> to vector<1x1xf32>
    %cst_147 = arith.constant 0.001953125 : f32
    %321 = vector.broadcast %cst_147 : f32 to vector<1x1xf32>
    %322 = arith.mulf %320, %321 : vector<1x1xf32>
    %323 = arith.mulf %316, %316 : vector<1x1xf32>
    %324 = arith.subf %322, %323 : vector<1x1xf32>
    %cst_148 = arith.constant 9.99999974E-6 : f32
    %325 = vector.broadcast %cst_148 : f32 to vector<1x1xf32>
    %326 = arith.addf %324, %325 : vector<1x1xf32>
    %327 = math.rsqrt %326 : vector<1x1xf32>
    %328 = vector.shape_cast %316 : vector<1x1xf32> to vector<1x1xf32>
    %329 = vector.broadcast %328 : vector<1x1xf32> to vector<1x256xf32>
    %330 = arith.select %310, %329, %307 : vector<1x256xi1>, vector<1x256xf32>
    %331 = vector.shape_cast %327 : vector<1x1xf32> to vector<1x1xf32>
    %332 = vector.broadcast %331 : vector<1x1xf32> to vector<1x256xf32>
    %333 = arith.select %310, %332, %308 : vector<1x256xi1>, vector<1x256xf32>
    %c1_i32_149 = arith.constant 1 : i32
    %334 = vector.broadcast %c1_i32_149 : i32 to vector<1x256xi32>
    %335 = arith.cmpi eq, %299, %334 : vector<1x256xi32>
    %cst_150 = arith.constant 0.000000e+00 : f32
    %336 = vector.broadcast %cst_150 : f32 to vector<1x256xf32>
    %337 = arith.select %335, %303, %336 : vector<1x256xi1>, vector<1x256xf32>
    %cst_151 = arith.constant dense<0.000000e+00> : vector<1xf32>
    %338 = vector.multi_reduction <add>, %337, %cst_151 [1] : vector<1x256xf32> to vector<1xf32>
    %339 = vector.shape_cast %338 : vector<1xf32> to vector<1x1xf32>
    %cst_152 = arith.constant 0.001953125 : f32
    %340 = vector.broadcast %cst_152 : f32 to vector<1x1xf32>
    %341 = arith.mulf %339, %340 : vector<1x1xf32>
    %cst_153 = arith.constant 0.000000e+00 : f32
    %342 = vector.broadcast %cst_153 : f32 to vector<1x256xf32>
    %343 = arith.select %335, %306, %342 : vector<1x256xi1>, vector<1x256xf32>
    %cst_154 = arith.constant dense<0.000000e+00> : vector<1xf32>
    %344 = vector.multi_reduction <add>, %343, %cst_154 [1] : vector<1x256xf32> to vector<1xf32>
    %345 = vector.shape_cast %344 : vector<1xf32> to vector<1x1xf32>
    %cst_155 = arith.constant 0.001953125 : f32
    %346 = vector.broadcast %cst_155 : f32 to vector<1x1xf32>
    %347 = arith.mulf %345, %346 : vector<1x1xf32>
    %348 = arith.mulf %341, %341 : vector<1x1xf32>
    %349 = arith.subf %347, %348 : vector<1x1xf32>
    %cst_156 = arith.constant 9.99999974E-6 : f32
    %350 = vector.broadcast %cst_156 : f32 to vector<1x1xf32>
    %351 = arith.addf %349, %350 : vector<1x1xf32>
    %352 = math.rsqrt %351 : vector<1x1xf32>
    %353 = vector.shape_cast %341 : vector<1x1xf32> to vector<1x1xf32>
    %354 = vector.broadcast %353 : vector<1x1xf32> to vector<1x256xf32>
    %355 = arith.select %335, %354, %330 : vector<1x256xi1>, vector<1x256xf32>
    %356 = vector.shape_cast %352 : vector<1x1xf32> to vector<1x1xf32>
    %357 = vector.broadcast %356 : vector<1x1xf32> to vector<1x256xf32>
    %358 = arith.select %335, %357, %333 : vector<1x256xi1>, vector<1x256xf32>
    %c2_i32_157 = arith.constant 2 : i32
    %359 = vector.broadcast %c2_i32_157 : i32 to vector<1x256xi32>
    %360 = arith.cmpi eq, %299, %359 : vector<1x256xi32>
    %cst_158 = arith.constant 0.000000e+00 : f32
    %361 = vector.broadcast %cst_158 : f32 to vector<1x256xf32>
    %362 = arith.select %360, %303, %361 : vector<1x256xi1>, vector<1x256xf32>
    %cst_159 = arith.constant dense<0.000000e+00> : vector<1xf32>
    %363 = vector.multi_reduction <add>, %362, %cst_159 [1] : vector<1x256xf32> to vector<1xf32>
    %364 = vector.shape_cast %363 : vector<1xf32> to vector<1x1xf32>
    %cst_160 = arith.constant 0.001953125 : f32
    %365 = vector.broadcast %cst_160 : f32 to vector<1x1xf32>
    %366 = arith.mulf %364, %365 : vector<1x1xf32>
    %cst_161 = arith.constant 0.000000e+00 : f32
    %367 = vector.broadcast %cst_161 : f32 to vector<1x256xf32>
    %368 = arith.select %360, %306, %367 : vector<1x256xi1>, vector<1x256xf32>
    %cst_162 = arith.constant dense<0.000000e+00> : vector<1xf32>
    %369 = vector.multi_reduction <add>, %368, %cst_162 [1] : vector<1x256xf32> to vector<1xf32>
    %370 = vector.shape_cast %369 : vector<1xf32> to vector<1x1xf32>
    %cst_163 = arith.constant 0.001953125 : f32
    %371 = vector.broadcast %cst_163 : f32 to vector<1x1xf32>
    %372 = arith.mulf %370, %371 : vector<1x1xf32>
    %373 = arith.mulf %366, %366 : vector<1x1xf32>
    %374 = arith.subf %372, %373 : vector<1x1xf32>
    %cst_164 = arith.constant 9.99999974E-6 : f32
    %375 = vector.broadcast %cst_164 : f32 to vector<1x1xf32>
    %376 = arith.addf %374, %375 : vector<1x1xf32>
    %377 = math.rsqrt %376 : vector<1x1xf32>
    %378 = vector.shape_cast %366 : vector<1x1xf32> to vector<1x1xf32>
    %379 = vector.broadcast %378 : vector<1x1xf32> to vector<1x256xf32>
    %380 = arith.select %360, %379, %355 : vector<1x256xi1>, vector<1x256xf32>
    %381 = vector.shape_cast %377 : vector<1x1xf32> to vector<1x1xf32>
    %382 = vector.broadcast %381 : vector<1x1xf32> to vector<1x256xf32>
    %383 = arith.select %360, %382, %358 : vector<1x256xi1>, vector<1x256xf32>
    %c3_i32_165 = arith.constant 3 : i32
    %384 = vector.broadcast %c3_i32_165 : i32 to vector<1x256xi32>
    %385 = arith.cmpi eq, %299, %384 : vector<1x256xi32>
    %cst_166 = arith.constant 0.000000e+00 : f32
    %386 = vector.broadcast %cst_166 : f32 to vector<1x256xf32>
    %387 = arith.select %385, %303, %386 : vector<1x256xi1>, vector<1x256xf32>
    %cst_167 = arith.constant dense<0.000000e+00> : vector<1xf32>
    %388 = vector.multi_reduction <add>, %387, %cst_167 [1] : vector<1x256xf32> to vector<1xf32>
    %389 = vector.shape_cast %388 : vector<1xf32> to vector<1x1xf32>
    %cst_168 = arith.constant 0.001953125 : f32
    %390 = vector.broadcast %cst_168 : f32 to vector<1x1xf32>
    %391 = arith.mulf %389, %390 : vector<1x1xf32>
    %cst_169 = arith.constant 0.000000e+00 : f32
    %392 = vector.broadcast %cst_169 : f32 to vector<1x256xf32>
    %393 = arith.select %385, %306, %392 : vector<1x256xi1>, vector<1x256xf32>
    %cst_170 = arith.constant dense<0.000000e+00> : vector<1xf32>
    %394 = vector.multi_reduction <add>, %393, %cst_170 [1] : vector<1x256xf32> to vector<1xf32>
    %395 = vector.shape_cast %394 : vector<1xf32> to vector<1x1xf32>
    %cst_171 = arith.constant 0.001953125 : f32
    %396 = vector.broadcast %cst_171 : f32 to vector<1x1xf32>
    %397 = arith.mulf %395, %396 : vector<1x1xf32>
    %398 = arith.mulf %391, %391 : vector<1x1xf32>
    %399 = arith.subf %397, %398 : vector<1x1xf32>
    %cst_172 = arith.constant 9.99999974E-6 : f32
    %400 = vector.broadcast %cst_172 : f32 to vector<1x1xf32>
    %401 = arith.addf %399, %400 : vector<1x1xf32>
    %402 = math.rsqrt %401 : vector<1x1xf32>
    %403 = vector.shape_cast %391 : vector<1x1xf32> to vector<1x1xf32>
    %404 = vector.broadcast %403 : vector<1x1xf32> to vector<1x256xf32>
    %405 = arith.select %385, %404, %380 : vector<1x256xi1>, vector<1x256xf32>
    %406 = vector.shape_cast %402 : vector<1x1xf32> to vector<1x1xf32>
    %407 = vector.broadcast %406 : vector<1x1xf32> to vector<1x256xf32>
    %408 = arith.select %385, %407, %383 : vector<1x256xi1>, vector<1x256xf32>
    %c4_i32_173 = arith.constant 4 : i32
    %409 = vector.broadcast %c4_i32_173 : i32 to vector<1x256xi32>
    %410 = arith.cmpi eq, %299, %409 : vector<1x256xi32>
    %cst_174 = arith.constant 0.000000e+00 : f32
    %411 = vector.broadcast %cst_174 : f32 to vector<1x256xf32>
    %412 = arith.select %410, %303, %411 : vector<1x256xi1>, vector<1x256xf32>
    %cst_175 = arith.constant dense<0.000000e+00> : vector<1xf32>
    %413 = vector.multi_reduction <add>, %412, %cst_175 [1] : vector<1x256xf32> to vector<1xf32>
    %414 = vector.shape_cast %413 : vector<1xf32> to vector<1x1xf32>
    %cst_176 = arith.constant 0.001953125 : f32
    %415 = vector.broadcast %cst_176 : f32 to vector<1x1xf32>
    %416 = arith.mulf %414, %415 : vector<1x1xf32>
    %cst_177 = arith.constant 0.000000e+00 : f32
    %417 = vector.broadcast %cst_177 : f32 to vector<1x256xf32>
    %418 = arith.select %410, %306, %417 : vector<1x256xi1>, vector<1x256xf32>
    %cst_178 = arith.constant dense<0.000000e+00> : vector<1xf32>
    %419 = vector.multi_reduction <add>, %418, %cst_178 [1] : vector<1x256xf32> to vector<1xf32>
    %420 = vector.shape_cast %419 : vector<1xf32> to vector<1x1xf32>
    %cst_179 = arith.constant 0.001953125 : f32
    %421 = vector.broadcast %cst_179 : f32 to vector<1x1xf32>
    %422 = arith.mulf %420, %421 : vector<1x1xf32>
    %423 = arith.mulf %416, %416 : vector<1x1xf32>
    %424 = arith.subf %422, %423 : vector<1x1xf32>
    %cst_180 = arith.constant 9.99999974E-6 : f32
    %425 = vector.broadcast %cst_180 : f32 to vector<1x1xf32>
    %426 = arith.addf %424, %425 : vector<1x1xf32>
    %427 = math.rsqrt %426 : vector<1x1xf32>
    %428 = vector.shape_cast %416 : vector<1x1xf32> to vector<1x1xf32>
    %429 = vector.broadcast %428 : vector<1x1xf32> to vector<1x256xf32>
    %430 = arith.select %410, %429, %405 : vector<1x256xi1>, vector<1x256xf32>
    %431 = vector.shape_cast %427 : vector<1x1xf32> to vector<1x1xf32>
    %432 = vector.broadcast %431 : vector<1x1xf32> to vector<1x256xf32>
    %433 = arith.select %410, %432, %408 : vector<1x256xi1>, vector<1x256xf32>
    %c5_i32_181 = arith.constant 5 : i32
    %434 = vector.broadcast %c5_i32_181 : i32 to vector<1x256xi32>
    %435 = arith.cmpi eq, %299, %434 : vector<1x256xi32>
    %cst_182 = arith.constant 0.000000e+00 : f32
    %436 = vector.broadcast %cst_182 : f32 to vector<1x256xf32>
    %437 = arith.select %435, %303, %436 : vector<1x256xi1>, vector<1x256xf32>
    %cst_183 = arith.constant dense<0.000000e+00> : vector<1xf32>
    %438 = vector.multi_reduction <add>, %437, %cst_183 [1] : vector<1x256xf32> to vector<1xf32>
    %439 = vector.shape_cast %438 : vector<1xf32> to vector<1x1xf32>
    %cst_184 = arith.constant 0.001953125 : f32
    %440 = vector.broadcast %cst_184 : f32 to vector<1x1xf32>
    %441 = arith.mulf %439, %440 : vector<1x1xf32>
    %cst_185 = arith.constant 0.000000e+00 : f32
    %442 = vector.broadcast %cst_185 : f32 to vector<1x256xf32>
    %443 = arith.select %435, %306, %442 : vector<1x256xi1>, vector<1x256xf32>
    %cst_186 = arith.constant dense<0.000000e+00> : vector<1xf32>
    %444 = vector.multi_reduction <add>, %443, %cst_186 [1] : vector<1x256xf32> to vector<1xf32>
    %445 = vector.shape_cast %444 : vector<1xf32> to vector<1x1xf32>
    %cst_187 = arith.constant 0.001953125 : f32
    %446 = vector.broadcast %cst_187 : f32 to vector<1x1xf32>
    %447 = arith.mulf %445, %446 : vector<1x1xf32>
    %448 = arith.mulf %441, %441 : vector<1x1xf32>
    %449 = arith.subf %447, %448 : vector<1x1xf32>
    %cst_188 = arith.constant 9.99999974E-6 : f32
    %450 = vector.broadcast %cst_188 : f32 to vector<1x1xf32>
    %451 = arith.addf %449, %450 : vector<1x1xf32>
    %452 = math.rsqrt %451 : vector<1x1xf32>
    %453 = vector.shape_cast %441 : vector<1x1xf32> to vector<1x1xf32>
    %454 = vector.broadcast %453 : vector<1x1xf32> to vector<1x256xf32>
    %455 = arith.select %435, %454, %430 : vector<1x256xi1>, vector<1x256xf32>
    %456 = vector.shape_cast %452 : vector<1x1xf32> to vector<1x1xf32>
    %457 = vector.broadcast %456 : vector<1x1xf32> to vector<1x256xf32>
    %458 = arith.select %435, %457, %433 : vector<1x256xi1>, vector<1x256xf32>
    %c6_i32_189 = arith.constant 6 : i32
    %459 = vector.broadcast %c6_i32_189 : i32 to vector<1x256xi32>
    %460 = arith.cmpi eq, %299, %459 : vector<1x256xi32>
    %cst_190 = arith.constant 0.000000e+00 : f32
    %461 = vector.broadcast %cst_190 : f32 to vector<1x256xf32>
    %462 = arith.select %460, %303, %461 : vector<1x256xi1>, vector<1x256xf32>
    %cst_191 = arith.constant dense<0.000000e+00> : vector<1xf32>
    %463 = vector.multi_reduction <add>, %462, %cst_191 [1] : vector<1x256xf32> to vector<1xf32>
    %464 = vector.shape_cast %463 : vector<1xf32> to vector<1x1xf32>
    %cst_192 = arith.constant 0.001953125 : f32
    %465 = vector.broadcast %cst_192 : f32 to vector<1x1xf32>
    %466 = arith.mulf %464, %465 : vector<1x1xf32>
    %cst_193 = arith.constant 0.000000e+00 : f32
    %467 = vector.broadcast %cst_193 : f32 to vector<1x256xf32>
    %468 = arith.select %460, %306, %467 : vector<1x256xi1>, vector<1x256xf32>
    %cst_194 = arith.constant dense<0.000000e+00> : vector<1xf32>
    %469 = vector.multi_reduction <add>, %468, %cst_194 [1] : vector<1x256xf32> to vector<1xf32>
    %470 = vector.shape_cast %469 : vector<1xf32> to vector<1x1xf32>
    %cst_195 = arith.constant 0.001953125 : f32
    %471 = vector.broadcast %cst_195 : f32 to vector<1x1xf32>
    %472 = arith.mulf %470, %471 : vector<1x1xf32>
    %473 = arith.mulf %466, %466 : vector<1x1xf32>
    %474 = arith.subf %472, %473 : vector<1x1xf32>
    %cst_196 = arith.constant 9.99999974E-6 : f32
    %475 = vector.broadcast %cst_196 : f32 to vector<1x1xf32>
    %476 = arith.addf %474, %475 : vector<1x1xf32>
    %477 = math.rsqrt %476 : vector<1x1xf32>
    %478 = vector.shape_cast %466 : vector<1x1xf32> to vector<1x1xf32>
    %479 = vector.broadcast %478 : vector<1x1xf32> to vector<1x256xf32>
    %480 = arith.select %460, %479, %455 : vector<1x256xi1>, vector<1x256xf32>
    %481 = vector.shape_cast %477 : vector<1x1xf32> to vector<1x1xf32>
    %482 = vector.broadcast %481 : vector<1x1xf32> to vector<1x256xf32>
    %483 = arith.select %460, %482, %458 : vector<1x256xi1>, vector<1x256xf32>
    %c7_i32_197 = arith.constant 7 : i32
    %484 = vector.broadcast %c7_i32_197 : i32 to vector<1x256xi32>
    %485 = arith.cmpi eq, %299, %484 : vector<1x256xi32>
    %cst_198 = arith.constant 0.000000e+00 : f32
    %486 = vector.broadcast %cst_198 : f32 to vector<1x256xf32>
    %487 = arith.select %485, %303, %486 : vector<1x256xi1>, vector<1x256xf32>
    %cst_199 = arith.constant dense<0.000000e+00> : vector<1xf32>
    %488 = vector.multi_reduction <add>, %487, %cst_199 [1] : vector<1x256xf32> to vector<1xf32>
    %489 = vector.shape_cast %488 : vector<1xf32> to vector<1x1xf32>
    %cst_200 = arith.constant 0.001953125 : f32
    %490 = vector.broadcast %cst_200 : f32 to vector<1x1xf32>
    %491 = arith.mulf %489, %490 : vector<1x1xf32>
    %cst_201 = arith.constant 0.000000e+00 : f32
    %492 = vector.broadcast %cst_201 : f32 to vector<1x256xf32>
    %493 = arith.select %485, %306, %492 : vector<1x256xi1>, vector<1x256xf32>
    %cst_202 = arith.constant dense<0.000000e+00> : vector<1xf32>
    %494 = vector.multi_reduction <add>, %493, %cst_202 [1] : vector<1x256xf32> to vector<1xf32>
    %495 = vector.shape_cast %494 : vector<1xf32> to vector<1x1xf32>
    %cst_203 = arith.constant 0.001953125 : f32
    %496 = vector.broadcast %cst_203 : f32 to vector<1x1xf32>
    %497 = arith.mulf %495, %496 : vector<1x1xf32>
    %498 = arith.mulf %491, %491 : vector<1x1xf32>
    %499 = arith.subf %497, %498 : vector<1x1xf32>
    %cst_204 = arith.constant 9.99999974E-6 : f32
    %500 = vector.broadcast %cst_204 : f32 to vector<1x1xf32>
    %501 = arith.addf %499, %500 : vector<1x1xf32>
    %502 = math.rsqrt %501 : vector<1x1xf32>
    %503 = vector.shape_cast %491 : vector<1x1xf32> to vector<1x1xf32>
    %504 = vector.broadcast %503 : vector<1x1xf32> to vector<1x256xf32>
    %505 = arith.select %485, %504, %480 : vector<1x256xi1>, vector<1x256xf32>
    %506 = vector.shape_cast %502 : vector<1x1xf32> to vector<1x1xf32>
    %507 = vector.broadcast %506 : vector<1x1xf32> to vector<1x256xf32>
    %508 = arith.select %485, %507, %483 : vector<1x256xi1>, vector<1x256xf32>
    %509 = arith.mulf %508, %300 : vector<1x256xf32>
    %510 = arith.mulf %505, %509 : vector<1x256xf32>
    %511 = arith.subf %301, %510 : vector<1x256xf32>
    %512 = vector.broadcast %509 : vector<1x256xf32> to vector<16x256xf32>
    %513 = arith.mulf %298, %512 : vector<16x256xf32>
    %514 = vector.broadcast %511 : vector<1x256xf32> to vector<16x256xf32>
    %515 = arith.addf %513, %514 : vector<16x256xf32>
    %c0_205 = arith.constant 0 : index
    %c0_206 = arith.constant 0 : index
    %c0_207 = arith.constant 0 : index
    %516 = vector.load %arg10[%c0_205, %c0_206, %c0_207] : memref<1x16x256xf32, #tpu.memory_space<vmem>>, vector<1x16x256xf32>
    %517 = vector.shape_cast %516 : vector<1x16x256xf32> to vector<16x256xf32>
    %518 = vector.shape_cast %515 : vector<16x256xf32> to vector<1x16x256xf32>
    tpu.vector_store %arg10[%c0_205, %c0_206, %c0_207], %518 {strides = array<i32>} : memref<1x16x256xf32, #tpu.memory_space<vmem>>, vector<1x16x256xf32>,
    return
  }
  func.func @transform_0(%arg0: i32) -> (i32, i32, i32) {
    %c0_i32 = arith.constant 0 : i32
    %c0_i32_0 = arith.constant 0 : i32
    %c0_i32_1 = arith.constant 0 : i32
    return %arg0, %c0_i32, %c0_i32_0 : i32, i32, i32
  }
  func.func @transform_1(%arg0: i32) -> (i32, i32, i32) {
    %c0_i32 = arith.constant 0 : i32
    %c0_i32_0 = arith.constant 0 : i32
    %c0_i32_1 = arith.constant 0 : i32
    %c0_i32_2 = arith.constant 0 : i32
    return %c0_i32, %c0_i32_0, %c0_i32_1 : i32, i32, i32
  }
  func.func @transform_2(%arg0: i32) -> (i32, i32) {
    %c0_i32 = arith.constant 0 : i32
    %c0_i32_0 = arith.constant 0 : i32
    %c0_i32_1 = arith.constant 0 : i32
    return %c0_i32, %c0_i32_0 : i32, i32
  }
  func.func @transform_3(%arg0: i32) -> (i32, i32) {
    %c0_i32 = arith.constant 0 : i32
    %c0_i32_0 = arith.constant 0 : i32
    %c0_i32_1 = arith.constant 0 : i32
    return %c0_i32, %c0_i32_0 : i32, i32
  }
  func.func @transform_4(%arg0: i32) -> (i32, i32) {
    %c0_i32 = arith.constant 0 : i32
    %c0_i32_0 = arith.constant 0 : i32
    %c0_i32_1 = arith.constant 0 : i32
    return %c0_i32, %c0_i32_0 : i32, i32
  }
  func.func @transform_5(%arg0: i32) -> (i32, i32, i32) {
    %c0_i32 = arith.constant 0 : i32
    %c0_i32_0 = arith.constant 0 : i32
    %c0_i32_1 = arith.constant 0 : i32
    %c0_i32_2 = arith.constant 0 : i32
    return %c0_i32, %c0_i32_0, %c0_i32_1 : i32, i32, i32
  }
  func.func @transform_6(%arg0: i32) -> (i32, i32) {
    %c0_i32 = arith.constant 0 : i32
    %c0_i32_0 = arith.constant 0 : i32
    %c0_i32_1 = arith.constant 0 : i32
    return %c0_i32, %c0_i32_0 : i32, i32
  }
  func.func @transform_7(%arg0: i32) -> (i32, i32) {
    %c0_i32 = arith.constant 0 : i32
    %c0_i32_0 = arith.constant 0 : i32
    %c0_i32_1 = arith.constant 0 : i32
    return %c0_i32, %c0_i32_0 : i32, i32
  }
  func.func @transform_8(%arg0: i32) -> (i32, i32) {
    %c0_i32 = arith.constant 0 : i32
    %c0_i32_0 = arith.constant 0 : i32
    %c0_i32_1 = arith.constant 0 : i32
    return %c0_i32, %c0_i32_0 : i32, i32
  }
  func.func @transform_9(%arg0: i32) -> (i32, i32, i32) {
    %c0_i32 = arith.constant 0 : i32
    %c0_i32_0 = arith.constant 0 : i32
    %c0_i32_1 = arith.constant 0 : i32
    return %arg0, %c0_i32, %c0_i32_0 : i32, i32, i32
  }
}

</mosaic_0001>

<llo_original>
// kernel: tpu_custom_call.1
$region0: #{tpu_custom_call.1}
  #allocation0 [shape = 'u32[]', space=smem, size = 0x4, offset = 0x4, fixed_abs, tag = 'smem constant byte address 0x4 - core index']
  #allocation1 [shape = 'u32[144,128]{1,0:T(1,128)}', space=vmem, size = 0x12000, scoped, tag = 'internal scratch']
  #allocation2 [shape = 'f32[18,128]{1,0:T(8,128)}', space=vmem, size = 0x3000, scoped, tag = 'scratch operand']
  #allocation3 [shape = 'f32[18,256]{1,0:T(8,128)}', space=vmem, size = 0x6000, scoped, tag = 'scratch operand']
  %s0 = inlined_call_operand.hbm [shape: f32[2,16,128], index: 0, kind: input, shape index: {}]
  %s1 = inlined_call_operand.hbm [shape: f32[3,128,256], index: 1, kind: input, shape index: {}]
  %s2 = inlined_call_operand.vmem [shape: f32[1,256], index: 2, kind: input, shape index: {}]
  %s3 = inlined_call_operand.vmem [shape: f32[1,256], index: 3, kind: input, shape index: {}]
  %s4 = inlined_call_operand.vmem [shape: s32[1,256], index: 4, kind: input, shape index: {}]
  %s5 = inlined_call_operand.hbm [shape: f32[3,256,256], index: 5, kind: input, shape index: {}]
  %s6 = inlined_call_operand.vmem [shape: f32[1,256], index: 6, kind: input, shape index: {}]
  %s7 = inlined_call_operand.vmem [shape: f32[1,256], index: 7, kind: input, shape index: {}]
  %s8 = inlined_call_operand.vmem [shape: s32[1,256], index: 8, kind: input, shape index: {}]
  %s9 = inlined_call_operand.hbm [shape: f32[2,16,256], index: 9, kind: output, shape index: {}]
  %s10 = sld [smem:[#allocation0]]
  $region81: #{tpu_custom_call.1} parent=0
    _
  %s12 = ssub.s32 1, %s10
  %s13 = scalar_select 0, %s12, %s10
  $region1: #{tpu_custom_call.1} parent=0
    #allocation4 [shape = 'u8[16384]{0}', space=vmem, size = 0x4000, scoped, tag = 'input window, operand 0']
    #allocation5 [shape = 's32[2]{0}', space=sflag, size = 0x8, scoped, tag = 'scoped memory for tpu_custom_call.1']
    #allocation6 [shape = 's32[2]{0}', space=sflag, size = 0x8, scoped, tag = 'scoped memory for tpu_custom_call.1']
    #allocation7 [shape = 'u8[393216]{0}', space=vmem, size = 0x60000, scoped, tag = 'input window, operand 1, single buffered']
    #allocation8 [shape = 's32[1]{0}', space=sflag, size = 0x4, scoped, tag = 'scoped memory for tpu_custom_call.1']
    #allocation9 [shape = 'u8[786432]{0}', space=vmem, size = 0xc0000, scoped, tag = 'input window, operand 5, single buffered']
    #allocation10 [shape = 'u8[32768]{0}', space=vmem, size = 0x8000, scoped, tag = 'output window, operand 0']
    %14 = vsyncpa [#allocation5], 0
    %s15 = scalar_lea.sflag [#allocation5], 1
    %16 = vsyncpa %s15, 0
    %17 = vsyncpa [#allocation8], 0
    %18 = vsyncpa [#allocation6], 0
    %s19 = scalar_lea.sflag [#allocation6], 1
    %20 = vsyncpa %s19, 0
    loop: start=0, step=1, limit=4
    $region2: #{tpu_custom_call.1} parent=1 // loop_pre_header
      _
    $region3: #{tpu_custom_call.1} parent=1 // loop_header
      %s22 = sphi 0, %s26
      %p23 = scmp.ge.s32.totalorder %s22, 4
      %s32 = sphi 0, %s34
      %s35 = sphi 0, %s32
      %s36 = sphi 0, %s35
      %s52 = sphi 0, %s36
      %s56 = sphi 0, %s56
      %s58 = sphi 0, %s56
      %s59 = sphi 0, %s58
      %s73 = sphi 0, %s59
      %s77 = sphi 0, %s77
      %s79 = sphi 0, %s77
      %s80 = sphi 0, %s79
      %s94 = sphi 0, %s80
      %s98 = sphi 0, %s98
      %s100 = sphi 0, %s98
      %s101 = sphi 0, %s100
      %s115 = sphi 0, %s101
      %s119 = sphi 0, %s119
      %s121 = sphi 0, %s119
      %s122 = sphi 0, %s121
      %s136 = sphi 0, %s122
      %s140 = sphi 0, %s140
      %s142 = sphi 0, %s140
      %s143 = sphi 0, %s142
      %s157 = sphi 0, %s143
      %s161 = sphi 0, %s161
      %s163 = sphi 0, %s161
      %s164 = sphi 0, %s163
      %s178 = sphi 0, %s164
      %s182 = sphi 0, %s182
      %s184 = sphi 0, %s182
      %s185 = sphi 0, %s184
      %s199 = sphi 0, %s185
      %s203 = sphi 0, %s203
      %s205 = sphi 0, %s203
      %s206 = sphi 0, %s205
      %s220 = sphi 0, %s206
      %s226 = sphi 0, %s228
      %s229 = sphi 0, %s226
      %s230 = sphi 0, %s229
      %s246 = sphi 0, %s230
    $region4: #{tpu_custom_call.1} parent=1 // loop_header_branch
      %25 = sbr.rel (%p23) target = $region8
    $region5: #{tpu_custom_call.1} parent=1 // loop_body
      %s27 = ssub.s32 %s22, 1
      %s28 = ssub.s32 %s22, 2
      %s29 = sadd.s32 %s22, 1
      %s30 = ssub.s32 %s22, %s29
      %p31 = scmp.eq.s32.totalorder %s30, 0
      %s33 = sadd.s32 %s32, 1
      %s34 = scalar_select %p31, %s32, %s33
      %p37 = pneg %p31
      %p38 = scmp.eq.s32.totalorder %s22, 1
      %p39 = por %p37, %p38
      %p40 = scmp.ne.s32.totalorder %s32, %s35
      %p41 = scmp.eq.s32.totalorder %s22, 0
      %p42 = por %p40, %p41
      %p43 = scmp.ne.s32.totalorder %s32, %s35
      %p44 = scmp.eq.s32.totalorder %s27, 1
      %p45 = por %p43, %p44
      %p46 = scmp.ne.s32.totalorder %s35, %s36
      %p47 = scmp.eq.s32.totalorder %s27, 0
      %p48 = por %p46, %p47
      %p49 = scmp.ne.s32.totalorder %s35, %s36
      %p50 = scmp.eq.s32.totalorder %s28, 1
      %p51 = por %p49, %p50
      %p53 = scmp.ne.s32.totalorder %s36, %s52
      %p54 = scmp.eq.s32.totalorder %s28, 0
      %p55 = por %p53, %p54
      %s57 = sadd.s32 %s56, 1
      %p60 = scmp.eq.s32.totalorder %s22, 1
      %p61 = scmp.ne.s32.totalorder %s56, %s58
      %p62 = scmp.eq.s32.totalorder %s22, 0
      %p63 = por %p61, %p62
      %p64 = scmp.ne.s32.totalorder %s56, %s58
      %p65 = scmp.eq.s32.totalorder %s27, 1
      %p66 = por %p64, %p65
      %p67 = scmp.ne.s32.totalorder %s58, %s59
      %p68 = scmp.eq.s32.totalorder %s27, 0
      %p69 = por %p67, %p68
      %p70 = scmp.ne.s32.totalorder %s58, %s59
      %p71 = scmp.eq.s32.totalorder %s28, 1
      %p72 = por %p70, %p71
      %p74 = scmp.ne.s32.totalorder %s59, %s73
      %p75 = scmp.eq.s32.totalorder %s28, 0
      %p76 = por %p74, %p75
      %s78 = sadd.s32 %s77, 1
      %p81 = scmp.eq.s32.totalorder %s22, 1
      %p82 = scmp.ne.s32.totalorder %s77, %s79
      %p83 = scmp.eq.s32.totalorder %s22, 0
      %p84 = por %p82, %p83
      %p85 = scmp.ne.s32.totalorder %s77, %s79
      %p86 = scmp.eq.s32.totalorder %s27, 1
      %p87 = por %p85, %p86
      %p88 = scmp.ne.s32.totalorder %s79, %s80
      %p89 = scmp.eq.s32.totalorder %s27, 0
      %p90 = por %p88, %p89
      %p91 = scmp.ne.s32.totalorder %s79, %s80
      %p92 = scmp.eq.s32.totalorder %s28, 1
      %p93 = por %p91, %p92
      %p95 = scmp.ne.s32.totalorder %s80, %s94
      %p96 = scmp.eq.s32.totalorder %s28, 0
      %p97 = por %p95, %p96
      %s99 = sadd.s32 %s98, 1
      %p102 = scmp.eq.s32.totalorder %s22, 1
      %p103 = scmp.ne.s32.totalorder %s98, %s100
      %p104 = scmp.eq.s32.totalorder %s22, 0
      %p105 = por %p103, %p104
      %p106 = scmp.ne.s32.totalorder %s98, %s100
      %p107 = scmp.eq.s32.totalorder %s27, 1
      %p108 = por %p106, %p107
      %p109 = scmp.ne.s32.totalorder %s100, %s101
      %p110 = scmp.eq.s32.totalorder %s27, 0
      %p111 = por %p109, %p110
      %p112 = scmp.ne.s32.totalorder %s100, %s101
      %p113 = scmp.eq.s32.totalorder %s28, 1
      %p114 = por %p112, %p113
      %p116 = scmp.ne.s32.totalorder %s101, %s115
      %p117 = scmp.eq.s32.totalorder %s28, 0
      %p118 = por %p116, %p117
      %s120 = sadd.s32 %s119, 1
      %p123 = scmp.eq.s32.totalorder %s22, 1
      %p124 = scmp.ne.s32.totalorder %s119, %s121
      %p125 = scmp.eq.s32.totalorder %s22, 0
      %p126 = por %p124, %p125
      %p127 = scmp.ne.s32.totalorder %s119, %s121
      %p128 = scmp.eq.s32.totalorder %s27, 1
      %p129 = por %p127, %p128
      %p130 = scmp.ne.s32.totalorder %s121, %s122
      %p131 = scmp.eq.s32.totalorder %s27, 0
      %p132 = por %p130, %p131
      %p133 = scmp.ne.s32.totalorder %s121, %s122
      %p134 = scmp.eq.s32.totalorder %s28, 1
      %p135 = por %p133, %p134
      %p137 = scmp.ne.s32.totalorder %s122, %s136
      %p138 = scmp.eq.s32.totalorder %s28, 0
      %p139 = por %p137, %p138
      %s141 = sadd.s32 %s140, 1
      %p144 = scmp.eq.s32.totalorder %s22, 1
      %p145 = scmp.ne.s32.totalorder %s140, %s142
      %p146 = scmp.eq.s32.totalorder %s22, 0
      %p147 = por %p145, %p146
      %p148 = scmp.ne.s32.totalorder %s140, %s142
      %p149 = scmp.eq.s32.totalorder %s27, 1
      %p150 = por %p148, %p149
      %p151 = scmp.ne.s32.totalorder %s142, %s143
      %p152 = scmp.eq.s32.totalorder %s27, 0
      %p153 = por %p151, %p152
      %p154 = scmp.ne.s32.totalorder %s142, %s143
      %p155 = scmp.eq.s32.totalorder %s28, 1
      %p156 = por %p154, %p155
      %p158 = scmp.ne.s32.totalorder %s143, %s157
      %p159 = scmp.eq.s32.totalorder %s28, 0
      %p160 = por %p158, %p159
      %s162 = sadd.s32 %s161, 1
      %p165 = scmp.eq.s32.totalorder %s22, 1
      %p166 = scmp.ne.s32.totalorder %s161, %s163
      %p167 = scmp.eq.s32.totalorder %s22, 0
      %p168 = por %p166, %p167
      %p169 = scmp.ne.s32.totalorder %s161, %s163
      %p170 = scmp.eq.s32.totalorder %s27, 1
      %p171 = por %p169, %p170
      %p172 = scmp.ne.s32.totalorder %s163, %s164
      %p173 = scmp.eq.s32.totalorder %s27, 0
      %p174 = por %p172, %p173
      %p175 = scmp.ne.s32.totalorder %s163, %s164
      %p176 = scmp.eq.s32.totalorder %s28, 1
      %p177 = por %p175, %p176
      %p179 = scmp.ne.s32.totalorder %s164, %s178
      %p180 = scmp.eq.s32.totalorder %s28, 0
      %p181 = por %p179, %p180
      %s183 = sadd.s32 %s182, 1
      %p186 = scmp.eq.s32.totalorder %s22, 1
      %p187 = scmp.ne.s32.totalorder %s182, %s184
      %p188 = scmp.eq.s32.totalorder %s22, 0
      %p189 = por %p187, %p188
      %p190 = scmp.ne.s32.totalorder %s182, %s184
      %p191 = scmp.eq.s32.totalorder %s27, 1
      %p192 = por %p190, %p191
      %p193 = scmp.ne.s32.totalorder %s184, %s185
      %p194 = scmp.eq.s32.totalorder %s27, 0
      %p195 = por %p193, %p194
      %p196 = scmp.ne.s32.totalorder %s184, %s185
      %p197 = scmp.eq.s32.totalorder %s28, 1
      %p198 = por %p196, %p197
      %p200 = scmp.ne.s32.totalorder %s185, %s199
      %p201 = scmp.eq.s32.totalorder %s28, 0
      %p202 = por %p200, %p201
      %s204 = sadd.s32 %s203, 1
      %p207 = scmp.eq.s32.totalorder %s22, 1
      %p208 = scmp.ne.s32.totalorder %s203, %s205
      %p209 = scmp.eq.s32.totalorder %s22, 0
      %p210 = por %p208, %p209
      %p211 = scmp.ne.s32.totalorder %s203, %s205
      %p212 = scmp.eq.s32.totalorder %s27, 1
      %p213 = por %p211, %p212
      %p214 = scmp.ne.s32.totalorder %s205, %s206
      %p215 = scmp.eq.s32.totalorder %s27, 0
      %p216 = por %p214, %p215
      %p217 = scmp.ne.s32.totalorder %s205, %s206
      %p218 = scmp.eq.s32.totalorder %s28, 1
      %p219 = por %p217, %p218
      %p221 = scmp.ne.s32.totalorder %s206, %s220
      %p222 = scmp.eq.s32.totalorder %s28, 0
      %p223 = por %p221, %p222
      %s224 = ssub.s32 %s22, %s29
      %p225 = scmp.eq.s32.totalorder %s224, 0
      %s227 = sadd.s32 %s226, 1
      %s228 = scalar_select %p225, %s226, %s227
      %p231 = pneg %p225
      %p232 = scmp.eq.s32.totalorder %s22, 1
      %p233 = por %p231, %p232
      %p234 = scmp.ne.s32.totalorder %s226, %s229
      %p235 = scmp.eq.s32.totalorder %s22, 0
      %p236 = por %p234, %p235
      %p237 = scmp.ne.s32.totalorder %s226, %s229
      %p238 = scmp.eq.s32.totalorder %s27, 1
      %p239 = por %p237, %p238
      %p240 = scmp.ne.s32.totalorder %s229, %s230
      %p241 = scmp.eq.s32.totalorder %s27, 0
      %p242 = por %p240, %p241
      %p243 = scmp.ne.s32.totalorder %s229, %s230
      %p244 = scmp.eq.s32.totalorder %s28, 1
      %p245 = por %p243, %p244
      %p247 = scmp.ne.s32.totalorder %s230, %s246
      %p248 = scmp.eq.s32.totalorder %s28, 0
      %p249 = por %p247, %p248
      %p250 = scmp.le.s32.totalorder 1, %s22
      %p251 = scmp.lt.s32.totalorder %s22, 3
      %p252 = pnand %p250, %p251
      %p253 = pneg %p252
      // Predicated region
      $region9: #{tpu_custom_call.1} parent=5 // pred_check
        _
      $region10: #{tpu_custom_call.1} parent=5 // pred_check_branch
        %255 = sbr.rel (%p252) target = $region12
      $region11: #{tpu_custom_call.1} parent=5 // pred_region
        %s256 = ssub.s32 %s22, 1
        // Predicated region
        $region13: #{tpu_custom_call.1} parent=11 // pred_check
          %p257 = pneg %p69
        $region14: #{tpu_custom_call.1} parent=11 // pred_check_branch
          %259 = sbr.rel (%p257) target = $region16
        $region15: #{tpu_custom_call.1} parent=11 // pred_region
          %s261 = ssub.s32 12288, 12288
          %262 = vsyncadd [#allocation8], %s261
          %s263 = sshll.u32 [#allocation7], 4
          %s264 = int_to_ptr.vmem [resolvable:$true] %s263
          %269 = dma.hbm_to_vmem [thread:$0]  %s1, 12288, %s264, [#allocation8], 256, 256, 16
        $region16: #{tpu_custom_call.1} parent=11 // pred_fallthru
          _
        // Predicated region
        $region17: #{tpu_custom_call.1} parent=11 // pred_check
          %p270 = pneg %p90
        $region18: #{tpu_custom_call.1} parent=11 // pred_check_branch
          %272 = sbr.rel (%p270) target = $region20
        $region19: #{tpu_custom_call.1} parent=11 // pred_region
          _
        $region20: #{tpu_custom_call.1} parent=11 // pred_fallthru
          _
        // Predicated region
        $region21: #{tpu_custom_call.1} parent=11 // pred_check
          %p273 = pneg %p111
        $region22: #{tpu_custom_call.1} parent=11 // pred_check_branch
          %275 = sbr.rel (%p273) target = $region24
        $region23: #{tpu_custom_call.1} parent=11 // pred_region
          _
        $region24: #{tpu_custom_call.1} parent=11 // pred_fallthru
          _
        // Predicated region
        $region25: #{tpu_custom_call.1} parent=11 // pred_check
          %p276 = pneg %p132
        $region26: #{tpu_custom_call.1} parent=11 // pred_check_branch
          %278 = sbr.rel (%p276) target = $region28
        $region27: #{tpu_custom_call.1} parent=11 // pred_region
          _
        $region28: #{tpu_custom_call.1} parent=11 // pred_fallthru
          _
        // Predicated region
        $region29: #{tpu_custom_call.1} parent=11 // pred_check
          %p279 = pneg %p153
        $region30: #{tpu_custom_call.1} parent=11 // pred_check_branch
          %281 = sbr.rel (%p279) target = $region32
        $region31: #{tpu_custom_call.1} parent=11 // pred_region
          %s283 = ssub.s32 24576, 24576
          %284 = vsyncadd [#allocation8], %s283
          %s285 = sshll.u32 [#allocation9], 4
          %s286 = int_to_ptr.vmem [resolvable:$true] %s285
          %291 = dma.hbm_to_vmem [thread:$0]  %s5, 24576, %s286, [#allocation8], 256, 256, 16
        $region32: #{tpu_custom_call.1} parent=11 // pred_fallthru
          _
        // Predicated region
        $region33: #{tpu_custom_call.1} parent=11 // pred_check
          %p292 = pneg %p174
        $region34: #{tpu_custom_call.1} parent=11 // pred_check_branch
          %294 = sbr.rel (%p292) target = $region36
        $region35: #{tpu_custom_call.1} parent=11 // pred_region
          _
        $region36: #{tpu_custom_call.1} parent=11 // pred_fallthru
          _
        // Predicated region
        $region37: #{tpu_custom_call.1} parent=11 // pred_check
          %p295 = pneg %p195
        $region38: #{tpu_custom_call.1} parent=11 // pred_check_branch
          %297 = sbr.rel (%p295) target = $region40
        $region39: #{tpu_custom_call.1} parent=11 // pred_region
          _
        $region40: #{tpu_custom_call.1} parent=11 // pred_fallthru
          _
        // Predicated region
        $region41: #{tpu_custom_call.1} parent=11 // pred_check
          %p298 = pneg %p216
        $region42: #{tpu_custom_call.1} parent=11 // pred_check_branch
          %300 = sbr.rel (%p298) target = $region44
        $region43: #{tpu_custom_call.1} parent=11 // pred_region
          _
        $region44: #{tpu_custom_call.1} parent=11 // pred_fallthru
          _
      $region12: #{tpu_custom_call.1} parent=5 // pred_fallthru
        _
      %p301 = scmp.lt.s32.totalorder %s22, 2
      // Predicated region
      $region45: #{tpu_custom_call.1} parent=5 // pred_check
        %p302 = pneg %p301
      $region46: #{tpu_custom_call.1} parent=5 // pred_check_branch
        %304 = sbr.rel (%p302) target = $region48
      $region47: #{tpu_custom_call.1} parent=5 // pred_region
        // Predicated region
        $region49: #{tpu_custom_call.1} parent=47 // pred_check
          %p305 = pneg %p42
        $region50: #{tpu_custom_call.1} parent=47 // pred_check_branch
          %307 = sbr.rel (%p305) target = $region52
        $region51: #{tpu_custom_call.1} parent=47 // pred_region
          %s308 = sand.u32 %s32, 1
          %s309 = scalar_lea.sflag [#allocation5], %s308
          %s310 = sand.u32 %s32, 1
          %s311 = smul.addr %s310, 16
          %s312 = scalar_lea.vmem [#allocation4], %s311
          %s314 = ssub.s32 256, 256
          %315 = vsyncadd %s309, %s314
          %s316 = smul.addr %s22, 2
          %s317 = smul.addr %s316, 128
          %s318 = scalar_lea.hbm %s0, %s317
          %s319 = sshll.u32 %s312, 4
          %s320 = int_to_ptr.vmem [resolvable:$true] %s319
          %325 = dma.hbm_to_vmem [thread:$0]  %s318, 256, %s320, %s309, 128, 128, 8
        $region52: #{tpu_custom_call.1} parent=47 // pred_fallthru
          _
      $region48: #{tpu_custom_call.1} parent=5 // pred_fallthru
        _
      %p326 = scmp.le.s32.totalorder 1, %s22
      %p327 = scmp.lt.s32.totalorder %s22, 3
      %p328 = pnand %p326, %p327
      %p329 = pneg %p328
      // Predicated region
      $region53: #{tpu_custom_call.1} parent=5 // pred_check
        _
      $region54: #{tpu_custom_call.1} parent=5 // pred_check_branch
        %331 = sbr.rel (%p328) target = $region56
      $region55: #{tpu_custom_call.1} parent=5 // pred_region
        %s332 = ssub.s32 %s22, 1
        %s333 = sand.u32 %s35, 1
        %s334 = scalar_lea.sflag [#allocation5], %s333
        %s335 = sand.u32 %s35, 1
        %s336 = smul.addr %s335, 16
        %s337 = scalar_lea.vmem [#allocation4], %s336
        // Predicated region
        $region57: #{tpu_custom_call.1} parent=55 // pred_check
          %p338 = pneg %p48
        $region58: #{tpu_custom_call.1} parent=55 // pred_check_branch
          %340 = sbr.rel (%p338) target = $region60
        $region59: #{tpu_custom_call.1} parent=55 // pred_region
          %341 = dma.done %s334, 256
        $region60: #{tpu_custom_call.1} parent=55 // pred_fallthru
          _
        // Predicated region
        $region61: #{tpu_custom_call.1} parent=55 // pred_check
          %p342 = pneg %p69
        $region62: #{tpu_custom_call.1} parent=55 // pred_check_branch
          %344 = sbr.rel (%p342) target = $region64
        $region63: #{tpu_custom_call.1} parent=55 // pred_region
          %345 = dma.done [#allocation8], 12288
        $region64: #{tpu_custom_call.1} parent=55 // pred_fallthru
          _
        // Predicated region
        $region65: #{tpu_custom_call.1} parent=55 // pred_check
          %p346 = pneg %p153
        $region66: #{tpu_custom_call.1} parent=55 // pred_check_branch
          %348 = sbr.rel (%p346) target = $region68
        $region67: #{tpu_custom_call.1} parent=55 // pred_region
          %349 = dma.done [#allocation8], 24576
        $region68: #{tpu_custom_call.1} parent=55 // pred_fallthru
          _
        %s350 = sand.u32 %s35, 1
        %s351 = scalar_lea.sflag [#allocation5], %s350
        %s352 = sand.u32 %s35, 1
        %s353 = smul.addr %s352, 16
        %s354 = scalar_lea.vmem [#allocation4], %s353
        %p355 = pneg %p48
        %p356 = pneg %p45
        %p357 = pneg %p69
        %p358 = pneg %p66
        %p359 = pneg %p90
        %p360 = pneg %p87
        %p361 = pneg %p111
        %p362 = pneg %p108
        %p363 = pneg %p132
        %p364 = pneg %p129
        %p365 = pneg %p153
        %p366 = pneg %p150
        %p367 = pneg %p174
        %p368 = pneg %p171
        %p369 = pneg %p195
        %p370 = pneg %p192
        %p371 = pneg %p216
        %p372 = pneg %p213
        %p373 = pneg %p242
        %p374 = pneg %p239
        %s375 = sand.u32 %s229, 1
        %s376 = scalar_lea.sflag [#allocation6], %s375
        %s377 = sand.u32 %s229, 1
        %s378 = smul.addr %s377, 32
        %s379 = scalar_lea.vmem [#allocation10], %s378
        %380 = vst [vmem:[#allocation2] sm:$0x1] 0.0
        %381 = vst [vmem:[#allocation2 + $0x11] sm:$0x1] 0.0
        %v382 = vld [vmem:[%s337] sm:$0xff]
        %v383 = vld [vmem:[%s337 + $0x8] sm:$0xff]
        %384 = vst [vmem:[#allocation2 + $0x1] sm:$0xff] %v382
        %385 = vst [vmem:[#allocation2 + $0x9] sm:$0xff] %v383
        %v386 = vld [vmem:[#allocation2] sm:$0xff]
        %v387 = vld [vmem:[#allocation2 + $0x8] sm:$0xff]
        %v388 = vld [vmem:[#allocation7] sm:$0xff]
        %v389 = vld [vmem:[#allocation7 + $0x8] sm:$0xff]
        %v390 = vld [vmem:[#allocation7 + $0x10] sm:$0xff]
        %v391 = vld [vmem:[#allocation7 + $0x18] sm:$0xff]
        %v392 = vld [vmem:[#allocation7 + $0x20] sm:$0xff]
        %v393 = vld [vmem:[#allocation7 + $0x28] sm:$0xff]
        %v394 = vld [vmem:[#allocation7 + $0x30] sm:$0xff]
        %v395 = vld [vmem:[#allocation7 + $0x38] sm:$0xff]
        %v396 = vld [vmem:[#allocation7 + $0x40] sm:$0xff]
        %v397 = vld [vmem:[#allocation7 + $0x48] sm:$0xff]
        %v398 = vld [vmem:[#allocation7 + $0x50] sm:$0xff]
        %v399 = vld [vmem:[#allocation7 + $0x58] sm:$0xff]
        %v400 = vld [vmem:[#allocation7 + $0x60] sm:$0xff]
        %v401 = vld [vmem:[#allocation7 + $0x68] sm:$0xff]
        %v402 = vld [vmem:[#allocation7 + $0x70] sm:$0xff]
        %v403 = vld [vmem:[#allocation7 + $0x78] sm:$0xff]
        %v404 = vld [vmem:[#allocation7 + $0x80] sm:$0xff]
        %v405 = vld [vmem:[#allocation7 + $0x88] sm:$0xff]
        %v406 = vld [vmem:[#allocation7 + $0x90] sm:$0xff]
        %v407 = vld [vmem:[#allocation7 + $0x98] sm:$0xff]
        %v408 = vld [vmem:[#allocation7 + $0xa0] sm:$0xff]
        %v409 = vld [vmem:[#allocation7 + $0xa8] sm:$0xff]
        %v410 = vld [vmem:[#allocation7 + $0xb0] sm:$0xff]
        %v411 = vld [vmem:[#allocation7 + $0xb8] sm:$0xff]
        %v412 = vld [vmem:[#allocation7 + $0xc0] sm:$0xff]
        %v413 = vld [vmem:[#allocation7 + $0xc8] sm:$0xff]
        %v414 = vld [vmem:[#allocation7 + $0xd0] sm:$0xff]
        %v415 = vld [vmem:[#allocation7 + $0xd8] sm:$0xff]
        %v416 = vld [vmem:[#allocation7 + $0xe0] sm:$0xff]
        %v417 = vld [vmem:[#allocation7 + $0xe8] sm:$0xff]
        %v418 = vld [vmem:[#allocation7 + $0xf0] sm:$0xff]
        %v419 = vld [vmem:[#allocation7 + $0xf8] sm:$0xff]
        %v420 = vld [vmem:[#allocation2 + $0x1] sm:$0xff]
        %v421 = vld [vmem:[#allocation2 + $0x9] sm:$0xff]
        %s422 = scalar_lea.vmem [#allocation7], 256
        %v423 = vld [vmem:[%s422] sm:$0xff]
        %v424 = vld [vmem:[%s422 + $0x8] sm:$0xff]
        %v425 = vld [vmem:[%s422 + $0x10] sm:$0xff]
        %v426 = vld [vmem:[%s422 + $0x18] sm:$0xff]
        %v427 = vld [vmem:[%s422 + $0x20] sm:$0xff]
        %v428 = vld [vmem:[%s422 + $0x28] sm:$0xff]
        %v429 = vld [vmem:[%s422 + $0x30] sm:$0xff]
        %v430 = vld [vmem:[%s422 + $0x38] sm:$0xff]
        %v431 = vld [vmem:[%s422 + $0x40] sm:$0xff]
        %v432 = vld [vmem:[%s422 + $0x48] sm:$0xff]
        %v433 = vld [vmem:[%s422 + $0x50] sm:$0xff]
        %v434 = vld [vmem:[%s422 + $0x58] sm:$0xff]
        %v435 = vld [vmem:[%s422 + $0x60] sm:$0xff]
        %v436 = vld [vmem:[%s422 + $0x68] sm:$0xff]
        %v437 = vld [vmem:[%s422 + $0x70] sm:$0xff]
        %v438 = vld [vmem:[%s422 + $0x78] sm:$0xff]
        %v439 = vld [vmem:[%s422 + $0x80] sm:$0xff]
        %v440 = vld [vmem:[%s422 + $0x88] sm:$0xff]
        %v441 = vld [vmem:[%s422 + $0x90] sm:$0xff]
        %v442 = vld [vmem:[%s422 + $0x98] sm:$0xff]
        %v443 = vld [vmem:[%s422 + $0xa0] sm:$0xff]
        %v444 = vld [vmem:[%s422 + $0xa8] sm:$0xff]
        %v445 = vld [vmem:[%s422 + $0xb0] sm:$0xff]
        %v446 = vld [vmem:[%s422 + $0xb8] sm:$0xff]
        %v447 = vld [vmem:[%s422 + $0xc0] sm:$0xff]
        %v448 = vld [vmem:[%s422 + $0xc8] sm:$0xff]
        %v449 = vld [vmem:[%s422 + $0xd0] sm:$0xff]
        %v450 = vld [vmem:[%s422 + $0xd8] sm:$0xff]
        %v451 = vld [vmem:[%s422 + $0xe0] sm:$0xff]
        %v452 = vld [vmem:[%s422 + $0xe8] sm:$0xff]
        %v453 = vld [vmem:[%s422 + $0xf0] sm:$0xff]
        %v454 = vld [vmem:[%s422 + $0xf8] sm:$0xff]
        %455 = vmatprep.subr.mxu0 %v454
        %456 = vmatpush1.msra.mxu0 %v453
        %457 = vmatprep.subr.mxu0 %v452
        %458 = vmatpush1.msra.mxu0 %v451
        %459 = vmatprep.subr.mxu0 %v450
        %460 = vmatpush1.msra.mxu0 %v449
        %461 = vmatprep.subr.mxu0 %v448
        %462 = vmatpush1.msra.mxu0 %v447
        %463 = vmatprep.subr.mxu0 %v446
        %464 = vmatpush1.msra.mxu0 %v445
        %465 = vmatprep.subr.mxu0 %v444
        %466 = vmatpush1.msra.mxu0 %v443
        %467 = vmatprep.subr.mxu0 %v442
        %468 = vmatpush1.msra.mxu0 %v441
        %469 = vmatprep.subr.mxu0 %v440
        %470 = vmatpush1.msra.mxu0 %v439
        %471 = vmatprep.subr.mxu0 %v438
        %472 = vmatpush1.msra.mxu0 %v437
        %473 = vmatprep.subr.mxu0 %v436
        %474 = vmatpush1.msra.mxu0 %v435
        %475 = vmatprep.subr.mxu0 %v434
        %476 = vmatpush1.msra.mxu0 %v433
        %477 = vmatprep.subr.mxu0 %v432
        %478 = vmatpush1.msra.mxu0 %v431
        %479 = vmatprep.subr.mxu0 %v430
        %480 = vmatpush1.msra.mxu0 %v429
        %481 = vmatprep.subr.mxu0 %v428
        %482 = vmatpush1.msra.mxu0 %v427
        %483 = vmatprep.subr.mxu0 %v426
        %484 = vmatpush1.msra.mxu0 %v425
        %485 = vmatprep.subr.mxu0 %v424
        %486 = vmatpush1.msra.mxu0 %v423
        %487 = vmatprep.subr.mxu0 0.0
        %488 = vmatpush2.msra.mxu0 0.0
        %489 = vmatprep.subr.mxu0 0.0
        %490 = vmatpush2.msra.mxu0 0.0
        %491 = vmatprep.subr.mxu0 0.0
        %492 = vmatpush2.msra.mxu0 0.0
        %493 = vmatprep.subr.mxu0 0.0
        %494 = vmatpush2.msra.mxu0 0.0
        %495 = vmatprep.subr.mxu0 0.0
        %496 = vmatpush2.msra.mxu0 0.0
        %497 = vmatprep.subr.mxu0 0.0
        %498 = vmatpush2.msra.mxu0 0.0
        %499 = vmatprep.subr.mxu0 0.0
        %500 = vmatpush2.msra.mxu0 0.0
        %501 = vmatprep.subr.mxu0 0.0
        %502 = vmatpush2.msra.mxu0 0.0
        %503 = vmatprep.subr.mxu0 0.0
        %504 = vmatpush2.msra.mxu0 0.0
        %505 = vmatprep.subr.mxu0 0.0
        %506 = vmatpush2.msra.mxu0 0.0
        %507 = vmatprep.subr.mxu0 0.0
        %508 = vmatpush2.msra.mxu0 0.0
        %509 = vmatprep.subr.mxu0 0.0
        %510 = vmatpush2.msra.mxu0 0.0
        %511 = vmatprep.subr.mxu0 0.0
        %512 = vmatpush2.msra.mxu0 0.0
        %513 = vmatprep.subr.mxu0 0.0
        %514 = vmatpush2.msra.mxu0 0.0
        %515 = vmatprep.subr.mxu0 0.0
        %516 = vmatpush2.msra.mxu0 0.0
        %517 = vmatprep.subr.mxu0 0.0
        %518 = vmatpush2.msra.mxu0 0.0
        %519 = vmatprep.mubr.f32.mxu0 0.0
        %520 = vmatmul.mubr.f32.gmra.mxu0 %v420
        %v521 = vpop.f32.mrf.mxu0
        %v522 = vadd.f32 0.0, %v521
        %v523 = vpop.f32.mrf.mxu0
        %v524 = vadd.f32 0.0, %v523
        %525 = vmatprep.mubr.f32.mxu0 0.0
        %526 = vmatmul.mubr.f32.gmra.mxu0 %v421
        %v527 = vpop.f32.mrf.mxu0
        %v528 = vadd.f32 0.0, %v527
        %v529 = vpop.f32.mrf.mxu0
        %v530 = vadd.f32 0.0, %v529
        %531 = vdwg.mxu0
        %532 = vmatprep.subr.mxu0 %v419
        %533 = vmatpush1.msra.mxu0 %v418
        %534 = vmatprep.subr.mxu0 %v417
        %535 = vmatpush1.msra.mxu0 %v416
        %536 = vmatprep.subr.mxu0 %v415
        %537 = vmatpush1.msra.mxu0 %v414
        %538 = vmatprep.subr.mxu0 %v413
        %539 = vmatpush1.msra.mxu0 %v412
        %540 = vmatprep.subr.mxu0 %v411
        %541 = vmatpush1.msra.mxu0 %v410
        %542 = vmatprep.subr.mxu0 %v409
        %543 = vmatpush1.msra.mxu0 %v408
        %544 = vmatprep.subr.mxu0 %v407
        %545 = vmatpush1.msra.mxu0 %v406
        %546 = vmatprep.subr.mxu0 %v405
        %547 = vmatpush1.msra.mxu0 %v404
        %548 = vmatprep.subr.mxu0 %v403
        %549 = vmatpush1.msra.mxu0 %v402
        %550 = vmatprep.subr.mxu0 %v401
        %551 = vmatpush1.msra.mxu0 %v400
        %552 = vmatprep.subr.mxu0 %v399
        %553 = vmatpush1.msra.mxu0 %v398
        %554 = vmatprep.subr.mxu0 %v397
        %555 = vmatpush1.msra.mxu0 %v396
        %556 = vmatprep.subr.mxu0 %v395
        %557 = vmatpush1.msra.mxu0 %v394
        %558 = vmatprep.subr.mxu0 %v393
        %559 = vmatpush1.msra.mxu0 %v392
        %560 = vmatprep.subr.mxu0 %v391
        %561 = vmatpush1.msra.mxu0 %v390
        %562 = vmatprep.subr.mxu0 %v389
        %563 = vmatpush1.msra.mxu0 %v388
        %564 = vmatprep.subr.mxu0 0.0
        %565 = vmatpush2.msra.mxu0 0.0
        %566 = vmatprep.subr.mxu0 0.0
        %567 = vmatpush2.msra.mxu0 0.0
        %568 = vmatprep.subr.mxu0 0.0
        %569 = vmatpush2.msra.mxu0 0.0
        %570 = vmatprep.subr.mxu0 0.0
        %571 = vmatpush2.msra.mxu0 0.0
        %572 = vmatprep.subr.mxu0 0.0
        %573 = vmatpush2.msra.mxu0 0.0
        %574 = vmatprep.subr.mxu0 0.0
        %575 = vmatpush2.msra.mxu0 0.0
        %576 = vmatprep.subr.mxu0 0.0
        %577 = vmatpush2.msra.mxu0 0.0
        %578 = vmatprep.subr.mxu0 0.0
        %579 = vmatpush2.msra.mxu0 0.0
        %580 = vmatprep.subr.mxu0 0.0
        %581 = vmatpush2.msra.mxu0 0.0
        %582 = vmatprep.subr.mxu0 0.0
        %583 = vmatpush2.msra.mxu0 0.0
        %584 = vmatprep.subr.mxu0 0.0
        %585 = vmatpush2.msra.mxu0 0.0
        %586 = vmatprep.subr.mxu0 0.0
        %587 = vmatpush2.msra.mxu0 0.0
        %588 = vmatprep.subr.mxu0 0.0
        %589 = vmatpush2.msra.mxu0 0.0
        %590 = vmatprep.subr.mxu0 0.0
        %591 = vmatpush2.msra.mxu0 0.0
        %592 = vmatprep.subr.mxu0 0.0
        %593 = vmatpush2.msra.mxu0 0.0
        %594 = vmatprep.subr.mxu0 0.0
        %595 = vmatpush2.msra.mxu0 0.0
        %596 = vmatprep.mubr.f32.mxu0 0.0
        %597 = vmatmul.mubr.f32.gmra.mxu0 %v386
        %v598 = vpop.f32.mrf.mxu0
        %v599 = vadd.f32 %v522, %v598
        %v600 = vpop.f32.mrf.mxu0
        %v601 = vadd.f32 %v524, %v600
        %602 = vmatprep.mubr.f32.mxu0 0.0
        %603 = vmatmul.mubr.f32.gmra.mxu0 %v387
        %v604 = vpop.f32.mrf.mxu0
        %v605 = vadd.f32 %v528, %v604
        %v606 = vpop.f32.mrf.mxu0
        %v607 = vadd.f32 %v530, %v606
        %608 = vdwg.mxu0
        %v609 = vld [vmem:[#allocation2 + $0x2] sm:$0xff]
        %v610 = vld [vmem:[#allocation2 + $0xa] sm:$0xff]
        %s611 = scalar_lea.vmem [#allocation7], 512
        %v612 = vld [vmem:[%s611] sm:$0xff]
        %v613 = vld [vmem:[%s611 + $0x8] sm:$0xff]
        %v614 = vld [vmem:[%s611 + $0x10] sm:$0xff]
        %v615 = vld [vmem:[%s611 + $0x18] sm:$0xff]
        %v616 = vld [vmem:[%s611 + $0x20] sm:$0xff]
        %v617 = vld [vmem:[%s611 + $0x28] sm:$0xff]
        %v618 = vld [vmem:[%s611 + $0x30] sm:$0xff]
        %v619 = vld [vmem:[%s611 + $0x38] sm:$0xff]
        %v620 = vld [vmem:[%s611 + $0x40] sm:$0xff]
        %v621 = vld [vmem:[%s611 + $0x48] sm:$0xff]
        %v622 = vld [vmem:[%s611 + $0x50] sm:$0xff]
        %v623 = vld [vmem:[%s611 + $0x58] sm:$0xff]
        %v624 = vld [vmem:[%s611 + $0x60] sm:$0xff]
        %v625 = vld [vmem:[%s611 + $0x68] sm:$0xff]
        %v626 = vld [vmem:[%s611 + $0x70] sm:$0xff]
        %v627 = vld [vmem:[%s611 + $0x78] sm:$0xff]
        %v628 = vld [vmem:[%s611 + $0x80] sm:$0xff]
        %v629 = vld [vmem:[%s611 + $0x88] sm:$0xff]
        %v630 = vld [vmem:[%s611 + $0x90] sm:$0xff]
        %v631 = vld [vmem:[%s611 + $0x98] sm:$0xff]
        %v632 = vld [vmem:[%s611 + $0xa0] sm:$0xff]
        %v633 = vld [vmem:[%s611 + $0xa8] sm:$0xff]
        %v634 = vld [vmem:[%s611 + $0xb0] sm:$0xff]
        %v635 = vld [vmem:[%s611 + $0xb8] sm:$0xff]
        %v636 = vld [vmem:[%s611 + $0xc0] sm:$0xff]
        %v637 = vld [vmem:[%s611 + $0xc8] sm:$0xff]
        %v638 = vld [vmem:[%s611 + $0xd0] sm:$0xff]
        %v639 = vld [vmem:[%s611 + $0xd8] sm:$0xff]
        %v640 = vld [vmem:[%s611 + $0xe0] sm:$0xff]
        %v641 = vld [vmem:[%s611 + $0xe8] sm:$0xff]
        %v642 = vld [vmem:[%s611 + $0xf0] sm:$0xff]
        %v643 = vld [vmem:[%s611 + $0xf8] sm:$0xff]
        %644 = vmatprep.subr.mxu0 %v643
        %645 = vmatpush1.msra.mxu0 %v642
        %646 = vmatprep.subr.mxu0 %v641
        %647 = vmatpush1.msra.mxu0 %v640
        %648 = vmatprep.subr.mxu0 %v639
        %649 = vmatpush1.msra.mxu0 %v638
        %650 = vmatprep.subr.mxu0 %v637
        %651 = vmatpush1.msra.mxu0 %v636
        %652 = vmatprep.subr.mxu0 %v635
        %653 = vmatpush1.msra.mxu0 %v634
        %654 = vmatprep.subr.mxu0 %v633
        %655 = vmatpush1.msra.mxu0 %v632
        %656 = vmatprep.subr.mxu0 %v631
        %657 = vmatpush1.msra.mxu0 %v630
        %658 = vmatprep.subr.mxu0 %v629
        %659 = vmatpush1.msra.mxu0 %v628
        %660 = vmatprep.subr.mxu0 %v627
        %661 = vmatpush1.msra.mxu0 %v626
        %662 = vmatprep.subr.mxu0 %v625
        %663 = vmatpush1.msra.mxu0 %v624
        %664 = vmatprep.subr.mxu0 %v623
        %665 = vmatpush1.msra.mxu0 %v622
        %666 = vmatprep.subr.mxu0 %v621
        %667 = vmatpush1.msra.mxu0 %v620
        %668 = vmatprep.subr.mxu0 %v619
        %669 = vmatpush1.msra.mxu0 %v618
        %670 = vmatprep.subr.mxu0 %v617
        %671 = vmatpush1.msra.mxu0 %v616
        %672 = vmatprep.subr.mxu0 %v615
        %673 = vmatpush1.msra.mxu0 %v614
        %674 = vmatprep.subr.mxu0 %v613
        %675 = vmatpush1.msra.mxu0 %v612
        %676 = vmatprep.subr.mxu0 0.0
        %677 = vmatpush2.msra.mxu0 0.0
        %678 = vmatprep.subr.mxu0 0.0
        %679 = vmatpush2.msra.mxu0 0.0
        %680 = vmatprep.subr.mxu0 0.0
        %681 = vmatpush2.msra.mxu0 0.0
        %682 = vmatprep.subr.mxu0 0.0
        %683 = vmatpush2.msra.mxu0 0.0
        %684 = vmatprep.subr.mxu0 0.0
        %685 = vmatpush2.msra.mxu0 0.0
        %686 = vmatprep.subr.mxu0 0.0
        %687 = vmatpush2.msra.mxu0 0.0
        %688 = vmatprep.subr.mxu0 0.0
        %689 = vmatpush2.msra.mxu0 0.0
        %690 = vmatprep.subr.mxu0 0.0
        %691 = vmatpush2.msra.mxu0 0.0
        %692 = vmatprep.subr.mxu0 0.0
        %693 = vmatpush2.msra.mxu0 0.0
        %694 = vmatprep.subr.mxu0 0.0
        %695 = vmatpush2.msra.mxu0 0.0
        %696 = vmatprep.subr.mxu0 0.0
        %697 = vmatpush2.msra.mxu0 0.0
        %698 = vmatprep.subr.mxu0 0.0
        %699 = vmatpush2.msra.mxu0 0.0
        %700 = vmatprep.subr.mxu0 0.0
        %701 = vmatpush2.msra.mxu0 0.0
        %702 = vmatprep.subr.mxu0 0.0
        %703 = vmatpush2.msra.mxu0 0.0
        %704 = vmatprep.subr.mxu0 0.0
        %705 = vmatpush2.msra.mxu0 0.0
        %706 = vmatprep.subr.mxu0 0.0
        %707 = vmatpush2.msra.mxu0 0.0
        %708 = vmatprep.mubr.f32.mxu0 0.0
        %709 = vmatmul.mubr.f32.gmra.mxu0 %v609
        %v710 = vpop.f32.mrf.mxu0
        %v711 = vadd.f32 0.0, %v710
        %v712 = vpop.f32.mrf.mxu0
        %v713 = vadd.f32 0.0, %v712
        %714 = vmatprep.mubr.f32.mxu0 0.0
        %715 = vmatmul.mubr.f32.gmra.mxu0 %v610
        %v716 = vpop.f32.mrf.mxu0
        %v717 = vadd.f32 0.0, %v716
        %v718 = vpop.f32.mrf.mxu0
        %v719 = vadd.f32 0.0, %v718
        %720 = vdwg.mxu0
        %v721 = vadd.f32 %v599, %v711
        %v722 = vadd.f32 %v601, %v713
        %v723 = vadd.f32 %v605, %v717
        %v724 = vadd.f32 %v607, %v719
        %v725 = vld [vmem:[%s4] sm:$0x3]
        %v726 = vld [vmem:[%s2] sm:$0x3]
        %v727 = vld [vmem:[%s3] sm:$0x3]
        %v728 = vadd.f32 %v721, %v723
        %v729 = vrot.slane %v728, 4
        %v730 = vadd.f32 %v728, %v729
        %v731 = vrot.slane %v730, 2
        %v732 = vadd.f32 %v730, %v731
        %v733 = vrot.slane %v732, 1
        %v734 = vadd.f32 %v732, %v733
        %v735 = vadd.f32 %v722, %v724
        %v736 = vrot.slane %v735, 4
        %v737 = vadd.f32 %v735, %v736
        %v738 = vrot.slane %v737, 2
        %v739 = vadd.f32 %v737, %v738
        %v740 = vrot.slane %v739, 1
        %v741 = vadd.f32 %v739, %v740
        %v742 = vmul.f32 %v721, %v721
        %v743 = vmul.f32 %v722, %v722
        %v744 = vmul.f32 %v723, %v723
        %v745 = vmul.f32 %v724, %v724
        %v746 = vadd.f32 %v742, %v744
        %v747 = vrot.slane %v746, 4
        %v748 = vadd.f32 %v746, %v747
        %v749 = vrot.slane %v748, 2
        %v750 = vadd.f32 %v748, %v749
        %v751 = vrot.slane %v750, 1
        %v752 = vadd.f32 %v750, %v751
        %v753 = vadd.f32 %v743, %v745
        %v754 = vrot.slane %v753, 4
        %v755 = vadd.f32 %v753, %v754
        %v756 = vrot.slane %v755, 2
        %v757 = vadd.f32 %v755, %v756
        %v758 = vrot.slane %v757, 1
        %v759 = vadd.f32 %v757, %v758
        %vm760 = vcmp.eq.s32.totalorder %v725, 0
        %v763 = vcombine.low %v734, %v741
        %v765 = vunpack.c.l.s4 1966171168
        %v766 = vunpack.c.0.s8 %v765
        %v767 = vlaneseq
        %v768 = vshrl.u32 %v767, 7
        %v769 = vsub.s32 %v766, %v768
        %v770 = vrot.slane %v763, %v769
        %v772 = vunpack.c.l.s4 1966171168
        %v773 = vunpack.c.0.s8 %v772
        %v774 = vlaneseq
        %v775 = vshrl.u32 %v774, 7
        %v776 = vsub.s32 %v773, %v775
        %v777 = vrot.slane %v770, %v776
        %v779 = vsel %vm760, %v777, 0.0
        %v781 = vlaneseq
        %v782 = vshrl.u32 %v781, 7
        %v783 = vsub.s32 0, %v782
        %v784 = vrot.slane %v779, %v783
        %v785 = vlaneseq
        %v786 = vshrl.u32 %v785, 7
        %v787 = vsub.s32 1, %v786
        %v788 = vrot.slane %v779, %v787
        %vm791 = vcmask 1040384
        %v792 = vsel %vm791, %v784, 0.0
        %v793 = vsel %vm791, %v788, 0.0
        %v794 = vadd.f32 %v792, %v793
        %795 = vadd.xlane.f32.xlu0 %v794
        %v796 = vpop.xlane.xlu0 %795
        %v797 = vmul.f32 %v796, 0.001953125
        %v800 = vcombine.low %v752, %v759
        %v802 = vunpack.c.l.s4 1966171168
        %v803 = vunpack.c.0.s8 %v802
        %v804 = vlaneseq
        %v805 = vshrl.u32 %v804, 7
        %v806 = vsub.s32 %v803, %v805
        %v807 = vrot.slane %v800, %v806
        %v809 = vunpack.c.l.s4 1966171168
        %v810 = vunpack.c.0.s8 %v809
        %v811 = vlaneseq
        %v812 = vshrl.u32 %v811, 7
        %v813 = vsub.s32 %v810, %v812
        %v814 = vrot.slane %v807, %v813
        %v816 = vsel %vm760, %v814, 0.0
        %v818 = vlaneseq
        %v819 = vshrl.u32 %v818, 7
        %v820 = vsub.s32 0, %v819
        %v821 = vrot.slane %v816, %v820
        %v822 = vlaneseq
        %v823 = vshrl.u32 %v822, 7
        %v824 = vsub.s32 1, %v823
        %v825 = vrot.slane %v816, %v824
        %v828 = vsel %vm791, %v821, 0.0
        %v829 = vsel %vm791, %v825, 0.0
        %v830 = vadd.f32 %v828, %v829
        %831 = vadd.xlane.f32.xlu0 %v830
        %v832 = vpop.xlane.xlu0 %831
        %v833 = vmul.f32 %v832, 0.001953125
        %v834 = vmul.f32 %v797, %v797
        %v835 = vsub.f32 %v833, %v834
        %v836 = vadd.f32 %v835, 1e-05
        %v837 = vrsqrt.pop %v836
        %v839 = vlaneseq
        %v840 = vshrl.u32 %v839, 7
        %v841 = vsub.s32 0, %v840
        %v842 = vrot.slane %v797, %v841
        %v844 = vsel %vm760, %v842, 0.0
        %v846 = vlaneseq
        %v847 = vshrl.u32 %v846, 7
        %v848 = vsub.s32 0, %v847
        %v849 = vrot.slane %v837, %v848
        %v851 = vsel %vm760, %v849, 0.0
        %vm852 = vcmp.eq.s32.totalorder %v725, 1
        %v853 = vsel %vm852, %v777, 0.0
        %v855 = vlaneseq
        %v856 = vshrl.u32 %v855, 7
        %v857 = vsub.s32 0, %v856
        %v858 = vrot.slane %v853, %v857
        %v859 = vlaneseq
        %v860 = vshrl.u32 %v859, 7
        %v861 = vsub.s32 1, %v860
        %v862 = vrot.slane %v853, %v861
        %v865 = vsel %vm791, %v858, 0.0
        %v866 = vsel %vm791, %v862, 0.0
        %v867 = vadd.f32 %v865, %v866
        %868 = vadd.xlane.f32.xlu0 %v867
        %v869 = vpop.xlane.xlu0 %868
        %v870 = vmul.f32 %v869, 0.001953125
        %v871 = vsel %vm852, %v814, 0.0
        %v873 = vlaneseq
        %v874 = vshrl.u32 %v873, 7
        %v875 = vsub.s32 0, %v874
        %v876 = vrot.slane %v871, %v875
        %v877 = vlaneseq
        %v878 = vshrl.u32 %v877, 7
        %v879 = vsub.s32 1, %v878
        %v880 = vrot.slane %v871, %v879
        %v883 = vsel %vm791, %v876, 0.0
        %v884 = vsel %vm791, %v880, 0.0
        %v885 = vadd.f32 %v883, %v884
        %886 = vadd.xlane.f32.xlu0 %v885
        %v887 = vpop.xlane.xlu0 %886
        %v888 = vmul.f32 %v887, 0.001953125
        %v889 = vmul.f32 %v870, %v870
        %v890 = vsub.f32 %v888, %v889
        %v891 = vadd.f32 %v890, 1e-05
        %v892 = vrsqrt.pop %v891
        %v894 = vlaneseq
        %v895 = vshrl.u32 %v894, 7
        %v896 = vsub.s32 0, %v895
        %v897 = vrot.slane %v870, %v896
        %v899 = vsel %vm852, %v897, %v844
        %v901 = vlaneseq
        %v902 = vshrl.u32 %v901, 7
        %v903 = vsub.s32 0, %v902
        %v904 = vrot.slane %v892, %v903
        %v906 = vsel %vm852, %v904, %v851
        %vm907 = vcmp.eq.s32.totalorder %v725, 2
        %v908 = vsel %vm907, %v777, 0.0
        %v910 = vlaneseq
        %v911 = vshrl.u32 %v910, 7
        %v912 = vsub.s32 0, %v911
        %v913 = vrot.slane %v908, %v912
        %v914 = vlaneseq
        %v915 = vshrl.u32 %v914, 7
        %v916 = vsub.s32 1, %v915
        %v917 = vrot.slane %v908, %v916
        %v920 = vsel %vm791, %v913, 0.0
        %v921 = vsel %vm791, %v917, 0.0
        %v922 = vadd.f32 %v920, %v921
        %923 = vadd.xlane.f32.xlu0 %v922
        %v924 = vpop.xlane.xlu0 %923
        %v925 = vmul.f32 %v924, 0.001953125
        %v926 = vsel %vm907, %v814, 0.0
        %v928 = vlaneseq
        %v929 = vshrl.u32 %v928, 7
        %v930 = vsub.s32 0, %v929
        %v931 = vrot.slane %v926, %v930
        %v932 = vlaneseq
        %v933 = vshrl.u32 %v932, 7
        %v934 = vsub.s32 1, %v933
        %v935 = vrot.slane %v926, %v934
        %v938 = vsel %vm791, %v931, 0.0
        %v939 = vsel %vm791, %v935, 0.0
        %v940 = vadd.f32 %v938, %v939
        %941 = vadd.xlane.f32.xlu0 %v940
        %v942 = vpop.xlane.xlu0 %941
        %v943 = vmul.f32 %v942, 0.001953125
        %v944 = vmul.f32 %v925, %v925
        %v945 = vsub.f32 %v943, %v944
        %v946 = vadd.f32 %v945, 1e-05
        %v947 = vrsqrt.pop %v946
        %v949 = vlaneseq
        %v950 = vshrl.u32 %v949, 7
        %v951 = vsub.s32 0, %v950
        %v952 = vrot.slane %v925, %v951
        %v954 = vsel %vm907, %v952, %v899
        %v956 = vlaneseq
        %v957 = vshrl.u32 %v956, 7
        %v958 = vsub.s32 0, %v957
        %v959 = vrot.slane %v947, %v958
        %v961 = vsel %vm907, %v959, %v906
        %vm962 = vcmp.eq.s32.totalorder %v725, 3
        %v963 = vsel %vm962, %v777, 0.0
        %v965 = vlaneseq
        %v966 = vshrl.u32 %v965, 7
        %v967 = vsub.s32 0, %v966
        %v968 = vrot.slane %v963, %v967
        %v969 = vlaneseq
        %v970 = vshrl.u32 %v969, 7
        %v971 = vsub.s32 1, %v970
        %v972 = vrot.slane %v963, %v971
        %v975 = vsel %vm791, %v968, 0.0
        %v976 = vsel %vm791, %v972, 0.0
        %v977 = vadd.f32 %v975, %v976
        %978 = vadd.xlane.f32.xlu0 %v977
        %v979 = vpop.xlane.xlu0 %978
        %v980 = vmul.f32 %v979, 0.001953125
        %v981 = vsel %vm962, %v814, 0.0
        %v983 = vlaneseq
        %v984 = vshrl.u32 %v983, 7
        %v985 = vsub.s32 0, %v984
        %v986 = vrot.slane %v981, %v985
        %v987 = vlaneseq
        %v988 = vshrl.u32 %v987, 7
        %v989 = vsub.s32 1, %v988
        %v990 = vrot.slane %v981, %v989
        %v993 = vsel %vm791, %v986, 0.0
        %v994 = vsel %vm791, %v990, 0.0
        %v995 = vadd.f32 %v993, %v994
        %996 = vadd.xlane.f32.xlu0 %v995
        %v997 = vpop.xlane.xlu0 %996
        %v998 = vmul.f32 %v997, 0.001953125
        %v999 = vmul.f32 %v980, %v980
        %v1000 = vsub.f32 %v998, %v999
        %v1001 = vadd.f32 %v1000, 1e-05
        %v1002 = vrsqrt.pop %v1001
        %v1004 = vlaneseq
        %v1005 = vshrl.u32 %v1004, 7
        %v1006 = vsub.s32 0, %v1005
        %v1007 = vrot.slane %v980, %v1006
        %v1009 = vsel %vm962, %v1007, %v954
        %v1011 = vlaneseq
        %v1012 = vshrl.u32 %v1011, 7
        %v1013 = vsub.s32 0, %v1012
        %v1014 = vrot.slane %v1002, %v1013
        %v1016 = vsel %vm962, %v1014, %v961
        %vm1017 = vcmp.eq.s32.totalorder %v725, 4
        %v1018 = vsel %vm1017, %v777, 0.0
        %v1020 = vlaneseq
        %v1021 = vshrl.u32 %v1020, 7
        %v1022 = vsub.s32 0, %v1021
        %v1023 = vrot.slane %v1018, %v1022
        %v1024 = vlaneseq
        %v1025 = vshrl.u32 %v1024, 7
        %v1026 = vsub.s32 1, %v1025
        %v1027 = vrot.slane %v1018, %v1026
        %v1030 = vsel %vm791, %v1023, 0.0
        %v1031 = vsel %vm791, %v1027, 0.0
        %v1032 = vadd.f32 %v1030, %v1031
        %1033 = vadd.xlane.f32.xlu0 %v1032
        %v1034 = vpop.xlane.xlu0 %1033
        %v1035 = vmul.f32 %v1034, 0.001953125
        %v1036 = vsel %vm1017, %v814, 0.0
        %v1038 = vlaneseq
        %v1039 = vshrl.u32 %v1038, 7
        %v1040 = vsub.s32 0, %v1039
        %v1041 = vrot.slane %v1036, %v1040
        %v1042 = vlaneseq
        %v1043 = vshrl.u32 %v1042, 7
        %v1044 = vsub.s32 1, %v1043
        %v1045 = vrot.slane %v1036, %v1044
        %v1048 = vsel %vm791, %v1041, 0.0
        %v1049 = vsel %vm791, %v1045, 0.0
        %v1050 = vadd.f32 %v1048, %v1049
        %1051 = vadd.xlane.f32.xlu0 %v1050
        %v1052 = vpop.xlane.xlu0 %1051
        %v1053 = vmul.f32 %v1052, 0.001953125
        %v1054 = vmul.f32 %v1035, %v1035
        %v1055 = vsub.f32 %v1053, %v1054
        %v1056 = vadd.f32 %v1055, 1e-05
        %v1057 = vrsqrt.pop %v1056
        %v1059 = vlaneseq
        %v1060 = vshrl.u32 %v1059, 7
        %v1061 = vsub.s32 0, %v1060
        %v1062 = vrot.slane %v1035, %v1061
        %v1064 = vsel %vm1017, %v1062, %v1009
        %v1066 = vlaneseq
        %v1067 = vshrl.u32 %v1066, 7
        %v1068 = vsub.s32 0, %v1067
        %v1069 = vrot.slane %v1057, %v1068
        %v1071 = vsel %vm1017, %v1069, %v1016
        %vm1072 = vcmp.eq.s32.totalorder %v725, 5
        %v1073 = vsel %vm1072, %v777, 0.0
        %v1075 = vlaneseq
        %v1076 = vshrl.u32 %v1075, 7
        %v1077 = vsub.s32 0, %v1076
        %v1078 = vrot.slane %v1073, %v1077
        %v1079 = vlaneseq
        %v1080 = vshrl.u32 %v1079, 7
        %v1081 = vsub.s32 1, %v1080
        %v1082 = vrot.slane %v1073, %v1081
        %v1085 = vsel %vm791, %v1078, 0.0
        %v1086 = vsel %vm791, %v1082, 0.0
        %v1087 = vadd.f32 %v1085, %v1086
        %1088 = vadd.xlane.f32.xlu0 %v1087
        %v1089 = vpop.xlane.xlu0 %1088
        %v1090 = vmul.f32 %v1089, 0.001953125
        %v1091 = vsel %vm1072, %v814, 0.0
        %v1093 = vlaneseq
        %v1094 = vshrl.u32 %v1093, 7
        %v1095 = vsub.s32 0, %v1094
        %v1096 = vrot.slane %v1091, %v1095
        %v1097 = vlaneseq
        %v1098 = vshrl.u32 %v1097, 7
        %v1099 = vsub.s32 1, %v1098
        %v1100 = vrot.slane %v1091, %v1099
        %v1103 = vsel %vm791, %v1096, 0.0
        %v1104 = vsel %vm791, %v1100, 0.0
        %v1105 = vadd.f32 %v1103, %v1104
        %1106 = vadd.xlane.f32.xlu0 %v1105
        %v1107 = vpop.xlane.xlu0 %1106
        %v1108 = vmul.f32 %v1107, 0.001953125
        %v1109 = vmul.f32 %v1090, %v1090
        %v1110 = vsub.f32 %v1108, %v1109
        %v1111 = vadd.f32 %v1110, 1e-05
        %v1112 = vrsqrt.pop %v1111
        %v1114 = vlaneseq
        %v1115 = vshrl.u32 %v1114, 7
        %v1116 = vsub.s32 0, %v1115
        %v1117 = vrot.slane %v1090, %v1116
        %v1119 = vsel %vm1072, %v1117, %v1064
        %v1121 = vlaneseq
        %v1122 = vshrl.u32 %v1121, 7
        %v1123 = vsub.s32 0, %v1122
        %v1124 = vrot.slane %v1112, %v1123
        %v1126 = vsel %vm1072, %v1124, %v1071
        %vm1127 = vcmp.eq.s32.totalorder %v725, 6
        %v1128 = vsel %vm1127, %v777, 0.0
        %v1130 = vlaneseq
        %v1131 = vshrl.u32 %v1130, 7
        %v1132 = vsub.s32 0, %v1131
        %v1133 = vrot.slane %v1128, %v1132
        %v1134 = vlaneseq
        %v1135 = vshrl.u32 %v1134, 7
        %v1136 = vsub.s32 1, %v1135
        %v1137 = vrot.slane %v1128, %v1136
        %v1140 = vsel %vm791, %v1133, 0.0
        %v1141 = vsel %vm791, %v1137, 0.0
        %v1142 = vadd.f32 %v1140, %v1141
        %1143 = vadd.xlane.f32.xlu0 %v1142
        %v1144 = vpop.xlane.xlu0 %1143
        %v1145 = vmul.f32 %v1144, 0.001953125
        %v1146 = vsel %vm1127, %v814, 0.0
        %v1148 = vlaneseq
        %v1149 = vshrl.u32 %v1148, 7
        %v1150 = vsub.s32 0, %v1149
        %v1151 = vrot.slane %v1146, %v1150
        %v1152 = vlaneseq
        %v1153 = vshrl.u32 %v1152, 7
        %v1154 = vsub.s32 1, %v1153
        %v1155 = vrot.slane %v1146, %v1154
        %v1158 = vsel %vm791, %v1151, 0.0
        %v1159 = vsel %vm791, %v1155, 0.0
        %v1160 = vadd.f32 %v1158, %v1159
        %1161 = vadd.xlane.f32.xlu0 %v1160
        %v1162 = vpop.xlane.xlu0 %1161
        %v1163 = vmul.f32 %v1162, 0.001953125
        %v1164 = vmul.f32 %v1145, %v1145
        %v1165 = vsub.f32 %v1163, %v1164
        %v1166 = vadd.f32 %v1165, 1e-05
        %v1167 = vrsqrt.pop %v1166
        %v1169 = vlaneseq
        %v1170 = vshrl.u32 %v1169, 7
        %v1171 = vsub.s32 0, %v1170
        %v1172 = vrot.slane %v1145, %v1171
        %v1174 = vsel %vm1127, %v1172, %v1119
        %v1176 = vlaneseq
        %v1177 = vshrl.u32 %v1176, 7
        %v1178 = vsub.s32 0, %v1177
        %v1179 = vrot.slane %v1167, %v1178
        %v1181 = vsel %vm1127, %v1179, %v1126
        %vm1182 = vcmp.eq.s32.totalorder %v725, 7
        %v1183 = vsel %vm1182, %v777, 0.0
        %v1185 = vlaneseq
        %v1186 = vshrl.u32 %v1185, 7
        %v1187 = vsub.s32 0, %v1186
        %v1188 = vrot.slane %v1183, %v1187
        %v1189 = vlaneseq
        %v1190 = vshrl.u32 %v1189, 7
        %v1191 = vsub.s32 1, %v1190
        %v1192 = vrot.slane %v1183, %v1191
        %v1195 = vsel %vm791, %v1188, 0.0
        %v1196 = vsel %vm791, %v1192, 0.0
        %v1197 = vadd.f32 %v1195, %v1196
        %1198 = vadd.xlane.f32.xlu0 %v1197
        %v1199 = vpop.xlane.xlu0 %1198
        %v1200 = vmul.f32 %v1199, 0.001953125
        %v1201 = vsel %vm1182, %v814, 0.0
        %v1203 = vlaneseq
        %v1204 = vshrl.u32 %v1203, 7
        %v1205 = vsub.s32 0, %v1204
        %v1206 = vrot.slane %v1201, %v1205
        %v1207 = vlaneseq
        %v1208 = vshrl.u32 %v1207, 7
        %v1209 = vsub.s32 1, %v1208
        %v1210 = vrot.slane %v1201, %v1209
        %v1213 = vsel %vm791, %v1206, 0.0
        %v1214 = vsel %vm791, %v1210, 0.0
        %v1215 = vadd.f32 %v1213, %v1214
        %1216 = vadd.xlane.f32.xlu0 %v1215
        %v1217 = vpop.xlane.xlu0 %1216
        %v1218 = vmul.f32 %v1217, 0.001953125
        %v1219 = vmul.f32 %v1200, %v1200
        %v1220 = vsub.f32 %v1218, %v1219
        %v1221 = vadd.f32 %v1220, 1e-05
        %v1222 = vrsqrt.pop %v1221
        %v1224 = vlaneseq
        %v1225 = vshrl.u32 %v1224, 7
        %v1226 = vsub.s32 0, %v1225
        %v1227 = vrot.slane %v1200, %v1226
        %v1229 = vsel %vm1182, %v1227, %v1174
        %v1231 = vlaneseq
        %v1232 = vshrl.u32 %v1231, 7
        %v1233 = vsub.s32 0, %v1232
        %v1234 = vrot.slane %v1222, %v1233
        %v1236 = vsel %vm1182, %v1234, %v1181
        %v1237 = vmul.f32 %v1236, %v726
        %v1238 = vmul.f32 %v1229, %v1237
        %v1239 = vsub.f32 %v727, %v1238
        %v1241 = vlaneseq
        %v1242 = vshrl.u32 %v1241, 7
        %v1243 = vsub.s32 0, %v1242
        %v1244 = vrot.slane %v1237, %v1243
        %v1245 = vlaneseq
        %v1246 = vshrl.u32 %v1245, 7
        %v1247 = vsub.s32 1, %v1246
        %v1248 = vrot.slane %v1237, %v1247
        %v1251 = vmul.f32 %v721, %v1244
        %v1252 = vmul.f32 %v722, %v1248
        %v1253 = vmul.f32 %v723, %v1244
        %v1254 = vmul.f32 %v724, %v1248
        %v1256 = vlaneseq
        %v1257 = vshrl.u32 %v1256, 7
        %v1258 = vsub.s32 0, %v1257
        %v1259 = vrot.slane %v1239, %v1258
        %v1260 = vlaneseq
        %v1261 = vshrl.u32 %v1260, 7
        %v1262 = vsub.s32 1, %v1261
        %v1263 = vrot.slane %v1239, %v1262
        %v1266 = vadd.f32 %v1251, %v1259
        %v1267 = vadd.f32 %v1252, %v1263
        %v1268 = vadd.f32 %v1253, %v1259
        %v1269 = vadd.f32 %v1254, %v1263
        %v1270 = vmul.f32 %v1266, 0.5
        %v1271 = vmul.f32 %v1267, 0.5
        %v1272 = vmul.f32 %v1268, 0.5
        %v1273 = vmul.f32 %v1269, 0.5
        %v1274 = vmul.f32 %v1266, 0.70710677
        %v1275 = vmul.f32 %v1267, 0.70710677
        %v1276 = vmul.f32 %v1268, 0.70710677
        %v1277 = vmul.f32 %v1269, 0.70710677
        %v1278 = vand.u32 2147483647, %v1274
        %v1279 = vand.u32 2147483647, %v1275
        %v1280 = vand.u32 2147483647, %v1276
        %v1281 = vand.u32 2147483647, %v1277
        %v1282 = vmul.f32 %v1278, 0.3275911
        %v1283 = vmul.f32 %v1279, 0.3275911
        %v1284 = vmul.f32 %v1280, 0.3275911
        %v1285 = vmul.f32 %v1281, 0.3275911
        %v1286 = vadd.f32 %v1282, 1.0
        %v1287 = vadd.f32 %v1283, 1.0
        %v1288 = vadd.f32 %v1284, 1.0
        %v1289 = vadd.f32 %v1285, 1.0
        %v1290 = vrcp.pop %v1286
        %v1291 = vmul.f32 1.0, %v1290
        %v1292 = vrcp.pop %v1287
        %v1293 = vmul.f32 1.0, %v1292
        %v1294 = vrcp.pop %v1288
        %v1295 = vmul.f32 1.0, %v1294
        %v1296 = vrcp.pop %v1289
        %v1297 = vmul.f32 1.0, %v1296
        %v1298 = vmul.f32 %v1291, 1.0614054
        %v1299 = vmul.f32 %v1293, 1.0614054
        %v1300 = vmul.f32 %v1295, 1.0614054
        %v1301 = vmul.f32 %v1297, 1.0614054
        %v1302 = vadd.f32 %v1298, -1.4531521
        %v1303 = vadd.f32 %v1299, -1.4531521
        %v1304 = vadd.f32 %v1300, -1.4531521
        %v1305 = vadd.f32 %v1301, -1.4531521
        %v1306 = vmul.f32 %v1302, %v1291
        %v1307 = vmul.f32 %v1303, %v1293
        %v1308 = vmul.f32 %v1304, %v1295
        %v1309 = vmul.f32 %v1305, %v1297
        %v1310 = vadd.f32 %v1306, 1.4214138
        %v1311 = vadd.f32 %v1307, 1.4214138
        %v1312 = vadd.f32 %v1308, 1.4214138
        %v1313 = vadd.f32 %v1309, 1.4214138
        %v1314 = vmul.f32 %v1310, %v1291
        %v1315 = vmul.f32 %v1311, %v1293
        %v1316 = vmul.f32 %v1312, %v1295
        %v1317 = vmul.f32 %v1313, %v1297
        %v1318 = vadd.f32 %v1314, -0.28449672
        %v1319 = vadd.f32 %v1315, -0.28449672
        %v1320 = vadd.f32 %v1316, -0.28449672
        %v1321 = vadd.f32 %v1317, -0.28449672
        %v1322 = vmul.f32 %v1318, %v1291
        %v1323 = vmul.f32 %v1319, %v1293
        %v1324 = vmul.f32 %v1320, %v1295
        %v1325 = vmul.f32 %v1321, %v1297
        %v1326 = vadd.f32 %v1322, 0.2548296
        %v1327 = vadd.f32 %v1323, 0.2548296
        %v1328 = vadd.f32 %v1324, 0.2548296
        %v1329 = vadd.f32 %v1325, 0.2548296
        %v1330 = vmul.f32 %v1326, %v1291
        %v1331 = vmul.f32 %v1327, %v1293
        %v1332 = vmul.f32 %v1328, %v1295
        %v1333 = vmul.f32 %v1329, %v1297
        %v1334 = vsub.f32 0.0, %v1278
        %v1335 = vsub.f32 0.0, %v1279
        %v1336 = vsub.f32 0.0, %v1280
        %v1337 = vsub.f32 0.0, %v1281
        %v1338 = vmul.f32 %v1334, %v1278
        %v1339 = vmul.f32 %v1335, %v1279
        %v1340 = vmul.f32 %v1336, %v1280
        %v1341 = vmul.f32 %v1337, %v1281
        %v1342 = vmul.f32 %v1338, 1.442695
        %v1343 = vpow.pop %v1342
        %v1344 = vmul.f32 %v1339, 1.442695
        %v1345 = vpow.pop %v1344
        %v1346 = vmul.f32 %v1340, 1.442695
        %v1347 = vpow.pop %v1346
        %v1348 = vmul.f32 %v1341, 1.442695
        %v1349 = vpow.pop %v1348
        %v1350 = vmul.f32 %v1330, %v1343
        %v1351 = vmul.f32 %v1331, %v1345
        %v1352 = vmul.f32 %v1332, %v1347
        %v1353 = vmul.f32 %v1333, %v1349
        %v1354 = vsub.f32 1.0, %v1350
        %v1355 = vsub.f32 1.0, %v1351
        %v1356 = vsub.f32 1.0, %v1352
        %v1357 = vsub.f32 1.0, %v1353
        %vm1358 = vcmp.ge.f32.partialorder %v1274, 0.0
        %vm1359 = vcmp.ge.f32.partialorder %v1275, 0.0
        %vm1360 = vcmp.ge.f32.partialorder %v1276, 0.0
        %vm1361 = vcmp.ge.f32.partialorder %v1277, 0.0
        %v1362 = vsub.f32 0.0, %v1354
        %v1363 = vsub.f32 0.0, %v1355
        %v1364 = vsub.f32 0.0, %v1356
        %v1365 = vsub.f32 0.0, %v1357
        %v1366 = vsel %vm1358, %v1354, %v1362
        %v1367 = vsel %vm1359, %v1355, %v1363
        %v1368 = vsel %vm1360, %v1356, %v1364
        %v1369 = vsel %vm1361, %v1357, %v1365
        %v1370 = vadd.f32 %v1366, 1.0
        %v1371 = vadd.f32 %v1367, 1.0
        %v1372 = vadd.f32 %v1368, 1.0
        %v1373 = vadd.f32 %v1369, 1.0
        %v1374 = vmul.f32 %v1270, %v1370
        %v1375 = vmul.f32 %v1271, %v1371
        %v1376 = vmul.f32 %v1272, %v1372
        %v1377 = vmul.f32 %v1273, %v1373
        %v1378 = vlaneseq
        %vm1379 = vcmp.ge.s32.totalorder %v1378, 0
        %vm1380 = vcmp.lt.s32.totalorder %v1378, 256
        %vm1381 = vmand %vm1379, %vm1380
        %1382 = vst.msk [vmem:[#allocation3] ss:$8 sm:$0x3] %vm1381, 0.0
        %1383 = vst.msk [vmem:[#allocation3] ss:$8 sm:$0x0] %vm1381, 0.0
        %s1384 = scalar_lea.vmem [#allocation3], 33
        %1385 = vst.msk [vmem:[%s1384] ss:$8 sm:$0x3] %vm1381, 0.0
        %1386 = vst.msk [vmem:[%s1384] ss:$8 sm:$0x0] %vm1381, 0.0
        %v1391 = vrot.slane %v1374, 7
        %v1392 = vrot.slane %v1375, 7
        %v1393 = vrot.slane %v1376, 7
        %v1394 = vsel %vm791, %v1391, %v1393
        %v1395 = vrot.slane %v1377, 7
        %v1396 = vsel %vm791, %v1392, %v1395
        %1403 = vst [vmem:[#allocation3] sm:$0xfe] %v1391
        %1404 = vst [vmem:[#allocation3 + $0x8] sm:$0xfe] %v1392
        %1405 = vst [vmem:[#allocation3 + $0x10] sm:$0xff] %v1394
        %1406 = vst [vmem:[#allocation3 + $0x18] sm:$0xff] %v1396
        %1407 = vst [vmem:[#allocation3 + $0x20] sm:$0x1] %v1393
        %1408 = vst [vmem:[#allocation3 + $0x28] sm:$0x1] %v1395
        %v1409 = vld [vmem:[#allocation3] sm:$0xff]
        %v1410 = vld [vmem:[#allocation3 + $0x8] sm:$0xff]
        %v1411 = vld [vmem:[#allocation3 + $0x10] sm:$0xff]
        %v1412 = vld [vmem:[#allocation3 + $0x18] sm:$0xff]
        %v1413 = vld [vmem:[#allocation9] sm:$0xff]
        %v1414 = vld [vmem:[#allocation9 + $0x8] sm:$0xff]
        %v1415 = vld [vmem:[#allocation9 + $0x10] sm:$0xff]
        %v1416 = vld [vmem:[#allocation9 + $0x18] sm:$0xff]
        %v1417 = vld [vmem:[#allocation9 + $0x20] sm:$0xff]
        %v1418 = vld [vmem:[#allocation9 + $0x28] sm:$0xff]
        %v1419 = vld [vmem:[#allocation9 + $0x30] sm:$0xff]
        %v1420 = vld [vmem:[#allocation9 + $0x38] sm:$0xff]
        %v1421 = vld [vmem:[#allocation9 + $0x40] sm:$0xff]
        %v1422 = vld [vmem:[#allocation9 + $0x48] sm:$0xff]
        %v1423 = vld [vmem:[#allocation9 + $0x50] sm:$0xff]
        %v1424 = vld [vmem:[#allocation9 + $0x58] sm:$0xff]
        %v1425 = vld [vmem:[#allocation9 + $0x60] sm:$0xff]
        %v1426 = vld [vmem:[#allocation9 + $0x68] sm:$0xff]
        %v1427 = vld [vmem:[#allocation9 + $0x70] sm:$0xff]
        %v1428 = vld [vmem:[#allocation9 + $0x78] sm:$0xff]
        %v1429 = vld [vmem:[#allocation9 + $0x80] sm:$0xff]
        %v1430 = vld [vmem:[#allocation9 + $0x88] sm:$0xff]
        %v1431 = vld [vmem:[#allocation9 + $0x90] sm:$0xff]
        %v1432 = vld [vmem:[#allocation9 + $0x98] sm:$0xff]
        %v1433 = vld [vmem:[#allocation9 + $0xa0] sm:$0xff]
        %v1434 = vld [vmem:[#allocation9 + $0xa8] sm:$0xff]
        %v1435 = vld [vmem:[#allocation9 + $0xb0] sm:$0xff]
        %v1436 = vld [vmem:[#allocation9 + $0xb8] sm:$0xff]
        %v1437 = vld [vmem:[#allocation9 + $0xc0] sm:$0xff]
        %v1438 = vld [vmem:[#allocation9 + $0xc8] sm:$0xff]
        %v1439 = vld [vmem:[#allocation9 + $0xd0] sm:$0xff]
        %v1440 = vld [vmem:[#allocation9 + $0xd8] sm:$0xff]
        %v1441 = vld [vmem:[#allocation9 + $0xe0] sm:$0xff]
        %v1442 = vld [vmem:[#allocation9 + $0xe8] sm:$0xff]
        %v1443 = vld [vmem:[#allocation9 + $0xf0] sm:$0xff]
        %v1444 = vld [vmem:[#allocation9 + $0xf8] sm:$0xff]
        %v1445 = vld [vmem:[#allocation9 + $0x100] sm:$0xff]
        %v1446 = vld [vmem:[#allocation9 + $0x108] sm:$0xff]
        %v1447 = vld [vmem:[#allocation9 + $0x110] sm:$0xff]
        %v1448 = vld [vmem:[#allocation9 + $0x118] sm:$0xff]
        %v1449 = vld [vmem:[#allocation9 + $0x120] sm:$0xff]
        %v1450 = vld [vmem:[#allocation9 + $0x128] sm:$0xff]
        %v1451 = vld [vmem:[#allocation9 + $0x130] sm:$0xff]
        %v1452 = vld [vmem:[#allocation9 + $0x138] sm:$0xff]
        %v1453 = vld [vmem:[#allocation9 + $0x140] sm:$0xff]
        %v1454 = vld [vmem:[#allocation9 + $0x148] sm:$0xff]
        %v1455 = vld [vmem:[#allocation9 + $0x150] sm:$0xff]
        %v1456 = vld [vmem:[#allocation9 + $0x158] sm:$0xff]
        %v1457 = vld [vmem:[#allocation9 + $0x160] sm:$0xff]
        %v1458 = vld [vmem:[#allocation9 + $0x168] sm:$0xff]
        %v1459 = vld [vmem:[#allocation9 + $0x170] sm:$0xff]
        %v1460 = vld [vmem:[#allocation9 + $0x178] sm:$0xff]
        %v1461 = vld [vmem:[#allocation9 + $0x180] sm:$0xff]
        %v1462 = vld [vmem:[#allocation9 + $0x188] sm:$0xff]
        %v1463 = vld [vmem:[#allocation9 + $0x190] sm:$0xff]
        %v1464 = vld [vmem:[#allocation9 + $0x198] sm:$0xff]
        %v1465 = vld [vmem:[#allocation9 + $0x1a0] sm:$0xff]
        %v1466 = vld [vmem:[#allocation9 + $0x1a8] sm:$0xff]
        %v1467 = vld [vmem:[#allocation9 + $0x1b0] sm:$0xff]
        %v1468 = vld [vmem:[#allocation9 + $0x1b8] sm:$0xff]
        %v1469 = vld [vmem:[#allocation9 + $0x1c0] sm:$0xff]
        %v1470 = vld [vmem:[#allocation9 + $0x1c8] sm:$0xff]
        %v1471 = vld [vmem:[#allocation9 + $0x1d0] sm:$0xff]
        %v1472 = vld [vmem:[#allocation9 + $0x1d8] sm:$0xff]
        %v1473 = vld [vmem:[#allocation9 + $0x1e0] sm:$0xff]
        %v1474 = vld [vmem:[#allocation9 + $0x1e8] sm:$0xff]
        %v1475 = vld [vmem:[#allocation9 + $0x1f0] sm:$0xff]
        %v1476 = vld [vmem:[#allocation9 + $0x1f8] sm:$0xff]
        %v1477 = vld [vmem:[#allocation3] sm:$0xfe]
        %v1478 = vld [vmem:[#allocation3 + $0x8] sm:$0xfe]
        %v1479 = vld [vmem:[#allocation3 + $0x20] sm:$0x1]
        %v1480 = vld [vmem:[#allocation3 + $0x28] sm:$0x1]
        %s1481 = scalar_lea.vmem [#allocation9], 512
        %v1482 = vld [vmem:[%s1481] sm:$0xff]
        %v1483 = vld [vmem:[%s1481 + $0x8] sm:$0xff]
        %v1484 = vld [vmem:[%s1481 + $0x10] sm:$0xff]
        %v1485 = vld [vmem:[%s1481 + $0x18] sm:$0xff]
        %v1486 = vld [vmem:[%s1481 + $0x20] sm:$0xff]
        %v1487 = vld [vmem:[%s1481 + $0x28] sm:$0xff]
        %v1488 = vld [vmem:[%s1481 + $0x30] sm:$0xff]
        %v1489 = vld [vmem:[%s1481 + $0x38] sm:$0xff]
        %v1490 = vld [vmem:[%s1481 + $0x40] sm:$0xff]
        %v1491 = vld [vmem:[%s1481 + $0x48] sm:$0xff]
        %v1492 = vld [vmem:[%s1481 + $0x50] sm:$0xff]
        %v1493 = vld [vmem:[%s1481 + $0x58] sm:$0xff]
        %v1494 = vld [vmem:[%s1481 + $0x60] sm:$0xff]
        %v1495 = vld [vmem:[%s1481 + $0x68] sm:$0xff]
        %v1496 = vld [vmem:[%s1481 + $0x70] sm:$0xff]
        %v1497 = vld [vmem:[%s1481 + $0x78] sm:$0xff]
        %v1498 = vld [vmem:[%s1481 + $0x80] sm:$0xff]
        %v1499 = vld [vmem:[%s1481 + $0x88] sm:$0xff]
        %v1500 = vld [vmem:[%s1481 + $0x90] sm:$0xff]
        %v1501 = vld [vmem:[%s1481 + $0x98] sm:$0xff]
        %v1502 = vld [vmem:[%s1481 + $0xa0] sm:$0xff]
        %v1503 = vld [vmem:[%s1481 + $0xa8] sm:$0xff]
        %v1504 = vld [vmem:[%s1481 + $0xb0] sm:$0xff]
        %v1505 = vld [vmem:[%s1481 + $0xb8] sm:$0xff]
        %v1506 = vld [vmem:[%s1481 + $0xc0] sm:$0xff]
        %v1507 = vld [vmem:[%s1481 + $0xc8] sm:$0xff]
        %v1508 = vld [vmem:[%s1481 + $0xd0] sm:$0xff]
        %v1509 = vld [vmem:[%s1481 + $0xd8] sm:$0xff]
        %v1510 = vld [vmem:[%s1481 + $0xe0] sm:$0xff]
        %v1511 = vld [vmem:[%s1481 + $0xe8] sm:$0xff]
        %v1512 = vld [vmem:[%s1481 + $0xf0] sm:$0xff]
        %v1513 = vld [vmem:[%s1481 + $0xf8] sm:$0xff]
        %v1514 = vld [vmem:[%s1481 + $0x100] sm:$0xff]
        %v1515 = vld [vmem:[%s1481 + $0x108] sm:$0xff]
        %v1516 = vld [vmem:[%s1481 + $0x110] sm:$0xff]
        %v1517 = vld [vmem:[%s1481 + $0x118] sm:$0xff]
        %v1518 = vld [vmem:[%s1481 + $0x120] sm:$0xff]
        %v1519 = vld [vmem:[%s1481 + $0x128] sm:$0xff]
        %v1520 = vld [vmem:[%s1481 + $0x130] sm:$0xff]
        %v1521 = vld [vmem:[%s1481 + $0x138] sm:$0xff]
        %v1522 = vld [vmem:[%s1481 + $0x140] sm:$0xff]
        %v1523 = vld [vmem:[%s1481 + $0x148] sm:$0xff]
        %v1524 = vld [vmem:[%s1481 + $0x150] sm:$0xff]
        %v1525 = vld [vmem:[%s1481 + $0x158] sm:$0xff]
        %v1526 = vld [vmem:[%s1481 + $0x160] sm:$0xff]
        %v1527 = vld [vmem:[%s1481 + $0x168] sm:$0xff]
        %v1528 = vld [vmem:[%s1481 + $0x170] sm:$0xff]
        %v1529 = vld [vmem:[%s1481 + $0x178] sm:$0xff]
        %v1530 = vld [vmem:[%s1481 + $0x180] sm:$0xff]
        %v1531 = vld [vmem:[%s1481 + $0x188] sm:$0xff]
        %v1532 = vld [vmem:[%s1481 + $0x190] sm:$0xff]
        %v1533 = vld [vmem:[%s1481 + $0x198] sm:$0xff]
        %v1534 = vld [vmem:[%s1481 + $0x1a0] sm:$0xff]
        %v1535 = vld [vmem:[%s1481 + $0x1a8] sm:$0xff]
        %v1536 = vld [vmem:[%s1481 + $0x1b0] sm:$0xff]
        %v1537 = vld [vmem:[%s1481 + $0x1b8] sm:$0xff]
        %v1538 = vld [vmem:[%s1481 + $0x1c0] sm:$0xff]
        %v1539 = vld [vmem:[%s1481 + $0x1c8] sm:$0xff]
        %v1540 = vld [vmem:[%s1481 + $0x1d0] sm:$0xff]
        %v1541 = vld [vmem:[%s1481 + $0x1d8] sm:$0xff]
        %v1542 = vld [vmem:[%s1481 + $0x1e0] sm:$0xff]
        %v1543 = vld [vmem:[%s1481 + $0x1e8] sm:$0xff]
        %v1544 = vld [vmem:[%s1481 + $0x1f0] sm:$0xff]
        %v1545 = vld [vmem:[%s1481 + $0x1f8] sm:$0xff]
        %vm1552 = vcmask 1046528
        %v1553 = vrot.slane %v1477, 1
        %v1554 = vrot.slane %v1411, 1
        %v1555 = vsel %vm1552, %v1553, %v1554
        %v1556 = vrot.slane %v1478, 1
        %v1557 = vrot.slane %v1412, 1
        %v1558 = vsel %vm1552, %v1556, %v1557
        %v1559 = vrot.slane %v1479, 1
        %v1560 = vsel %vm1552, %v1554, %v1559
        %v1561 = vrot.slane %v1480, 1
        %v1562 = vsel %vm1552, %v1557, %v1561
        %1567 = vmatprep.subr.mxu0 %v1513
        %1568 = vmatpush1.msra.mxu0 %v1512
        %1569 = vmatprep.subr.mxu0 %v1511
        %1570 = vmatpush1.msra.mxu0 %v1510
        %1571 = vmatprep.subr.mxu0 %v1509
        %1572 = vmatpush1.msra.mxu0 %v1508
        %1573 = vmatprep.subr.mxu0 %v1507
        %1574 = vmatpush1.msra.mxu0 %v1506
        %1575 = vmatprep.subr.mxu0 %v1505
        %1576 = vmatpush1.msra.mxu0 %v1504
        %1577 = vmatprep.subr.mxu0 %v1503
        %1578 = vmatpush1.msra.mxu0 %v1502
        %1579 = vmatprep.subr.mxu0 %v1501
        %1580 = vmatpush1.msra.mxu0 %v1500
        %1581 = vmatprep.subr.mxu0 %v1499
        %1582 = vmatpush1.msra.mxu0 %v1498
        %1583 = vmatprep.subr.mxu0 %v1497
        %1584 = vmatpush1.msra.mxu0 %v1496
        %1585 = vmatprep.subr.mxu0 %v1495
        %1586 = vmatpush1.msra.mxu0 %v1494
        %1587 = vmatprep.subr.mxu0 %v1493
        %1588 = vmatpush1.msra.mxu0 %v1492
        %1589 = vmatprep.subr.mxu0 %v1491
        %1590 = vmatpush1.msra.mxu0 %v1490
        %1591 = vmatprep.subr.mxu0 %v1489
        %1592 = vmatpush1.msra.mxu0 %v1488
        %1593 = vmatprep.subr.mxu0 %v1487
        %1594 = vmatpush1.msra.mxu0 %v1486
        %1595 = vmatprep.subr.mxu0 %v1485
        %1596 = vmatpush1.msra.mxu0 %v1484
        %1597 = vmatprep.subr.mxu0 %v1483
        %1598 = vmatpush1.msra.mxu0 %v1482
        %1599 = vmatprep.subr.mxu0 %v1545
        %1600 = vmatpush2.msra.mxu0 %v1544
        %1601 = vmatprep.subr.mxu0 %v1543
        %1602 = vmatpush2.msra.mxu0 %v1542
        %1603 = vmatprep.subr.mxu0 %v1541
        %1604 = vmatpush2.msra.mxu0 %v1540
        %1605 = vmatprep.subr.mxu0 %v1539
        %1606 = vmatpush2.msra.mxu0 %v1538
        %1607 = vmatprep.subr.mxu0 %v1537
        %1608 = vmatpush2.msra.mxu0 %v1536
        %1609 = vmatprep.subr.mxu0 %v1535
        %1610 = vmatpush2.msra.mxu0 %v1534
        %1611 = vmatprep.subr.mxu0 %v1533
        %1612 = vmatpush2.msra.mxu0 %v1532
        %1613 = vmatprep.subr.mxu0 %v1531
        %1614 = vmatpush2.msra.mxu0 %v1530
        %1615 = vmatprep.subr.mxu0 %v1529
        %1616 = vmatpush2.msra.mxu0 %v1528
        %1617 = vmatprep.subr.mxu0 %v1527
        %1618 = vmatpush2.msra.mxu0 %v1526
        %1619 = vmatprep.subr.mxu0 %v1525
        %1620 = vmatpush2.msra.mxu0 %v1524
        %1621 = vmatprep.subr.mxu0 %v1523
        %1622 = vmatpush2.msra.mxu0 %v1522
        %1623 = vmatprep.subr.mxu0 %v1521
        %1624 = vmatpush2.msra.mxu0 %v1520
        %1625 = vmatprep.subr.mxu0 %v1519
        %1626 = vmatpush2.msra.mxu0 %v1518
        %1627 = vmatprep.subr.mxu0 %v1517
        %1628 = vmatpush2.msra.mxu0 %v1516
        %1629 = vmatprep.subr.mxu0 %v1515
        %1630 = vmatpush2.msra.mxu0 %v1514
        %1631 = vmatprep.mubr.f32.mxu0 %v1558
        %1632 = vmatmul.mubr.f32.gmra.mxu0 %v1555
        %v1633 = vpop.f32.mrf.mxu0
        %v1634 = vadd.f32 0.0, %v1633
        %v1635 = vpop.f32.mrf.mxu0
        %v1636 = vadd.f32 0.0, %v1635
        %1637 = vmatprep.mubr.f32.mxu0 %v1562
        %1638 = vmatmul.mubr.f32.gmra.mxu0 %v1560
        %v1639 = vpop.f32.mrf.mxu0
        %v1640 = vadd.f32 0.0, %v1639
        %v1641 = vpop.f32.mrf.mxu0
        %v1642 = vadd.f32 0.0, %v1641
        %1643 = vdwg.mxu0
        %1644 = vmatprep.subr.mxu0 %v1444
        %1645 = vmatpush1.msra.mxu0 %v1443
        %1646 = vmatprep.subr.mxu0 %v1442
        %1647 = vmatpush1.msra.mxu0 %v1441
        %1648 = vmatprep.subr.mxu0 %v1440
        %1649 = vmatpush1.msra.mxu0 %v1439
        %1650 = vmatprep.subr.mxu0 %v1438
        %1651 = vmatpush1.msra.mxu0 %v1437
        %1652 = vmatprep.subr.mxu0 %v1436
        %1653 = vmatpush1.msra.mxu0 %v1435
        %1654 = vmatprep.subr.mxu0 %v1434
        %1655 = vmatpush1.msra.mxu0 %v1433
        %1656 = vmatprep.subr.mxu0 %v1432
        %1657 = vmatpush1.msra.mxu0 %v1431
        %1658 = vmatprep.subr.mxu0 %v1430
        %1659 = vmatpush1.msra.mxu0 %v1429
        %1660 = vmatprep.subr.mxu0 %v1428
        %1661 = vmatpush1.msra.mxu0 %v1427
        %1662 = vmatprep.subr.mxu0 %v1426
        %1663 = vmatpush1.msra.mxu0 %v1425
        %1664 = vmatprep.subr.mxu0 %v1424
        %1665 = vmatpush1.msra.mxu0 %v1423
        %1666 = vmatprep.subr.mxu0 %v1422
        %1667 = vmatpush1.msra.mxu0 %v1421
        %1668 = vmatprep.subr.mxu0 %v1420
        %1669 = vmatpush1.msra.mxu0 %v1419
        %1670 = vmatprep.subr.mxu0 %v1418
        %1671 = vmatpush1.msra.mxu0 %v1417
        %1672 = vmatprep.subr.mxu0 %v1416
        %1673 = vmatpush1.msra.mxu0 %v1415
        %1674 = vmatprep.subr.mxu0 %v1414
        %1675 = vmatpush1.msra.mxu0 %v1413
        %1676 = vmatprep.subr.mxu0 %v1476
        %1677 = vmatpush2.msra.mxu0 %v1475
        %1678 = vmatprep.subr.mxu0 %v1474
        %1679 = vmatpush2.msra.mxu0 %v1473
        %1680 = vmatprep.subr.mxu0 %v1472
        %1681 = vmatpush2.msra.mxu0 %v1471
        %1682 = vmatprep.subr.mxu0 %v1470
        %1683 = vmatpush2.msra.mxu0 %v1469
        %1684 = vmatprep.subr.mxu0 %v1468
        %1685 = vmatpush2.msra.mxu0 %v1467
        %1686 = vmatprep.subr.mxu0 %v1466
        %1687 = vmatpush2.msra.mxu0 %v1465
        %1688 = vmatprep.subr.mxu0 %v1464
        %1689 = vmatpush2.msra.mxu0 %v1463
        %1690 = vmatprep.subr.mxu0 %v1462
        %1691 = vmatpush2.msra.mxu0 %v1461
        %1692 = vmatprep.subr.mxu0 %v1460
        %1693 = vmatpush2.msra.mxu0 %v1459
        %1694 = vmatprep.subr.mxu0 %v1458
        %1695 = vmatpush2.msra.mxu0 %v1457
        %1696 = vmatprep.subr.mxu0 %v1456
        %1697 = vmatpush2.msra.mxu0 %v1455
        %1698 = vmatprep.subr.mxu0 %v1454
        %1699 = vmatpush2.msra.mxu0 %v1453
        %1700 = vmatprep.subr.mxu0 %v1452
        %1701 = vmatpush2.msra.mxu0 %v1451
        %1702 = vmatprep.subr.mxu0 %v1450
        %1703 = vmatpush2.msra.mxu0 %v1449
        %1704 = vmatprep.subr.mxu0 %v1448
        %1705 = vmatpush2.msra.mxu0 %v1447
        %1706 = vmatprep.subr.mxu0 %v1446
        %1707 = vmatpush2.msra.mxu0 %v1445
        %1708 = vmatprep.mubr.f32.mxu0 %v1410
        %1709 = vmatmul.mubr.f32.gmra.mxu0 %v1409
        %v1710 = vpop.f32.mrf.mxu0
        %v1711 = vadd.f32 %v1634, %v1710
        %v1712 = vpop.f32.mrf.mxu0
        %v1713 = vadd.f32 %v1636, %v1712
        %1714 = vmatprep.mubr.f32.mxu0 %v1412
        %1715 = vmatmul.mubr.f32.gmra.mxu0 %v1411
        %v1716 = vpop.f32.mrf.mxu0
        %v1717 = vadd.f32 %v1640, %v1716
        %v1718 = vpop.f32.mrf.mxu0
        %v1719 = vadd.f32 %v1642, %v1718
        %1720 = vdwg.mxu0
        %v1721 = vld [vmem:[#allocation3] sm:$0xfc]
        %v1722 = vld [vmem:[#allocation3 + $0x8] sm:$0xfc]
        %v1723 = vld [vmem:[#allocation3 + $0x20] sm:$0x3]
        %v1724 = vld [vmem:[#allocation3 + $0x28] sm:$0x3]
        %s1725 = scalar_lea.vmem [#allocation9], 1024
        %v1726 = vld [vmem:[%s1725] sm:$0xff]
        %v1727 = vld [vmem:[%s1725 + $0x8] sm:$0xff]
        %v1728 = vld [vmem:[%s1725 + $0x10] sm:$0xff]
        %v1729 = vld [vmem:[%s1725 + $0x18] sm:$0xff]
        %v1730 = vld [vmem:[%s1725 + $0x20] sm:$0xff]
        %v1731 = vld [vmem:[%s1725 + $0x28] sm:$0xff]
        %v1732 = vld [vmem:[%s1725 + $0x30] sm:$0xff]
        %v1733 = vld [vmem:[%s1725 + $0x38] sm:$0xff]
        %v1734 = vld [vmem:[%s1725 + $0x40] sm:$0xff]
        %v1735 = vld [vmem:[%s1725 + $0x48] sm:$0xff]
        %v1736 = vld [vmem:[%s1725 + $0x50] sm:$0xff]
        %v1737 = vld [vmem:[%s1725 + $0x58] sm:$0xff]
        %v1738 = vld [vmem:[%s1725 + $0x60] sm:$0xff]
        %v1739 = vld [vmem:[%s1725 + $0x68] sm:$0xff]
        %v1740 = vld [vmem:[%s1725 + $0x70] sm:$0xff]
        %v1741 = vld [vmem:[%s1725 + $0x78] sm:$0xff]
        %v1742 = vld [vmem:[%s1725 + $0x80] sm:$0xff]
        %v1743 = vld [vmem:[%s1725 + $0x88] sm:$0xff]
        %v1744 = vld [vmem:[%s1725 + $0x90] sm:$0xff]
        %v1745 = vld [vmem:[%s1725 + $0x98] sm:$0xff]
        %v1746 = vld [vmem:[%s1725 + $0xa0] sm:$0xff]
        %v1747 = vld [vmem:[%s1725 + $0xa8] sm:$0xff]
        %v1748 = vld [vmem:[%s1725 + $0xb0] sm:$0xff]
        %v1749 = vld [vmem:[%s1725 + $0xb8] sm:$0xff]
        %v1750 = vld [vmem:[%s1725 + $0xc0] sm:$0xff]
        %v1751 = vld [vmem:[%s1725 + $0xc8] sm:$0xff]
        %v1752 = vld [vmem:[%s1725 + $0xd0] sm:$0xff]
        %v1753 = vld [vmem:[%s1725 + $0xd8] sm:$0xff]
        %v1754 = vld [vmem:[%s1725 + $0xe0] sm:$0xff]
        %v1755 = vld [vmem:[%s1725 + $0xe8] sm:$0xff]
        %v1756 = vld [vmem:[%s1725 + $0xf0] sm:$0xff]
        %v1757 = vld [vmem:[%s1725 + $0xf8] sm:$0xff]
        %v1758 = vld [vmem:[%s1725 + $0x100] sm:$0xff]
        %v1759 = vld [vmem:[%s1725 + $0x108] sm:$0xff]
        %v1760 = vld [vmem:[%s1725 + $0x110] sm:$0xff]
        %v1761 = vld [vmem:[%s1725 + $0x118] sm:$0xff]
        %v1762 = vld [vmem:[%s1725 + $0x120] sm:$0xff]
        %v1763 = vld [vmem:[%s1725 + $0x128] sm:$0xff]
        %v1764 = vld [vmem:[%s1725 + $0x130] sm:$0xff]
        %v1765 = vld [vmem:[%s1725 + $0x138] sm:$0xff]
        %v1766 = vld [vmem:[%s1725 + $0x140] sm:$0xff]
        %v1767 = vld [vmem:[%s1725 + $0x148] sm:$0xff]
        %v1768 = vld [vmem:[%s1725 + $0x150] sm:$0xff]
        %v1769 = vld [vmem:[%s1725 + $0x158] sm:$0xff]
        %v1770 = vld [vmem:[%s1725 + $0x160] sm:$0xff]
        %v1771 = vld [vmem:[%s1725 + $0x168] sm:$0xff]
        %v1772 = vld [vmem:[%s1725 + $0x170] sm:$0xff]
        %v1773 = vld [vmem:[%s1725 + $0x178] sm:$0xff]
        %v1774 = vld [vmem:[%s1725 + $0x180] sm:$0xff]
        %v1775 = vld [vmem:[%s1725 + $0x188] sm:$0xff]
        %v1776 = vld [vmem:[%s1725 + $0x190] sm:$0xff]
        %v1777 = vld [vmem:[%s1725 + $0x198] sm:$0xff]
        %v1778 = vld [vmem:[%s1725 + $0x1a0] sm:$0xff]
        %v1779 = vld [vmem:[%s1725 + $0x1a8] sm:$0xff]
        %v1780 = vld [vmem:[%s1725 + $0x1b0] sm:$0xff]
        %v1781 = vld [vmem:[%s1725 + $0x1b8] sm:$0xff]
        %v1782 = vld [vmem:[%s1725 + $0x1c0] sm:$0xff]
        %v1783 = vld [vmem:[%s1725 + $0x1c8] sm:$0xff]
        %v1784 = vld [vmem:[%s1725 + $0x1d0] sm:$0xff]
        %v1785 = vld [vmem:[%s1725 + $0x1d8] sm:$0xff]
        %v1786 = vld [vmem:[%s1725 + $0x1e0] sm:$0xff]
        %v1787 = vld [vmem:[%s1725 + $0x1e8] sm:$0xff]
        %v1788 = vld [vmem:[%s1725 + $0x1f0] sm:$0xff]
        %v1789 = vld [vmem:[%s1725 + $0x1f8] sm:$0xff]
        %vm1794 = vcmask 1045504
        %v1795 = vrot.slane %v1721, 2
        %v1796 = vrot.slane %v1411, 2
        %v1797 = vsel %vm1794, %v1795, %v1796
        %v1798 = vrot.slane %v1722, 2
        %v1799 = vrot.slane %v1412, 2
        %v1800 = vsel %vm1794, %v1798, %v1799
        %v1801 = vrot.slane %v1723, 2
        %v1802 = vsel %vm1794, %v1796, %v1801
        %v1803 = vrot.slane %v1724, 2
        %v1804 = vsel %vm1794, %v1799, %v1803
        %1809 = vmatprep.subr.mxu0 %v1757
        %1810 = vmatpush1.msra.mxu0 %v1756
        %1811 = vmatprep.subr.mxu0 %v1755
        %1812 = vmatpush1.msra.mxu0 %v1754
        %1813 = vmatprep.subr.mxu0 %v1753
        %1814 = vmatpush1.msra.mxu0 %v1752
        %1815 = vmatprep.subr.mxu0 %v1751
        %1816 = vmatpush1.msra.mxu0 %v1750
        %1817 = vmatprep.subr.mxu0 %v1749
        %1818 = vmatpush1.msra.mxu0 %v1748
        %1819 = vmatprep.subr.mxu0 %v1747
        %1820 = vmatpush1.msra.mxu0 %v1746
        %1821 = vmatprep.subr.mxu0 %v1745
        %1822 = vmatpush1.msra.mxu0 %v1744
        %1823 = vmatprep.subr.mxu0 %v1743
        %1824 = vmatpush1.msra.mxu0 %v1742
        %1825 = vmatprep.subr.mxu0 %v1741
        %1826 = vmatpush1.msra.mxu0 %v1740
        %1827 = vmatprep.subr.mxu0 %v1739
        %1828 = vmatpush1.msra.mxu0 %v1738
        %1829 = vmatprep.subr.mxu0 %v1737
        %1830 = vmatpush1.msra.mxu0 %v1736
        %1831 = vmatprep.subr.mxu0 %v1735
        %1832 = vmatpush1.msra.mxu0 %v1734
        %1833 = vmatprep.subr.mxu0 %v1733
        %1834 = vmatpush1.msra.mxu0 %v1732
        %1835 = vmatprep.subr.mxu0 %v1731
        %1836 = vmatpush1.msra.mxu0 %v1730
        %1837 = vmatprep.subr.mxu0 %v1729
        %1838 = vmatpush1.msra.mxu0 %v1728
        %1839 = vmatprep.subr.mxu0 %v1727
        %1840 = vmatpush1.msra.mxu0 %v1726
        %1841 = vmatprep.subr.mxu0 %v1789
        %1842 = vmatpush2.msra.mxu0 %v1788
        %1843 = vmatprep.subr.mxu0 %v1787
        %1844 = vmatpush2.msra.mxu0 %v1786
        %1845 = vmatprep.subr.mxu0 %v1785
        %1846 = vmatpush2.msra.mxu0 %v1784
        %1847 = vmatprep.subr.mxu0 %v1783
        %1848 = vmatpush2.msra.mxu0 %v1782
        %1849 = vmatprep.subr.mxu0 %v1781
        %1850 = vmatpush2.msra.mxu0 %v1780
        %1851 = vmatprep.subr.mxu0 %v1779
        %1852 = vmatpush2.msra.mxu0 %v1778
        %1853 = vmatprep.subr.mxu0 %v1777
        %1854 = vmatpush2.msra.mxu0 %v1776
        %1855 = vmatprep.subr.mxu0 %v1775
        %1856 = vmatpush2.msra.mxu0 %v1774
        %1857 = vmatprep.subr.mxu0 %v1773
        %1858 = vmatpush2.msra.mxu0 %v1772
        %1859 = vmatprep.subr.mxu0 %v1771
        %1860 = vmatpush2.msra.mxu0 %v1770
        %1861 = vmatprep.subr.mxu0 %v1769
        %1862 = vmatpush2.msra.mxu0 %v1768
        %1863 = vmatprep.subr.mxu0 %v1767
        %1864 = vmatpush2.msra.mxu0 %v1766
        %1865 = vmatprep.subr.mxu0 %v1765
        %1866 = vmatpush2.msra.mxu0 %v1764
        %1867 = vmatprep.subr.mxu0 %v1763
        %1868 = vmatpush2.msra.mxu0 %v1762
        %1869 = vmatprep.subr.mxu0 %v1761
        %1870 = vmatpush2.msra.mxu0 %v1760
        %1871 = vmatprep.subr.mxu0 %v1759
        %1872 = vmatpush2.msra.mxu0 %v1758
        %1873 = vmatprep.mubr.f32.mxu0 %v1800
        %1874 = vmatmul.mubr.f32.gmra.mxu0 %v1797
        %v1875 = vpop.f32.mrf.mxu0
        %v1876 = vadd.f32 0.0, %v1875
        %v1877 = vpop.f32.mrf.mxu0
        %v1878 = vadd.f32 0.0, %v1877
        %1879 = vmatprep.mubr.f32.mxu0 %v1804
        %1880 = vmatmul.mubr.f32.gmra.mxu0 %v1802
        %v1881 = vpop.f32.mrf.mxu0
        %v1882 = vadd.f32 0.0, %v1881
        %v1883 = vpop.f32.mrf.mxu0
        %v1884 = vadd.f32 0.0, %v1883
        %1885 = vdwg.mxu0
        %v1886 = vadd.f32 %v1711, %v1876
        %v1887 = vadd.f32 %v1713, %v1878
        %v1888 = vadd.f32 %v1717, %v1882
        %v1889 = vadd.f32 %v1719, %v1884
        %v1890 = vld [vmem:[%s8] sm:$0x3]
        %v1891 = vld [vmem:[%s6] sm:$0x3]
        %v1892 = vld [vmem:[%s7] sm:$0x3]
        %v1893 = vadd.f32 %v1886, %v1888
        %v1894 = vrot.slane %v1893, 4
        %v1895 = vadd.f32 %v1893, %v1894
        %v1896 = vrot.slane %v1895, 2
        %v1897 = vadd.f32 %v1895, %v1896
        %v1898 = vrot.slane %v1897, 1
        %v1899 = vadd.f32 %v1897, %v1898
        %v1900 = vadd.f32 %v1887, %v1889
        %v1901 = vrot.slane %v1900, 4
        %v1902 = vadd.f32 %v1900, %v1901
        %v1903 = vrot.slane %v1902, 2
        %v1904 = vadd.f32 %v1902, %v1903
        %v1905 = vrot.slane %v1904, 1
        %v1906 = vadd.f32 %v1904, %v1905
        %v1907 = vmul.f32 %v1886, %v1886
        %v1908 = vmul.f32 %v1887, %v1887
        %v1909 = vmul.f32 %v1888, %v1888
        %v1910 = vmul.f32 %v1889, %v1889
        %v1911 = vadd.f32 %v1907, %v1909
        %v1912 = vrot.slane %v1911, 4
        %v1913 = vadd.f32 %v1911, %v1912
        %v1914 = vrot.slane %v1913, 2
        %v1915 = vadd.f32 %v1913, %v1914
        %v1916 = vrot.slane %v1915, 1
        %v1917 = vadd.f32 %v1915, %v1916
        %v1918 = vadd.f32 %v1908, %v1910
        %v1919 = vrot.slane %v1918, 4
        %v1920 = vadd.f32 %v1918, %v1919
        %v1921 = vrot.slane %v1920, 2
        %v1922 = vadd.f32 %v1920, %v1921
        %v1923 = vrot.slane %v1922, 1
        %v1924 = vadd.f32 %v1922, %v1923
        %vm1925 = vcmp.eq.s32.totalorder %v1890, 0
        %v1928 = vcombine.low %v1899, %v1906
        %v1930 = vunpack.c.l.s4 1966171168
        %v1931 = vunpack.c.0.s8 %v1930
        %v1932 = vlaneseq
        %v1933 = vshrl.u32 %v1932, 7
        %v1934 = vsub.s32 %v1931, %v1933
        %v1935 = vrot.slane %v1928, %v1934
        %v1937 = vunpack.c.l.s4 1966171168
        %v1938 = vunpack.c.0.s8 %v1937
        %v1939 = vlaneseq
        %v1940 = vshrl.u32 %v1939, 7
        %v1941 = vsub.s32 %v1938, %v1940
        %v1942 = vrot.slane %v1935, %v1941
        %v1944 = vsel %vm1925, %v1942, 0.0
        %v1946 = vlaneseq
        %v1947 = vshrl.u32 %v1946, 7
        %v1948 = vsub.s32 0, %v1947
        %v1949 = vrot.slane %v1944, %v1948
        %v1950 = vlaneseq
        %v1951 = vshrl.u32 %v1950, 7
        %v1952 = vsub.s32 1, %v1951
        %v1953 = vrot.slane %v1944, %v1952
        %v1956 = vsel %vm791, %v1949, 0.0
        %v1957 = vsel %vm791, %v1953, 0.0
        %v1958 = vadd.f32 %v1956, %v1957
        %1959 = vadd.xlane.f32.xlu0 %v1958
        %v1960 = vpop.xlane.xlu0 %1959
        %v1961 = vmul.f32 %v1960, 0.001953125
        %v1964 = vcombine.low %v1917, %v1924
        %v1966 = vunpack.c.l.s4 1966171168
        %v1967 = vunpack.c.0.s8 %v1966
        %v1968 = vlaneseq
        %v1969 = vshrl.u32 %v1968, 7
        %v1970 = vsub.s32 %v1967, %v1969
        %v1971 = vrot.slane %v1964, %v1970
        %v1973 = vunpack.c.l.s4 1966171168
        %v1974 = vunpack.c.0.s8 %v1973
        %v1975 = vlaneseq
        %v1976 = vshrl.u32 %v1975, 7
        %v1977 = vsub.s32 %v1974, %v1976
        %v1978 = vrot.slane %v1971, %v1977
        %v1980 = vsel %vm1925, %v1978, 0.0
        %v1982 = vlaneseq
        %v1983 = vshrl.u32 %v1982, 7
        %v1984 = vsub.s32 0, %v1983
        %v1985 = vrot.slane %v1980, %v1984
        %v1986 = vlaneseq
        %v1987 = vshrl.u32 %v1986, 7
        %v1988 = vsub.s32 1, %v1987
        %v1989 = vrot.slane %v1980, %v1988
        %v1992 = vsel %vm791, %v1985, 0.0
        %v1993 = vsel %vm791, %v1989, 0.0
        %v1994 = vadd.f32 %v1992, %v1993
        %1995 = vadd.xlane.f32.xlu0 %v1994
        %v1996 = vpop.xlane.xlu0 %1995
        %v1997 = vmul.f32 %v1996, 0.001953125
        %v1998 = vmul.f32 %v1961, %v1961
        %v1999 = vsub.f32 %v1997, %v1998
        %v2000 = vadd.f32 %v1999, 1e-05
        %v2001 = vrsqrt.pop %v2000
        %v2003 = vlaneseq
        %v2004 = vshrl.u32 %v2003, 7
        %v2005 = vsub.s32 0, %v2004
        %v2006 = vrot.slane %v1961, %v2005
        %v2008 = vsel %vm1925, %v2006, 0.0
        %v2010 = vlaneseq
        %v2011 = vshrl.u32 %v2010, 7
        %v2012 = vsub.s32 0, %v2011
        %v2013 = vrot.slane %v2001, %v2012
        %v2015 = vsel %vm1925, %v2013, 0.0
        %vm2016 = vcmp.eq.s32.totalorder %v1890, 1
        %v2017 = vsel %vm2016, %v1942, 0.0
        %v2019 = vlaneseq
        %v2020 = vshrl.u32 %v2019, 7
        %v2021 = vsub.s32 0, %v2020
        %v2022 = vrot.slane %v2017, %v2021
        %v2023 = vlaneseq
        %v2024 = vshrl.u32 %v2023, 7
        %v2025 = vsub.s32 1, %v2024
        %v2026 = vrot.slane %v2017, %v2025
        %v2029 = vsel %vm791, %v2022, 0.0
        %v2030 = vsel %vm791, %v2026, 0.0
        %v2031 = vadd.f32 %v2029, %v2030
        %2032 = vadd.xlane.f32.xlu0 %v2031
        %v2033 = vpop.xlane.xlu0 %2032
        %v2034 = vmul.f32 %v2033, 0.001953125
        %v2035 = vsel %vm2016, %v1978, 0.0
        %v2037 = vlaneseq
        %v2038 = vshrl.u32 %v2037, 7
        %v2039 = vsub.s32 0, %v2038
        %v2040 = vrot.slane %v2035, %v2039
        %v2041 = vlaneseq
        %v2042 = vshrl.u32 %v2041, 7
        %v2043 = vsub.s32 1, %v2042
        %v2044 = vrot.slane %v2035, %v2043
        %v2047 = vsel %vm791, %v2040, 0.0
        %v2048 = vsel %vm791, %v2044, 0.0
        %v2049 = vadd.f32 %v2047, %v2048
        %2050 = vadd.xlane.f32.xlu0 %v2049
        %v2051 = vpop.xlane.xlu0 %2050
        %v2052 = vmul.f32 %v2051, 0.001953125
        %v2053 = vmul.f32 %v2034, %v2034
        %v2054 = vsub.f32 %v2052, %v2053
        %v2055 = vadd.f32 %v2054, 1e-05
        %v2056 = vrsqrt.pop %v2055
        %v2058 = vlaneseq
        %v2059 = vshrl.u32 %v2058, 7
        %v2060 = vsub.s32 0, %v2059
        %v2061 = vrot.slane %v2034, %v2060
        %v2063 = vsel %vm2016, %v2061, %v2008
        %v2065 = vlaneseq
        %v2066 = vshrl.u32 %v2065, 7
        %v2067 = vsub.s32 0, %v2066
        %v2068 = vrot.slane %v2056, %v2067
        %v2070 = vsel %vm2016, %v2068, %v2015
        %vm2071 = vcmp.eq.s32.totalorder %v1890, 2
        %v2072 = vsel %vm2071, %v1942, 0.0
        %v2074 = vlaneseq
        %v2075 = vshrl.u32 %v2074, 7
        %v2076 = vsub.s32 0, %v2075
        %v2077 = vrot.slane %v2072, %v2076
        %v2078 = vlaneseq
        %v2079 = vshrl.u32 %v2078, 7
        %v2080 = vsub.s32 1, %v2079
        %v2081 = vrot.slane %v2072, %v2080
        %v2084 = vsel %vm791, %v2077, 0.0
        %v2085 = vsel %vm791, %v2081, 0.0
        %v2086 = vadd.f32 %v2084, %v2085
        %2087 = vadd.xlane.f32.xlu0 %v2086
        %v2088 = vpop.xlane.xlu0 %2087
        %v2089 = vmul.f32 %v2088, 0.001953125
        %v2090 = vsel %vm2071, %v1978, 0.0
        %v2092 = vlaneseq
        %v2093 = vshrl.u32 %v2092, 7
        %v2094 = vsub.s32 0, %v2093
        %v2095 = vrot.slane %v2090, %v2094
        %v2096 = vlaneseq
        %v2097 = vshrl.u32 %v2096, 7
        %v2098 = vsub.s32 1, %v2097
        %v2099 = vrot.slane %v2090, %v2098
        %v2102 = vsel %vm791, %v2095, 0.0
        %v2103 = vsel %vm791, %v2099, 0.0
        %v2104 = vadd.f32 %v2102, %v2103
        %2105 = vadd.xlane.f32.xlu0 %v2104
        %v2106 = vpop.xlane.xlu0 %2105
        %v2107 = vmul.f32 %v2106, 0.001953125
        %v2108 = vmul.f32 %v2089, %v2089
        %v2109 = vsub.f32 %v2107, %v2108
        %v2110 = vadd.f32 %v2109, 1e-05
        %v2111 = vrsqrt.pop %v2110
        %v2113 = vlaneseq
        %v2114 = vshrl.u32 %v2113, 7
        %v2115 = vsub.s32 0, %v2114
        %v2116 = vrot.slane %v2089, %v2115
        %v2118 = vsel %vm2071, %v2116, %v2063
        %v2120 = vlaneseq
        %v2121 = vshrl.u32 %v2120, 7
        %v2122 = vsub.s32 0, %v2121
        %v2123 = vrot.slane %v2111, %v2122
        %v2125 = vsel %vm2071, %v2123, %v2070
        %vm2126 = vcmp.eq.s32.totalorder %v1890, 3
        %v2127 = vsel %vm2126, %v1942, 0.0
        %v2129 = vlaneseq
        %v2130 = vshrl.u32 %v2129, 7
        %v2131 = vsub.s32 0, %v2130
        %v2132 = vrot.slane %v2127, %v2131
        %v2133 = vlaneseq
        %v2134 = vshrl.u32 %v2133, 7
        %v2135 = vsub.s32 1, %v2134
        %v2136 = vrot.slane %v2127, %v2135
        %v2139 = vsel %vm791, %v2132, 0.0
        %v2140 = vsel %vm791, %v2136, 0.0
        %v2141 = vadd.f32 %v2139, %v2140
        %2142 = vadd.xlane.f32.xlu0 %v2141
        %v2143 = vpop.xlane.xlu0 %2142
        %v2144 = vmul.f32 %v2143, 0.001953125
        %v2145 = vsel %vm2126, %v1978, 0.0
        %v2147 = vlaneseq
        %v2148 = vshrl.u32 %v2147, 7
        %v2149 = vsub.s32 0, %v2148
        %v2150 = vrot.slane %v2145, %v2149
        %v2151 = vlaneseq
        %v2152 = vshrl.u32 %v2151, 7
        %v2153 = vsub.s32 1, %v2152
        %v2154 = vrot.slane %v2145, %v2153
        %v2157 = vsel %vm791, %v2150, 0.0
        %v2158 = vsel %vm791, %v2154, 0.0
        %v2159 = vadd.f32 %v2157, %v2158
        %2160 = vadd.xlane.f32.xlu0 %v2159
        %v2161 = vpop.xlane.xlu0 %2160
        %v2162 = vmul.f32 %v2161, 0.001953125
        %v2163 = vmul.f32 %v2144, %v2144
        %v2164 = vsub.f32 %v2162, %v2163
        %v2165 = vadd.f32 %v2164, 1e-05
        %v2166 = vrsqrt.pop %v2165
        %v2168 = vlaneseq
        %v2169 = vshrl.u32 %v2168, 7
        %v2170 = vsub.s32 0, %v2169
        %v2171 = vrot.slane %v2144, %v2170
        %v2173 = vsel %vm2126, %v2171, %v2118
        %v2175 = vlaneseq
        %v2176 = vshrl.u32 %v2175, 7
        %v2177 = vsub.s32 0, %v2176
        %v2178 = vrot.slane %v2166, %v2177
        %v2180 = vsel %vm2126, %v2178, %v2125
        %vm2181 = vcmp.eq.s32.totalorder %v1890, 4
        %v2182 = vsel %vm2181, %v1942, 0.0
        %v2184 = vlaneseq
        %v2185 = vshrl.u32 %v2184, 7
        %v2186 = vsub.s32 0, %v2185
        %v2187 = vrot.slane %v2182, %v2186
        %v2188 = vlaneseq
        %v2189 = vshrl.u32 %v2188, 7
        %v2190 = vsub.s32 1, %v2189
        %v2191 = vrot.slane %v2182, %v2190
        %v2194 = vsel %vm791, %v2187, 0.0
        %v2195 = vsel %vm791, %v2191, 0.0
        %v2196 = vadd.f32 %v2194, %v2195
        %2197 = vadd.xlane.f32.xlu0 %v2196
        %v2198 = vpop.xlane.xlu0 %2197
        %v2199 = vmul.f32 %v2198, 0.001953125
        %v2200 = vsel %vm2181, %v1978, 0.0
        %v2202 = vlaneseq
        %v2203 = vshrl.u32 %v2202, 7
        %v2204 = vsub.s32 0, %v2203
        %v2205 = vrot.slane %v2200, %v2204
        %v2206 = vlaneseq
        %v2207 = vshrl.u32 %v2206, 7
        %v2208 = vsub.s32 1, %v2207
        %v2209 = vrot.slane %v2200, %v2208
        %v2212 = vsel %vm791, %v2205, 0.0
        %v2213 = vsel %vm791, %v2209, 0.0
        %v2214 = vadd.f32 %v2212, %v2213
        %2215 = vadd.xlane.f32.xlu0 %v2214
        %v2216 = vpop.xlane.xlu0 %2215
        %v2217 = vmul.f32 %v2216, 0.001953125
        %v2218 = vmul.f32 %v2199, %v2199
        %v2219 = vsub.f32 %v2217, %v2218
        %v2220 = vadd.f32 %v2219, 1e-05
        %v2221 = vrsqrt.pop %v2220
        %v2223 = vlaneseq
        %v2224 = vshrl.u32 %v2223, 7
        %v2225 = vsub.s32 0, %v2224
        %v2226 = vrot.slane %v2199, %v2225
        %v2228 = vsel %vm2181, %v2226, %v2173
        %v2230 = vlaneseq
        %v2231 = vshrl.u32 %v2230, 7
        %v2232 = vsub.s32 0, %v2231
        %v2233 = vrot.slane %v2221, %v2232
        %v2235 = vsel %vm2181, %v2233, %v2180
        %vm2236 = vcmp.eq.s32.totalorder %v1890, 5
        %v2237 = vsel %vm2236, %v1942, 0.0
        %v2239 = vlaneseq
        %v2240 = vshrl.u32 %v2239, 7
        %v2241 = vsub.s32 0, %v2240
        %v2242 = vrot.slane %v2237, %v2241
        %v2243 = vlaneseq
        %v2244 = vshrl.u32 %v2243, 7
        %v2245 = vsub.s32 1, %v2244
        %v2246 = vrot.slane %v2237, %v2245
        %v2249 = vsel %vm791, %v2242, 0.0
        %v2250 = vsel %vm791, %v2246, 0.0
        %v2251 = vadd.f32 %v2249, %v2250
        %2252 = vadd.xlane.f32.xlu0 %v2251
        %v2253 = vpop.xlane.xlu0 %2252
        %v2254 = vmul.f32 %v2253, 0.001953125
        %v2255 = vsel %vm2236, %v1978, 0.0
        %v2257 = vlaneseq
        %v2258 = vshrl.u32 %v2257, 7
        %v2259 = vsub.s32 0, %v2258
        %v2260 = vrot.slane %v2255, %v2259
        %v2261 = vlaneseq
        %v2262 = vshrl.u32 %v2261, 7
        %v2263 = vsub.s32 1, %v2262
        %v2264 = vrot.slane %v2255, %v2263
        %v2267 = vsel %vm791, %v2260, 0.0
        %v2268 = vsel %vm791, %v2264, 0.0
        %v2269 = vadd.f32 %v2267, %v2268
        %2270 = vadd.xlane.f32.xlu0 %v2269
        %v2271 = vpop.xlane.xlu0 %2270
        %v2272 = vmul.f32 %v2271, 0.001953125
        %v2273 = vmul.f32 %v2254, %v2254
        %v2274 = vsub.f32 %v2272, %v2273
        %v2275 = vadd.f32 %v2274, 1e-05
        %v2276 = vrsqrt.pop %v2275
        %v2278 = vlaneseq
        %v2279 = vshrl.u32 %v2278, 7
        %v2280 = vsub.s32 0, %v2279
        %v2281 = vrot.slane %v2254, %v2280
        %v2283 = vsel %vm2236, %v2281, %v2228
        %v2285 = vlaneseq
        %v2286 = vshrl.u32 %v2285, 7
        %v2287 = vsub.s32 0, %v2286
        %v2288 = vrot.slane %v2276, %v2287
        %v2290 = vsel %vm2236, %v2288, %v2235
        %vm2291 = vcmp.eq.s32.totalorder %v1890, 6
        %v2292 = vsel %vm2291, %v1942, 0.0
        %v2294 = vlaneseq
        %v2295 = vshrl.u32 %v2294, 7
        %v2296 = vsub.s32 0, %v2295
        %v2297 = vrot.slane %v2292, %v2296
        %v2298 = vlaneseq
        %v2299 = vshrl.u32 %v2298, 7
        %v2300 = vsub.s32 1, %v2299
        %v2301 = vrot.slane %v2292, %v2300
        %v2304 = vsel %vm791, %v2297, 0.0
        %v2305 = vsel %vm791, %v2301, 0.0
        %v2306 = vadd.f32 %v2304, %v2305
        %2307 = vadd.xlane.f32.xlu0 %v2306
        %v2308 = vpop.xlane.xlu0 %2307
        %v2309 = vmul.f32 %v2308, 0.001953125
        %v2310 = vsel %vm2291, %v1978, 0.0
        %v2312 = vlaneseq
        %v2313 = vshrl.u32 %v2312, 7
        %v2314 = vsub.s32 0, %v2313
        %v2315 = vrot.slane %v2310, %v2314
        %v2316 = vlaneseq
        %v2317 = vshrl.u32 %v2316, 7
        %v2318 = vsub.s32 1, %v2317
        %v2319 = vrot.slane %v2310, %v2318
        %v2322 = vsel %vm791, %v2315, 0.0
        %v2323 = vsel %vm791, %v2319, 0.0
        %v2324 = vadd.f32 %v2322, %v2323
        %2325 = vadd.xlane.f32.xlu0 %v2324
        %v2326 = vpop.xlane.xlu0 %2325
        %v2327 = vmul.f32 %v2326, 0.001953125
        %v2328 = vmul.f32 %v2309, %v2309
        %v2329 = vsub.f32 %v2327, %v2328
        %v2330 = vadd.f32 %v2329, 1e-05
        %v2331 = vrsqrt.pop %v2330
        %v2333 = vlaneseq
        %v2334 = vshrl.u32 %v2333, 7
        %v2335 = vsub.s32 0, %v2334
        %v2336 = vrot.slane %v2309, %v2335
        %v2338 = vsel %vm2291, %v2336, %v2283
        %v2340 = vlaneseq
        %v2341 = vshrl.u32 %v2340, 7
        %v2342 = vsub.s32 0, %v2341
        %v2343 = vrot.slane %v2331, %v2342
        %v2345 = vsel %vm2291, %v2343, %v2290
        %vm2346 = vcmp.eq.s32.totalorder %v1890, 7
        %v2347 = vsel %vm2346, %v1942, 0.0
        %v2349 = vlaneseq
        %v2350 = vshrl.u32 %v2349, 7
        %v2351 = vsub.s32 0, %v2350
        %v2352 = vrot.slane %v2347, %v2351
        %v2353 = vlaneseq
        %v2354 = vshrl.u32 %v2353, 7
        %v2355 = vsub.s32 1, %v2354
        %v2356 = vrot.slane %v2347, %v2355
        %v2359 = vsel %vm791, %v2352, 0.0
        %v2360 = vsel %vm791, %v2356, 0.0
        %v2361 = vadd.f32 %v2359, %v2360
        %2362 = vadd.xlane.f32.xlu0 %v2361
        %v2363 = vpop.xlane.xlu0 %2362
        %v2364 = vmul.f32 %v2363, 0.001953125
        %v2365 = vsel %vm2346, %v1978, 0.0
        %v2367 = vlaneseq
        %v2368 = vshrl.u32 %v2367, 7
        %v2369 = vsub.s32 0, %v2368
        %v2370 = vrot.slane %v2365, %v2369
        %v2371 = vlaneseq
        %v2372 = vshrl.u32 %v2371, 7
        %v2373 = vsub.s32 1, %v2372
        %v2374 = vrot.slane %v2365, %v2373
        %v2377 = vsel %vm791, %v2370, 0.0
        %v2378 = vsel %vm791, %v2374, 0.0
        %v2379 = vadd.f32 %v2377, %v2378
        %2380 = vadd.xlane.f32.xlu0 %v2379
        %v2381 = vpop.xlane.xlu0 %2380
        %v2382 = vmul.f32 %v2381, 0.001953125
        %v2383 = vmul.f32 %v2364, %v2364
        %v2384 = vsub.f32 %v2382, %v2383
        %v2385 = vadd.f32 %v2384, 1e-05
        %v2386 = vrsqrt.pop %v2385
        %v2388 = vlaneseq
        %v2389 = vshrl.u32 %v2388, 7
        %v2390 = vsub.s32 0, %v2389
        %v2391 = vrot.slane %v2364, %v2390
        %v2393 = vsel %vm2346, %v2391, %v2338
        %v2395 = vlaneseq
        %v2396 = vshrl.u32 %v2395, 7
        %v2397 = vsub.s32 0, %v2396
        %v2398 = vrot.slane %v2386, %v2397
        %v2400 = vsel %vm2346, %v2398, %v2345
        %v2401 = vmul.f32 %v2400, %v1891
        %v2402 = vmul.f32 %v2393, %v2401
        %v2403 = vsub.f32 %v1892, %v2402
        %v2405 = vlaneseq
        %v2406 = vshrl.u32 %v2405, 7
        %v2407 = vsub.s32 0, %v2406
        %v2408 = vrot.slane %v2401, %v2407
        %v2409 = vlaneseq
        %v2410 = vshrl.u32 %v2409, 7
        %v2411 = vsub.s32 1, %v2410
        %v2412 = vrot.slane %v2401, %v2411
        %v2415 = vmul.f32 %v1886, %v2408
        %v2416 = vmul.f32 %v1887, %v2412
        %v2417 = vmul.f32 %v1888, %v2408
        %v2418 = vmul.f32 %v1889, %v2412
        %v2420 = vlaneseq
        %v2421 = vshrl.u32 %v2420, 7
        %v2422 = vsub.s32 0, %v2421
        %v2423 = vrot.slane %v2403, %v2422
        %v2424 = vlaneseq
        %v2425 = vshrl.u32 %v2424, 7
        %v2426 = vsub.s32 1, %v2425
        %v2427 = vrot.slane %v2403, %v2426
        %v2430 = vadd.f32 %v2415, %v2423
        %v2431 = vadd.f32 %v2416, %v2427
        %v2432 = vadd.f32 %v2417, %v2423
        %v2433 = vadd.f32 %v2418, %v2427
        %2434 = vst [vmem:[%s379] sm:$0xff] %v2430
        %2435 = vst [vmem:[%s379 + $0x8] sm:$0xff] %v2431
        %2436 = vst [vmem:[%s379 + $0x10] sm:$0xff] %v2432
        %2437 = vst [vmem:[%s379 + $0x18] sm:$0xff] %v2433
        %s2438 = sand.u32 %s229, 1
        %s2439 = scalar_lea.sflag [#allocation6], %s2438
        %s2440 = sand.u32 %s229, 1
        %s2441 = smul.addr %s2440, 32
        %s2442 = scalar_lea.vmem [#allocation10], %s2441
        // Predicated region
        $region69: #{tpu_custom_call.1} parent=55 // pred_check
          %p2443 = pneg %p239
        $region70: #{tpu_custom_call.1} parent=55 // pred_check_branch
          %2445 = sbr.rel (%p2443) target = $region72
        $region71: #{tpu_custom_call.1} parent=55 // pred_region
          %s2447 = ssub.s32 512, 512
          %2448 = vsyncadd %s2439, %s2447
          %s2449 = smul.addr %s27, 4
          %s2450 = smul.addr %s2449, 128
          %s2451 = scalar_lea.hbm %s9, %s2450
          %s2452 = sshll.u32 %s2442, 4
          %s2453 = int_to_ptr.vmem [resolvable:$true] %s2452
          %2458 = dma.vmem_to_hbm [thread:$0]  %s2453, 512, %s2451, %s2439, 256, 256, 16
        $region72: #{tpu_custom_call.1} parent=55 // pred_fallthru
          _
      $region56: #{tpu_custom_call.1} parent=5 // pred_fallthru
        _
      %p2459 = scmp.le.s32.totalorder 2, %s22
      // Predicated region
      $region73: #{tpu_custom_call.1} parent=5 // pred_check
        %p2460 = pneg %p2459
      $region74: #{tpu_custom_call.1} parent=5 // pred_check_branch
        %2462 = sbr.rel (%p2460) target = $region76
      $region75: #{tpu_custom_call.1} parent=5 // pred_region
        %s2463 = ssub.s32 %s22, 2
        // Predicated region
        $region77: #{tpu_custom_call.1} parent=75 // pred_check
          %p2464 = pneg %p245
        $region78: #{tpu_custom_call.1} parent=75 // pred_check_branch
          %2466 = sbr.rel (%p2464) target = $region80
        $region79: #{tpu_custom_call.1} parent=75 // pred_region
          %s2467 = sand.u32 %s230, 1
          %s2468 = scalar_lea.sflag [#allocation6], %s2467
          %s2469 = sand.u32 %s230, 1
          %s2470 = smul.addr %s2469, 32
          %s2471 = scalar_lea.vmem [#allocation10], %s2470
          %2472 = dma.done %s2468, 512
        $region80: #{tpu_custom_call.1} parent=75 // pred_fallthru
          _
      $region76: #{tpu_custom_call.1} parent=5 // pred_fallthru
        _
    $region6: #{tpu_custom_call.1} parent=1 // loop_footer
      %s26 = sadd.s32 1, %s22
    $region7: #{tpu_custom_call.1} parent=1 // loop_footer_branch
      %21 = sbr.rel target = $region3
    $region8: #{tpu_custom_call.1} parent=1 // loop_exit
      _
    %2473 = vsyncpa [#allocation5], 1
    %s2474 = scalar_lea.sflag [#allocation5], 1
    %2475 = vsyncpa %s2474, 1
    %2476 = vsyncpa [#allocation8], 1
    %2477 = vsyncpa [#allocation6], 1
    %s2478 = scalar_lea.sflag [#allocation6], 1
    %2479 = vsyncpa %s2478, 1

</llo_original>
